<compile_context>
chip_gen: v7x
topology: tpu7x:2x2x1
jax: 0.10.0
libtpu: 0.0.40
codegen_flags: <defaults>
</compile_context>

<pallas_src>
import jax
import jax.numpy as jnp
from jax import lax
from jax.experimental import pallas as pl
from jax.experimental.pallas import tpu as pltpu


def _bigru_kernel(x_ref, wih_ref, whh_ref, bih_ref, bhh_ref,
                  out_ref, hid_ref, xp_ref):
    """Fused bidirectional GRU, single invocation.

    x_ref   : (B, T, D)          embedded inputs
    wih_ref : (D, 2*3*Hp)        input weights, both dirs, gates lane-padded to Hp
                                 column layout: [r_f|z_f|n_f | r_b|z_b|n_b], each Hp wide
    whh_ref : (2*Hp, 2*3*Hp)     block-diagonal hidden weights (fwd rows 0:Hp, bwd rows Hp:2Hp)
    bih_ref : (1, 2*3*Hp)
    bhh_ref : (1, 2*3*Hp)
    out_ref : (B, T, 2*H)        concatenated [fwd | bwd] hidden sequence
    hid_ref : (2, B, H)          final hidden per direction
    xp_ref  : (B, T, 2*3*Hp)     VMEM scratch: precomputed input projections (both dirs)
    """
    B, T, D = x_ref.shape
    Hp = whh_ref.shape[0] // 2        # lane-padded per-direction hidden (multiple of 128)
    G = 3 * Hp                        # gate block per direction
    H = hid_ref.shape[2]              # true per-direction hidden size

    # (1) Bulk input projection for BOTH directions in one MXU pass.
    x2 = x_ref[...].reshape(B * T, D)
    xp = jnp.dot(x2, wih_ref[...], preferred_element_type=jnp.float32) + bih_ref[...]
    xp_ref[...] = xp.reshape(B, T, 2 * G)

    whh = whh_ref[...]                # (2*Hp, 2*G), block-diagonal
    bhh = bhh_ref[...]                # (1, 2*G)

    def gru_gates(xg, hg, h_prev):
        # xg, hg: (B, G); slices are at 128-lane boundaries (Hp multiple of 128).
        r = jax.nn.sigmoid(xg[:, 0:Hp] + hg[:, 0:Hp])
        z = jax.nn.sigmoid(xg[:, Hp:2 * Hp] + hg[:, Hp:2 * Hp])
        n = jnp.tanh(xg[:, 2 * Hp:3 * Hp] + r * hg[:, 2 * Hp:3 * Hp])
        return (1.0 - z) * n + z * h_prev

    # Combined hidden state [h_fwd | h_bwd]; padded lanes (H:Hp) feed zero weight rows.
    h = jnp.zeros((B, 2 * Hp), jnp.float32)

    # (2) Fully-unrolled recurrence with the two direction chains interleaved.
    #     All indices are compile-time constants -> static VMEM loads/stores, and the
    #     per-step writes land in the VMEM output block (single HBM writeback at end).
    for t in range(T):
        # One fused block-diagonal h-projection for both directions.
        hp = jnp.dot(h, whh, preferred_element_type=jnp.float32) + bhh      # (B, 2*G)

        xt_f = xp_ref[:, pl.ds(t, 1), 0:G][:, 0, :]                 # fwd walks 0..T-1
        xt_b = xp_ref[:, pl.ds(T - 1 - t, 1), G:2 * G][:, 0, :]     # bwd walks T-1..0

        h_f = gru_gates(xt_f, hp[:, 0:G], h[:, 0:Hp])
        h_b = gru_gates(xt_b, hp[:, G:2 * G], h[:, Hp:2 * Hp])

        out_ref[:, pl.ds(t, 1), 0:H] = h_f[:, None, 0:H]
        out_ref[:, pl.ds(T - 1 - t, 1), H:2 * H] = h_b[:, None, 0:H]

        h = jnp.concatenate([h_f, h_b], axis=-1)   # 128-aligned pieces: free vreg arrange

    hid_ref[0, :, :] = h[:, 0:H]
    hid_ref[1, :, :] = h[:, Hp:Hp + H]


def bidirectional_gru(embedded, wih_c, whh_c, bih_c, bhh_c, hidden_per_dir):
    """embedded: (B, T, D); fused/padded weights (see make_params)."""
    B, T, D = embedded.shape
    H = int(hidden_per_dir)
    Hp = whh_c.shape[0] // 2
    G = 3 * Hp

    cost = pl.CostEstimate(
        flops=2 * B * T * D * (2 * G) + 2 * T * B * (2 * Hp) * (2 * G),
        transcendentals=3 * T * B * 2 * Hp,
        bytes_accessed=4 * (embedded.size + wih_c.size + whh_c.size
                            + bih_c.size + bhh_c.size + B * T * 2 * H + 2 * B * H),
    )

    # TODO(synk): at production sizes (large B*T), add a batch/time grid axis so only
    # weights + one time-slab stay VMEM-resident; at these shapes everything fits.
    outputs, hidden = pl.pallas_call(
        _bigru_kernel,
        out_shape=(
            jax.ShapeDtypeStruct((B, T, 2 * H), jnp.float32),   # fwd|bwd concatenated
            jax.ShapeDtypeStruct((2, B, H), jnp.float32),       # final hidden states
        ),
        grid_spec=pltpu.PrefetchScalarGridSpec(
            num_scalar_prefetch=0,
            grid=(1,),
            in_specs=[
                pl.BlockSpec((B, T, D), lambda i: (0, 0, 0)),        # embedded
                pl.BlockSpec((D, 2 * G), lambda i: (0, 0)),          # W_ih (fused, padded)
                pl.BlockSpec((2 * Hp, 2 * G), lambda i: (0, 0)),     # W_hh (block-diag)
                pl.BlockSpec((1, 2 * G), lambda i: (0, 0)),          # b_ih
                pl.BlockSpec((1, 2 * G), lambda i: (0, 0)),          # b_hh
            ],
            out_specs=[
                pl.BlockSpec((B, T, 2 * H), lambda i: (0, 0, 0)),
                pl.BlockSpec((2, B, H), lambda i: (0, 0, 0)),
            ],
            scratch_shapes=[pltpu.VMEM((B, T, 2 * G), jnp.float32)],
        ),
        compiler_params=pltpu.CompilerParams(
            dimension_semantics=("arbitrary",)),
        cost_estimate=cost,
    )(embedded, wih_c, whh_c, bih_c, bhh_c)

    return outputs, hidden


def encoder_rnn_forward(input_seq, params):
    # Embedding lookup is glue (gather), done in plain JAX.
    embedded = params["embedding"][input_seq]                       # (B, T, D)
    H = params["whh_t"].shape[1]
    return bidirectional_gru(embedded,
                             params["wih_c"], params["whh_c"],
                             params["bih_c"], params["bhh_c"], H)


def make_params(key, vocab_size, input_size, hidden_size, pad_token=0):
    """Deterministic synthetic parameters matching EncoderRNN shapes
    (bidirectional, n_layers=1, hidden per direction = hidden_size // 2).
    Also pre-packs the lane-padded, direction-fused weights the kernel consumes."""
    H = hidden_size // 2
    D = input_size
    k_emb, k_wih, k_whh, k_bih, k_bhh = jax.random.split(key, 5)

    emb = jax.random.uniform(k_emb, (vocab_size, D), jnp.float32, -0.25, 0.25)
    emb = emb.at[pad_token].set(0.0)                                # padding_idx=0

    # Per-direction GRU weights (PyTorch gate order r, z, n).
    wih = jax.random.normal(k_wih, (2, 3 * H, D), jnp.float32) * (1.0 / jnp.sqrt(D))
    whh = jax.random.uniform(k_whh, (2, 3 * H, H), jnp.float32, -0.01, 0.01)
    bih = jax.random.uniform(k_bih, (2, 3 * H), jnp.float32, -0.05, 0.05)
    bhh = jax.random.uniform(k_bhh, (2, 3 * H), jnp.float32, -0.05, 0.05)
    # TODO(synk): PyTorch uses init.orthogonal_ for weight_ih_l0; a scaled normal is
    # used as a deterministic stand-in (shapes/semantics unchanged).

    wih_t = jnp.transpose(wih, (0, 2, 1))   # (2, D, 3H)
    whh_t = jnp.transpose(whh, (0, 2, 1))   # (2, H, 3H)

    # ---- Pack kernel weights: pad each gate to a 128-lane slot, fuse directions. ----
    Hp = max(128, ((H + 127) // 128) * 128)
    G = 3 * Hp
    wih_c = jnp.zeros((D, 2 * G), jnp.float32)
    whh_c = jnp.zeros((2 * Hp, 2 * G), jnp.float32)     # block-diagonal over directions
    bih_c = jnp.zeros((1, 2 * G), jnp.float32)
    bhh_c = jnp.zeros((1, 2 * G), jnp.float32)
    for d in range(2):
        for g in range(3):
            col = d * G + g * Hp
            wih_c = wih_c.at[:, col:col + H].set(wih_t[d, :, g * H:(g + 1) * H])
            whh_c = whh_c.at[d * Hp:d * Hp + H, col:col + H].set(
                whh_t[d, :, g * H:(g + 1) * H])
            bih_c = bih_c.at[0, col:col + H].set(bih[d, g * H:(g + 1) * H])
            bhh_c = bhh_c.at[0, col:col + H].set(bhh[d, g * H:(g + 1) * H])

    return {
        "embedding": emb,
        # raw per-direction weights (pure-JAX reference)
        "wih_t": wih_t, "whh_t": whh_t, "bih": bih, "bhh": bhh,
        # lane-padded / direction-fused weights consumed by the Pallas kernel
        "wih_c": wih_c, "whh_c": whh_c, "bih_c": bih_c, "bhh_c": bhh_c,
    }


def _reference_forward(input_seq, params):
    """Pure-JAX reference (same math) for a sanity check."""
    emb = params["embedding"][input_seq]
    B, T, D = emb.shape
    H = params["whh_t"].shape[1]

    def run_dir(d, reverse):
        wih_t = params["wih_t"][d]; whh_t = params["whh_t"][d]
        bih = params["bih"][d]; bhh = params["bhh"][d]
        xp = emb @ wih_t + bih                                     # (B, T, 3H)
        xs = xp[:, ::-1, :] if reverse else xp

        def step(h, xt):
            hp = h @ whh_t + bhh
            r = jax.nn.sigmoid(xt[:, :H] + hp[:, :H])
            z = jax.nn.sigmoid(xt[:, H:2 * H] + hp[:, H:2 * H])
            n = jnp.tanh(xt[:, 2 * H:] + r * hp[:, 2 * H:])
            h_new = (1.0 - z) * n + z * h
            return h_new, h_new

        h0 = jnp.zeros((B, H), jnp.float32)
        h_f, hs = lax.scan(step, h0, jnp.swapaxes(xs, 0, 1))
        hs = jnp.swapaxes(hs, 0, 1)
        if reverse:
            hs = hs[:, ::-1, :]
        return hs, h_f

    out_f, h_f = run_dir(0, False)
    out_b, h_b = run_dir(1, True)
    return jnp.concatenate([out_f, out_b], axis=-1), jnp.stack([h_f, h_b], axis=0)


if __name__ == "__main__":
    B, T = 2, 8
    vocab_size = 50
    input_size = 32        # embedding dim D
    hidden_size = 64       # total hidden (per-direction H = 32)

    key = jax.random.PRNGKey(0)
    k_tok, k_par = jax.random.split(key)
    params = make_params(k_par, vocab_size, input_size, hidden_size)
    input_seq = jax.random.randint(k_tok, (B, T), 0, vocab_size, dtype=jnp.int32)

    outputs, hidden = jax.block_until_ready(encoder_rnn_forward(input_seq, params))

    ref_out, ref_hid = _reference_forward(input_seq, params)
    assert outputs.shape == (B, T, hidden_size)
    assert hidden.shape == (2, B, hidden_size // 2)
    assert jnp.allclose(outputs, ref_out, atol=1e-4, rtol=1e-4)
    assert jnp.allclose(hidden, ref_hid, atol=1e-4, rtol=1e-4)

    print("KERNEL_OK")
</pallas_src>

<mosaic_0001>
module attributes {stable_mosaic.version = 11 : i64} {
  func.func @_bigru_kernel(%arg0: i32, %arg1: memref<2x8x32xf32, #tpu.memory_space<vmem>>, %arg2: memref<32x768xf32, #tpu.memory_space<vmem>>, %arg3: memref<256x768xf32, #tpu.memory_space<vmem>>, %arg4: memref<1x768xf32, #tpu.memory_space<vmem>>, %arg5: memref<1x768xf32, #tpu.memory_space<vmem>>, %arg6: memref<2x8x64xf32, #tpu.memory_space<vmem>>, %arg7: memref<2x2x32xf32, #tpu.memory_space<vmem>>, %arg8: memref<2x8x768xf32, #tpu.memory_space<vmem>>) attributes {dimension_semantics = [#tpu.dimension_semantics<arbitrary>], iteration_bounds = array<i64: 1>, scalar_prefetch = 0 : i64, scratch_operands = 1 : i64, tpu.core_type = #tpu.core_type<tc>, window_params = [{pipeline_mode = #tpu.pipeline_mode<synchronous>, transform_indices = @transform_0, window_bounds = array<i64: 2, 8, 32>}, {pipeline_mode = #tpu.pipeline_mode<synchronous>, transform_indices = @transform_1, window_bounds = array<i64: 32, 768>}, {pipeline_mode = #tpu.pipeline_mode<synchronous>, transform_indices = @transform_2, window_bounds = array<i64: 256, 768>}, {pipeline_mode = #tpu.pipeline_mode<synchronous>, transform_indices = @transform_3, window_bounds = array<i64: 1, 768>}, {pipeline_mode = #tpu.pipeline_mode<synchronous>, transform_indices = @transform_4, window_bounds = array<i64: 1, 768>}, {pipeline_mode = #tpu.pipeline_mode<synchronous>, transform_indices = @transform_5, window_bounds = array<i64: 2, 8, 64>}, {pipeline_mode = #tpu.pipeline_mode<synchronous>, transform_indices = @transform_6, window_bounds = array<i64: 2, 2, 32>}]} {
    %c0 = arith.constant 0 : index
    %c0_0 = arith.constant 0 : index
    %c0_1 = arith.constant 0 : index
    %0 = vector.load %arg1[%c0, %c0_0, %c0_1] : memref<2x8x32xf32, #tpu.memory_space<vmem>>, vector<2x8x32xf32>
    %1 = vector.shape_cast %0 : vector<2x8x32xf32> to vector<16x32xf32>
    %c0_2 = arith.constant 0 : index
    %c0_3 = arith.constant 0 : index
    %2 = vector.load %arg2[%c0_2, %c0_3] : memref<32x768xf32, #tpu.memory_space<vmem>>, vector<32x768xf32>
    %cst = arith.constant dense<0.000000e+00> : vector<16x768xf32>
    %3 = tpu.matmul %1, %2, %cst {dimension_numbers = #tpu.dot_dimension_numbers<[1], [0], [0], [1], [0, 0, 1, 1], [], []>} : vector<16x32xf32>, vector<32x768xf32>, vector<16x768xf32> -> vector<16x768xf32>
    %c0_4 = arith.constant 0 : index
    %c0_5 = arith.constant 0 : index
    %4 = vector.load %arg4[%c0_4, %c0_5] : memref<1x768xf32, #tpu.memory_space<vmem>>, vector<1x768xf32>
    %5 = vector.broadcast %4 : vector<1x768xf32> to vector<16x768xf32>
    %6 = arith.addf %3, %5 : vector<16x768xf32>
    %7 = vector.shape_cast %6 : vector<16x768xf32> to vector<2x8x768xf32>
    %c0_6 = arith.constant 0 : index
    %c0_7 = arith.constant 0 : index
    %c0_8 = arith.constant 0 : index
    %8 = vector.load %arg8[%c0_6, %c0_7, %c0_8] : memref<2x8x768xf32, #tpu.memory_space<vmem>>, vector<2x8x768xf32>
    tpu.vector_store %arg8[%c0_6, %c0_7, %c0_8], %7 {strides = array<i32>} : memref<2x8x768xf32, #tpu.memory_space<vmem>>, vector<2x8x768xf32>,
    %c0_9 = arith.constant 0 : index
    %c0_10 = arith.constant 0 : index
    %9 = vector.load %arg3[%c0_9, %c0_10] : memref<256x768xf32, #tpu.memory_space<vmem>>, vector<256x768xf32>
    %c0_11 = arith.constant 0 : index
    %c0_12 = arith.constant 0 : index
    %10 = vector.load %arg5[%c0_11, %c0_12] : memref<1x768xf32, #tpu.memory_space<vmem>>, vector<1x768xf32>
    %cst_13 = arith.constant 0.000000e+00 : f32
    %11 = vector.broadcast %cst_13 : f32 to vector<2x256xf32>
    %cst_14 = arith.constant dense<0.000000e+00> : vector<2x768xf32>
    %12 = tpu.matmul %11, %9, %cst_14 {dimension_numbers = #tpu.dot_dimension_numbers<[1], [0], [0], [1], [0, 0, 1, 1], [], []>} : vector<2x256xf32>, vector<256x768xf32>, vector<2x768xf32> -> vector<2x768xf32>
    %13 = vector.broadcast %10 : vector<1x768xf32> to vector<2x768xf32>
    %14 = arith.addf %12, %13 : vector<2x768xf32>
    %c0_15 = arith.constant 0 : index
    %c0_16 = arith.constant 0 : index
    %c0_17 = arith.constant 0 : index
    %15 = vector.load %arg8[%c0_15, %c0_16, %c0_17] : memref<2x8x768xf32, #tpu.memory_space<vmem>>, vector<2x1x384xf32>
    %16 = vector.shape_cast %15 : vector<2x1x384xf32> to vector<2x384xf32>
    %c0_18 = arith.constant 0 : index
    %c7 = arith.constant 7 : index
    %c384 = arith.constant 384 : index
    %17 = vector.load %arg8[%c0_18, %c7, %c384] : memref<2x8x768xf32, #tpu.memory_space<vmem>>, vector<2x1x384xf32>
    %18 = vector.shape_cast %17 : vector<2x1x384xf32> to vector<2x384xf32>
    %19 = vector.extract_strided_slice %14 {offsets = [0, 0], sizes = [2, 384], strides = [1, 1]} : vector<2x768xf32> to vector<2x384xf32>
    %20 = vector.extract_strided_slice %11 {offsets = [0, 0], sizes = [2, 128], strides = [1, 1]} : vector<2x256xf32> to vector<2x128xf32>
    %21 = vector.extract_strided_slice %16 {offsets = [0, 0], sizes = [2, 128], strides = [1, 1]} : vector<2x384xf32> to vector<2x128xf32>
    %22 = vector.extract_strided_slice %19 {offsets = [0, 0], sizes = [2, 128], strides = [1, 1]} : vector<2x384xf32> to vector<2x128xf32>
    %23 = arith.addf %21, %22 : vector<2x128xf32>
    %24 = arith.negf %23 : vector<2x128xf32>
    %25 = math.exp %24 : vector<2x128xf32>
    %cst_19 = arith.constant 1.000000e+00 : f32
    %26 = vector.broadcast %cst_19 : f32 to vector<2x128xf32>
    %27 = arith.addf %26, %25 : vector<2x128xf32>
    %28 = arith.divf %26, %27 : vector<2x128xf32>
    %29 = vector.extract_strided_slice %16 {offsets = [0, 128], sizes = [2, 128], strides = [1, 1]} : vector<2x384xf32> to vector<2x128xf32>
    %30 = vector.extract_strided_slice %19 {offsets = [0, 128], sizes = [2, 128], strides = [1, 1]} : vector<2x384xf32> to vector<2x128xf32>
    %31 = arith.addf %29, %30 : vector<2x128xf32>
    %32 = arith.negf %31 : vector<2x128xf32>
    %33 = math.exp %32 : vector<2x128xf32>
    %cst_20 = arith.constant 1.000000e+00 : f32
    %34 = vector.broadcast %cst_20 : f32 to vector<2x128xf32>
    %35 = arith.addf %34, %33 : vector<2x128xf32>
    %36 = arith.divf %34, %35 : vector<2x128xf32>
    %37 = vector.extract_strided_slice %16 {offsets = [0, 256], sizes = [2, 128], strides = [1, 1]} : vector<2x384xf32> to vector<2x128xf32>
    %38 = vector.extract_strided_slice %19 {offsets = [0, 256], sizes = [2, 128], strides = [1, 1]} : vector<2x384xf32> to vector<2x128xf32>
    %39 = arith.mulf %28, %38 : vector<2x128xf32>
    %40 = arith.addf %37, %39 : vector<2x128xf32>
    %41 = math.tanh %40 : vector<2x128xf32>
    %cst_21 = arith.constant 1.000000e+00 : f32
    %42 = vector.broadcast %cst_21 : f32 to vector<2x128xf32>
    %43 = arith.subf %42, %36 : vector<2x128xf32>
    %44 = arith.mulf %43, %41 : vector<2x128xf32>
    %45 = arith.mulf %36, %20 : vector<2x128xf32>
    %46 = arith.addf %44, %45 : vector<2x128xf32>
    %47 = vector.extract_strided_slice %14 {offsets = [0, 384], sizes = [2, 384], strides = [1, 1]} : vector<2x768xf32> to vector<2x384xf32>
    %48 = vector.extract_strided_slice %11 {offsets = [0, 128], sizes = [2, 128], strides = [1, 1]} : vector<2x256xf32> to vector<2x128xf32>
    %49 = vector.extract_strided_slice %18 {offsets = [0, 0], sizes = [2, 128], strides = [1, 1]} : vector<2x384xf32> to vector<2x128xf32>
    %50 = vector.extract_strided_slice %47 {offsets = [0, 0], sizes = [2, 128], strides = [1, 1]} : vector<2x384xf32> to vector<2x128xf32>
    %51 = arith.addf %49, %50 : vector<2x128xf32>
    %52 = arith.negf %51 : vector<2x128xf32>
    %53 = math.exp %52 : vector<2x128xf32>
    %cst_22 = arith.constant 1.000000e+00 : f32
    %54 = vector.broadcast %cst_22 : f32 to vector<2x128xf32>
    %55 = arith.addf %54, %53 : vector<2x128xf32>
    %56 = arith.divf %54, %55 : vector<2x128xf32>
    %57 = vector.extract_strided_slice %18 {offsets = [0, 128], sizes = [2, 128], strides = [1, 1]} : vector<2x384xf32> to vector<2x128xf32>
    %58 = vector.extract_strided_slice %47 {offsets = [0, 128], sizes = [2, 128], strides = [1, 1]} : vector<2x384xf32> to vector<2x128xf32>
    %59 = arith.addf %57, %58 : vector<2x128xf32>
    %60 = arith.negf %59 : vector<2x128xf32>
    %61 = math.exp %60 : vector<2x128xf32>
    %cst_23 = arith.constant 1.000000e+00 : f32
    %62 = vector.broadcast %cst_23 : f32 to vector<2x128xf32>
    %63 = arith.addf %62, %61 : vector<2x128xf32>
    %64 = arith.divf %62, %63 : vector<2x128xf32>
    %65 = vector.extract_strided_slice %18 {offsets = [0, 256], sizes = [2, 128], strides = [1, 1]} : vector<2x384xf32> to vector<2x128xf32>
    %66 = vector.extract_strided_slice %47 {offsets = [0, 256], sizes = [2, 128], strides = [1, 1]} : vector<2x384xf32> to vector<2x128xf32>
    %67 = arith.mulf %56, %66 : vector<2x128xf32>
    %68 = arith.addf %65, %67 : vector<2x128xf32>
    %69 = math.tanh %68 : vector<2x128xf32>
    %cst_24 = arith.constant 1.000000e+00 : f32
    %70 = vector.broadcast %cst_24 : f32 to vector<2x128xf32>
    %71 = arith.subf %70, %64 : vector<2x128xf32>
    %72 = arith.mulf %71, %69 : vector<2x128xf32>
    %73 = arith.mulf %64, %48 : vector<2x128xf32>
    %74 = arith.addf %72, %73 : vector<2x128xf32>
    %75 = vector.extract_strided_slice %46 {offsets = [0, 0], sizes = [2, 32], strides = [1, 1]} : vector<2x128xf32> to vector<2x32xf32>
    %76 = vector.shape_cast %75 : vector<2x32xf32> to vector<2x1x32xf32>
    %c0_25 = arith.constant 0 : index
    %c0_26 = arith.constant 0 : index
    %c0_27 = arith.constant 0 : index
    %77 = vector.load %arg6[%c0_25, %c0_26, %c0_27] : memref<2x8x64xf32, #tpu.memory_space<vmem>>, vector<2x1x32xf32>
    tpu.vector_store %arg6[%c0_25, %c0_26, %c0_27], %76 {strides = array<i32>} : memref<2x8x64xf32, #tpu.memory_space<vmem>>, vector<2x1x32xf32>,
    %78 = vector.extract_strided_slice %74 {offsets = [0, 0], sizes = [2, 32], strides = [1, 1]} : vector<2x128xf32> to vector<2x32xf32>
    %79 = vector.shape_cast %78 : vector<2x32xf32> to vector<2x1x32xf32>
    %c0_28 = arith.constant 0 : index
    %c7_29 = arith.constant 7 : index
    %c32 = arith.constant 32 : index
    %80 = vector.load %arg6[%c0_28, %c7_29, %c32] : memref<2x8x64xf32, #tpu.memory_space<vmem>>, vector<2x1x32xf32>
    tpu.vector_store %arg6[%c0_28, %c7_29, %c32], %79 {strides = array<i32>} : memref<2x8x64xf32, #tpu.memory_space<vmem>>, vector<2x1x32xf32>,
    %81 = tpu.concatenate %46, %74 in 1 : vector<2x128xf32>, vector<2x128xf32> -> vector<2x256xf32>
    %cst_30 = arith.constant dense<0.000000e+00> : vector<2x768xf32>
    %82 = tpu.matmul %81, %9, %cst_30 {dimension_numbers = #tpu.dot_dimension_numbers<[1], [0], [0], [1], [0, 0, 1, 1], [], []>} : vector<2x256xf32>, vector<256x768xf32>, vector<2x768xf32> -> vector<2x768xf32>
    %83 = vector.broadcast %10 : vector<1x768xf32> to vector<2x768xf32>
    %84 = arith.addf %82, %83 : vector<2x768xf32>
    %c0_31 = arith.constant 0 : index
    %c1 = arith.constant 1 : index
    %c0_32 = arith.constant 0 : index
    %85 = vector.load %arg8[%c0_31, %c1, %c0_32] : memref<2x8x768xf32, #tpu.memory_space<vmem>>, vector<2x1x384xf32>
    %86 = vector.shape_cast %85 : vector<2x1x384xf32> to vector<2x384xf32>
    %c0_33 = arith.constant 0 : index
    %c6 = arith.constant 6 : index
    %c384_34 = arith.constant 384 : index
    %87 = vector.load %arg8[%c0_33, %c6, %c384_34] : memref<2x8x768xf32, #tpu.memory_space<vmem>>, vector<2x1x384xf32>
    %88 = vector.shape_cast %87 : vector<2x1x384xf32> to vector<2x384xf32>
    %89 = vector.extract_strided_slice %84 {offsets = [0, 0], sizes = [2, 384], strides = [1, 1]} : vector<2x768xf32> to vector<2x384xf32>
    %90 = vector.extract_strided_slice %81 {offsets = [0, 0], sizes = [2, 128], strides = [1, 1]} : vector<2x256xf32> to vector<2x128xf32>
    %91 = vector.extract_strided_slice %86 {offsets = [0, 0], sizes = [2, 128], strides = [1, 1]} : vector<2x384xf32> to vector<2x128xf32>
    %92 = vector.extract_strided_slice %89 {offsets = [0, 0], sizes = [2, 128], strides = [1, 1]} : vector<2x384xf32> to vector<2x128xf32>
    %93 = arith.addf %91, %92 : vector<2x128xf32>
    %94 = arith.negf %93 : vector<2x128xf32>
    %95 = math.exp %94 : vector<2x128xf32>
    %cst_35 = arith.constant 1.000000e+00 : f32
    %96 = vector.broadcast %cst_35 : f32 to vector<2x128xf32>
    %97 = arith.addf %96, %95 : vector<2x128xf32>
    %98 = arith.divf %96, %97 : vector<2x128xf32>
    %99 = vector.extract_strided_slice %86 {offsets = [0, 128], sizes = [2, 128], strides = [1, 1]} : vector<2x384xf32> to vector<2x128xf32>
    %100 = vector.extract_strided_slice %89 {offsets = [0, 128], sizes = [2, 128], strides = [1, 1]} : vector<2x384xf32> to vector<2x128xf32>
    %101 = arith.addf %99, %100 : vector<2x128xf32>
    %102 = arith.negf %101 : vector<2x128xf32>
    %103 = math.exp %102 : vector<2x128xf32>
    %cst_36 = arith.constant 1.000000e+00 : f32
    %104 = vector.broadcast %cst_36 : f32 to vector<2x128xf32>
    %105 = arith.addf %104, %103 : vector<2x128xf32>
    %106 = arith.divf %104, %105 : vector<2x128xf32>
    %107 = vector.extract_strided_slice %86 {offsets = [0, 256], sizes = [2, 128], strides = [1, 1]} : vector<2x384xf32> to vector<2x128xf32>
    %108 = vector.extract_strided_slice %89 {offsets = [0, 256], sizes = [2, 128], strides = [1, 1]} : vector<2x384xf32> to vector<2x128xf32>
    %109 = arith.mulf %98, %108 : vector<2x128xf32>
    %110 = arith.addf %107, %109 : vector<2x128xf32>
    %111 = math.tanh %110 : vector<2x128xf32>
    %cst_37 = arith.constant 1.000000e+00 : f32
    %112 = vector.broadcast %cst_37 : f32 to vector<2x128xf32>
    %113 = arith.subf %112, %106 : vector<2x128xf32>
    %114 = arith.mulf %113, %111 : vector<2x128xf32>
    %115 = arith.mulf %106, %90 : vector<2x128xf32>
    %116 = arith.addf %114, %115 : vector<2x128xf32>
    %117 = vector.extract_strided_slice %84 {offsets = [0, 384], sizes = [2, 384], strides = [1, 1]} : vector<2x768xf32> to vector<2x384xf32>
    %118 = vector.extract_strided_slice %81 {offsets = [0, 128], sizes = [2, 128], strides = [1, 1]} : vector<2x256xf32> to vector<2x128xf32>
    %119 = vector.extract_strided_slice %88 {offsets = [0, 0], sizes = [2, 128], strides = [1, 1]} : vector<2x384xf32> to vector<2x128xf32>
    %120 = vector.extract_strided_slice %117 {offsets = [0, 0], sizes = [2, 128], strides = [1, 1]} : vector<2x384xf32> to vector<2x128xf32>
    %121 = arith.addf %119, %120 : vector<2x128xf32>
    %122 = arith.negf %121 : vector<2x128xf32>
    %123 = math.exp %122 : vector<2x128xf32>
    %cst_38 = arith.constant 1.000000e+00 : f32
    %124 = vector.broadcast %cst_38 : f32 to vector<2x128xf32>
    %125 = arith.addf %124, %123 : vector<2x128xf32>
    %126 = arith.divf %124, %125 : vector<2x128xf32>
    %127 = vector.extract_strided_slice %88 {offsets = [0, 128], sizes = [2, 128], strides = [1, 1]} : vector<2x384xf32> to vector<2x128xf32>
    %128 = vector.extract_strided_slice %117 {offsets = [0, 128], sizes = [2, 128], strides = [1, 1]} : vector<2x384xf32> to vector<2x128xf32>
    %129 = arith.addf %127, %128 : vector<2x128xf32>
    %130 = arith.negf %129 : vector<2x128xf32>
    %131 = math.exp %130 : vector<2x128xf32>
    %cst_39 = arith.constant 1.000000e+00 : f32
    %132 = vector.broadcast %cst_39 : f32 to vector<2x128xf32>
    %133 = arith.addf %132, %131 : vector<2x128xf32>
    %134 = arith.divf %132, %133 : vector<2x128xf32>
    %135 = vector.extract_strided_slice %88 {offsets = [0, 256], sizes = [2, 128], strides = [1, 1]} : vector<2x384xf32> to vector<2x128xf32>
    %136 = vector.extract_strided_slice %117 {offsets = [0, 256], sizes = [2, 128], strides = [1, 1]} : vector<2x384xf32> to vector<2x128xf32>
    %137 = arith.mulf %126, %136 : vector<2x128xf32>
    %138 = arith.addf %135, %137 : vector<2x128xf32>
    %139 = math.tanh %138 : vector<2x128xf32>
    %cst_40 = arith.constant 1.000000e+00 : f32
    %140 = vector.broadcast %cst_40 : f32 to vector<2x128xf32>
    %141 = arith.subf %140, %134 : vector<2x128xf32>
    %142 = arith.mulf %141, %139 : vector<2x128xf32>
    %143 = arith.mulf %134, %118 : vector<2x128xf32>
    %144 = arith.addf %142, %143 : vector<2x128xf32>
    %145 = vector.extract_strided_slice %116 {offsets = [0, 0], sizes = [2, 32], strides = [1, 1]} : vector<2x128xf32> to vector<2x32xf32>
    %146 = vector.shape_cast %145 : vector<2x32xf32> to vector<2x1x32xf32>
    %c0_41 = arith.constant 0 : index
    %c1_42 = arith.constant 1 : index
    %c0_43 = arith.constant 0 : index
    %147 = vector.load %arg6[%c0_41, %c1_42, %c0_43] : memref<2x8x64xf32, #tpu.memory_space<vmem>>, vector<2x1x32xf32>
    tpu.vector_store %arg6[%c0_41, %c1_42, %c0_43], %146 {strides = array<i32>} : memref<2x8x64xf32, #tpu.memory_space<vmem>>, vector<2x1x32xf32>,
    %148 = vector.extract_strided_slice %144 {offsets = [0, 0], sizes = [2, 32], strides = [1, 1]} : vector<2x128xf32> to vector<2x32xf32>
    %149 = vector.shape_cast %148 : vector<2x32xf32> to vector<2x1x32xf32>
    %c0_44 = arith.constant 0 : index
    %c6_45 = arith.constant 6 : index
    %c32_46 = arith.constant 32 : index
    %150 = vector.load %arg6[%c0_44, %c6_45, %c32_46] : memref<2x8x64xf32, #tpu.memory_space<vmem>>, vector<2x1x32xf32>
    tpu.vector_store %arg6[%c0_44, %c6_45, %c32_46], %149 {strides = array<i32>} : memref<2x8x64xf32, #tpu.memory_space<vmem>>, vector<2x1x32xf32>,
    %151 = tpu.concatenate %116, %144 in 1 : vector<2x128xf32>, vector<2x128xf32> -> vector<2x256xf32>
    %cst_47 = arith.constant dense<0.000000e+00> : vector<2x768xf32>
    %152 = tpu.matmul %151, %9, %cst_47 {dimension_numbers = #tpu.dot_dimension_numbers<[1], [0], [0], [1], [0, 0, 1, 1], [], []>} : vector<2x256xf32>, vector<256x768xf32>, vector<2x768xf32> -> vector<2x768xf32>
    %153 = vector.broadcast %10 : vector<1x768xf32> to vector<2x768xf32>
    %154 = arith.addf %152, %153 : vector<2x768xf32>
    %c0_48 = arith.constant 0 : index
    %c2 = arith.constant 2 : index
    %c0_49 = arith.constant 0 : index
    %155 = vector.load %arg8[%c0_48, %c2, %c0_49] : memref<2x8x768xf32, #tpu.memory_space<vmem>>, vector<2x1x384xf32>
    %156 = vector.shape_cast %155 : vector<2x1x384xf32> to vector<2x384xf32>
    %c0_50 = arith.constant 0 : index
    %c5 = arith.constant 5 : index
    %c384_51 = arith.constant 384 : index
    %157 = vector.load %arg8[%c0_50, %c5, %c384_51] : memref<2x8x768xf32, #tpu.memory_space<vmem>>, vector<2x1x384xf32>
    %158 = vector.shape_cast %157 : vector<2x1x384xf32> to vector<2x384xf32>
    %159 = vector.extract_strided_slice %154 {offsets = [0, 0], sizes = [2, 384], strides = [1, 1]} : vector<2x768xf32> to vector<2x384xf32>
    %160 = vector.extract_strided_slice %151 {offsets = [0, 0], sizes = [2, 128], strides = [1, 1]} : vector<2x256xf32> to vector<2x128xf32>
    %161 = vector.extract_strided_slice %156 {offsets = [0, 0], sizes = [2, 128], strides = [1, 1]} : vector<2x384xf32> to vector<2x128xf32>
    %162 = vector.extract_strided_slice %159 {offsets = [0, 0], sizes = [2, 128], strides = [1, 1]} : vector<2x384xf32> to vector<2x128xf32>
    %163 = arith.addf %161, %162 : vector<2x128xf32>
    %164 = arith.negf %163 : vector<2x128xf32>
    %165 = math.exp %164 : vector<2x128xf32>
    %cst_52 = arith.constant 1.000000e+00 : f32
    %166 = vector.broadcast %cst_52 : f32 to vector<2x128xf32>
    %167 = arith.addf %166, %165 : vector<2x128xf32>
    %168 = arith.divf %166, %167 : vector<2x128xf32>
    %169 = vector.extract_strided_slice %156 {offsets = [0, 128], sizes = [2, 128], strides = [1, 1]} : vector<2x384xf32> to vector<2x128xf32>
    %170 = vector.extract_strided_slice %159 {offsets = [0, 128], sizes = [2, 128], strides = [1, 1]} : vector<2x384xf32> to vector<2x128xf32>
    %171 = arith.addf %169, %170 : vector<2x128xf32>
    %172 = arith.negf %171 : vector<2x128xf32>
    %173 = math.exp %172 : vector<2x128xf32>
    %cst_53 = arith.constant 1.000000e+00 : f32
    %174 = vector.broadcast %cst_53 : f32 to vector<2x128xf32>
    %175 = arith.addf %174, %173 : vector<2x128xf32>
    %176 = arith.divf %174, %175 : vector<2x128xf32>
    %177 = vector.extract_strided_slice %156 {offsets = [0, 256], sizes = [2, 128], strides = [1, 1]} : vector<2x384xf32> to vector<2x128xf32>
    %178 = vector.extract_strided_slice %159 {offsets = [0, 256], sizes = [2, 128], strides = [1, 1]} : vector<2x384xf32> to vector<2x128xf32>
    %179 = arith.mulf %168, %178 : vector<2x128xf32>
    %180 = arith.addf %177, %179 : vector<2x128xf32>
    %181 = math.tanh %180 : vector<2x128xf32>
    %cst_54 = arith.constant 1.000000e+00 : f32
    %182 = vector.broadcast %cst_54 : f32 to vector<2x128xf32>
    %183 = arith.subf %182, %176 : vector<2x128xf32>
    %184 = arith.mulf %183, %181 : vector<2x128xf32>
    %185 = arith.mulf %176, %160 : vector<2x128xf32>
    %186 = arith.addf %184, %185 : vector<2x128xf32>
    %187 = vector.extract_strided_slice %154 {offsets = [0, 384], sizes = [2, 384], strides = [1, 1]} : vector<2x768xf32> to vector<2x384xf32>
    %188 = vector.extract_strided_slice %151 {offsets = [0, 128], sizes = [2, 128], strides = [1, 1]} : vector<2x256xf32> to vector<2x128xf32>
    %189 = vector.extract_strided_slice %158 {offsets = [0, 0], sizes = [2, 128], strides = [1, 1]} : vector<2x384xf32> to vector<2x128xf32>
    %190 = vector.extract_strided_slice %187 {offsets = [0, 0], sizes = [2, 128], strides = [1, 1]} : vector<2x384xf32> to vector<2x128xf32>
    %191 = arith.addf %189, %190 : vector<2x128xf32>
    %192 = arith.negf %191 : vector<2x128xf32>
    %193 = math.exp %192 : vector<2x128xf32>
    %cst_55 = arith.constant 1.000000e+00 : f32
    %194 = vector.broadcast %cst_55 : f32 to vector<2x128xf32>
    %195 = arith.addf %194, %193 : vector<2x128xf32>
    %196 = arith.divf %194, %195 : vector<2x128xf32>
    %197 = vector.extract_strided_slice %158 {offsets = [0, 128], sizes = [2, 128], strides = [1, 1]} : vector<2x384xf32> to vector<2x128xf32>
    %198 = vector.extract_strided_slice %187 {offsets = [0, 128], sizes = [2, 128], strides = [1, 1]} : vector<2x384xf32> to vector<2x128xf32>
    %199 = arith.addf %197, %198 : vector<2x128xf32>
    %200 = arith.negf %199 : vector<2x128xf32>
    %201 = math.exp %200 : vector<2x128xf32>
    %cst_56 = arith.constant 1.000000e+00 : f32
    %202 = vector.broadcast %cst_56 : f32 to vector<2x128xf32>
    %203 = arith.addf %202, %201 : vector<2x128xf32>
    %204 = arith.divf %202, %203 : vector<2x128xf32>
    %205 = vector.extract_strided_slice %158 {offsets = [0, 256], sizes = [2, 128], strides = [1, 1]} : vector<2x384xf32> to vector<2x128xf32>
    %206 = vector.extract_strided_slice %187 {offsets = [0, 256], sizes = [2, 128], strides = [1, 1]} : vector<2x384xf32> to vector<2x128xf32>
    %207 = arith.mulf %196, %206 : vector<2x128xf32>
    %208 = arith.addf %205, %207 : vector<2x128xf32>
    %209 = math.tanh %208 : vector<2x128xf32>
    %cst_57 = arith.constant 1.000000e+00 : f32
    %210 = vector.broadcast %cst_57 : f32 to vector<2x128xf32>
    %211 = arith.subf %210, %204 : vector<2x128xf32>
    %212 = arith.mulf %211, %209 : vector<2x128xf32>
    %213 = arith.mulf %204, %188 : vector<2x128xf32>
    %214 = arith.addf %212, %213 : vector<2x128xf32>
    %215 = vector.extract_strided_slice %186 {offsets = [0, 0], sizes = [2, 32], strides = [1, 1]} : vector<2x128xf32> to vector<2x32xf32>
    %216 = vector.shape_cast %215 : vector<2x32xf32> to vector<2x1x32xf32>
    %c0_58 = arith.constant 0 : index
    %c2_59 = arith.constant 2 : index
    %c0_60 = arith.constant 0 : index
    %217 = vector.load %arg6[%c0_58, %c2_59, %c0_60] : memref<2x8x64xf32, #tpu.memory_space<vmem>>, vector<2x1x32xf32>
    tpu.vector_store %arg6[%c0_58, %c2_59, %c0_60], %216 {strides = array<i32>} : memref<2x8x64xf32, #tpu.memory_space<vmem>>, vector<2x1x32xf32>,
    %218 = vector.extract_strided_slice %214 {offsets = [0, 0], sizes = [2, 32], strides = [1, 1]} : vector<2x128xf32> to vector<2x32xf32>
    %219 = vector.shape_cast %218 : vector<2x32xf32> to vector<2x1x32xf32>
    %c0_61 = arith.constant 0 : index
    %c5_62 = arith.constant 5 : index
    %c32_63 = arith.constant 32 : index
    %220 = vector.load %arg6[%c0_61, %c5_62, %c32_63] : memref<2x8x64xf32, #tpu.memory_space<vmem>>, vector<2x1x32xf32>
    tpu.vector_store %arg6[%c0_61, %c5_62, %c32_63], %219 {strides = array<i32>} : memref<2x8x64xf32, #tpu.memory_space<vmem>>, vector<2x1x32xf32>,
    %221 = tpu.concatenate %186, %214 in 1 : vector<2x128xf32>, vector<2x128xf32> -> vector<2x256xf32>
    %cst_64 = arith.constant dense<0.000000e+00> : vector<2x768xf32>
    %222 = tpu.matmul %221, %9, %cst_64 {dimension_numbers = #tpu.dot_dimension_numbers<[1], [0], [0], [1], [0, 0, 1, 1], [], []>} : vector<2x256xf32>, vector<256x768xf32>, vector<2x768xf32> -> vector<2x768xf32>
    %223 = vector.broadcast %10 : vector<1x768xf32> to vector<2x768xf32>
    %224 = arith.addf %222, %223 : vector<2x768xf32>
    %c0_65 = arith.constant 0 : index
    %c3 = arith.constant 3 : index
    %c0_66 = arith.constant 0 : index
    %225 = vector.load %arg8[%c0_65, %c3, %c0_66] : memref<2x8x768xf32, #tpu.memory_space<vmem>>, vector<2x1x384xf32>
    %226 = vector.shape_cast %225 : vector<2x1x384xf32> to vector<2x384xf32>
    %c0_67 = arith.constant 0 : index
    %c4 = arith.constant 4 : index
    %c384_68 = arith.constant 384 : index
    %227 = vector.load %arg8[%c0_67, %c4, %c384_68] : memref<2x8x768xf32, #tpu.memory_space<vmem>>, vector<2x1x384xf32>
    %228 = vector.shape_cast %227 : vector<2x1x384xf32> to vector<2x384xf32>
    %229 = vector.extract_strided_slice %224 {offsets = [0, 0], sizes = [2, 384], strides = [1, 1]} : vector<2x768xf32> to vector<2x384xf32>
    %230 = vector.extract_strided_slice %221 {offsets = [0, 0], sizes = [2, 128], strides = [1, 1]} : vector<2x256xf32> to vector<2x128xf32>
    %231 = vector.extract_strided_slice %226 {offsets = [0, 0], sizes = [2, 128], strides = [1, 1]} : vector<2x384xf32> to vector<2x128xf32>
    %232 = vector.extract_strided_slice %229 {offsets = [0, 0], sizes = [2, 128], strides = [1, 1]} : vector<2x384xf32> to vector<2x128xf32>
    %233 = arith.addf %231, %232 : vector<2x128xf32>
    %234 = arith.negf %233 : vector<2x128xf32>
    %235 = math.exp %234 : vector<2x128xf32>
    %cst_69 = arith.constant 1.000000e+00 : f32
    %236 = vector.broadcast %cst_69 : f32 to vector<2x128xf32>
    %237 = arith.addf %236, %235 : vector<2x128xf32>
    %238 = arith.divf %236, %237 : vector<2x128xf32>
    %239 = vector.extract_strided_slice %226 {offsets = [0, 128], sizes = [2, 128], strides = [1, 1]} : vector<2x384xf32> to vector<2x128xf32>
    %240 = vector.extract_strided_slice %229 {offsets = [0, 128], sizes = [2, 128], strides = [1, 1]} : vector<2x384xf32> to vector<2x128xf32>
    %241 = arith.addf %239, %240 : vector<2x128xf32>
    %242 = arith.negf %241 : vector<2x128xf32>
    %243 = math.exp %242 : vector<2x128xf32>
    %cst_70 = arith.constant 1.000000e+00 : f32
    %244 = vector.broadcast %cst_70 : f32 to vector<2x128xf32>
    %245 = arith.addf %244, %243 : vector<2x128xf32>
    %246 = arith.divf %244, %245 : vector<2x128xf32>
    %247 = vector.extract_strided_slice %226 {offsets = [0, 256], sizes = [2, 128], strides = [1, 1]} : vector<2x384xf32> to vector<2x128xf32>
    %248 = vector.extract_strided_slice %229 {offsets = [0, 256], sizes = [2, 128], strides = [1, 1]} : vector<2x384xf32> to vector<2x128xf32>
    %249 = arith.mulf %238, %248 : vector<2x128xf32>
    %250 = arith.addf %247, %249 : vector<2x128xf32>
    %251 = math.tanh %250 : vector<2x128xf32>
    %cst_71 = arith.constant 1.000000e+00 : f32
    %252 = vector.broadcast %cst_71 : f32 to vector<2x128xf32>
    %253 = arith.subf %252, %246 : vector<2x128xf32>
    %254 = arith.mulf %253, %251 : vector<2x128xf32>
    %255 = arith.mulf %246, %230 : vector<2x128xf32>
    %256 = arith.addf %254, %255 : vector<2x128xf32>
    %257 = vector.extract_strided_slice %224 {offsets = [0, 384], sizes = [2, 384], strides = [1, 1]} : vector<2x768xf32> to vector<2x384xf32>
    %258 = vector.extract_strided_slice %221 {offsets = [0, 128], sizes = [2, 128], strides = [1, 1]} : vector<2x256xf32> to vector<2x128xf32>
    %259 = vector.extract_strided_slice %228 {offsets = [0, 0], sizes = [2, 128], strides = [1, 1]} : vector<2x384xf32> to vector<2x128xf32>
    %260 = vector.extract_strided_slice %257 {offsets = [0, 0], sizes = [2, 128], strides = [1, 1]} : vector<2x384xf32> to vector<2x128xf32>
    %261 = arith.addf %259, %260 : vector<2x128xf32>
    %262 = arith.negf %261 : vector<2x128xf32>
    %263 = math.exp %262 : vector<2x128xf32>
    %cst_72 = arith.constant 1.000000e+00 : f32
    %264 = vector.broadcast %cst_72 : f32 to vector<2x128xf32>
    %265 = arith.addf %264, %263 : vector<2x128xf32>
    %266 = arith.divf %264, %265 : vector<2x128xf32>
    %267 = vector.extract_strided_slice %228 {offsets = [0, 128], sizes = [2, 128], strides = [1, 1]} : vector<2x384xf32> to vector<2x128xf32>
    %268 = vector.extract_strided_slice %257 {offsets = [0, 128], sizes = [2, 128], strides = [1, 1]} : vector<2x384xf32> to vector<2x128xf32>
    %269 = arith.addf %267, %268 : vector<2x128xf32>
    %270 = arith.negf %269 : vector<2x128xf32>
    %271 = math.exp %270 : vector<2x128xf32>
    %cst_73 = arith.constant 1.000000e+00 : f32
    %272 = vector.broadcast %cst_73 : f32 to vector<2x128xf32>
    %273 = arith.addf %272, %271 : vector<2x128xf32>
    %274 = arith.divf %272, %273 : vector<2x128xf32>
    %275 = vector.extract_strided_slice %228 {offsets = [0, 256], sizes = [2, 128], strides = [1, 1]} : vector<2x384xf32> to vector<2x128xf32>
    %276 = vector.extract_strided_slice %257 {offsets = [0, 256], sizes = [2, 128], strides = [1, 1]} : vector<2x384xf32> to vector<2x128xf32>
    %277 = arith.mulf %266, %276 : vector<2x128xf32>
    %278 = arith.addf %275, %277 : vector<2x128xf32>
    %279 = math.tanh %278 : vector<2x128xf32>
    %cst_74 = arith.constant 1.000000e+00 : f32
    %280 = vector.broadcast %cst_74 : f32 to vector<2x128xf32>
    %281 = arith.subf %280, %274 : vector<2x128xf32>
    %282 = arith.mulf %281, %279 : vector<2x128xf32>
    %283 = arith.mulf %274, %258 : vector<2x128xf32>
    %284 = arith.addf %282, %283 : vector<2x128xf32>
    %285 = vector.extract_strided_slice %256 {offsets = [0, 0], sizes = [2, 32], strides = [1, 1]} : vector<2x128xf32> to vector<2x32xf32>
    %286 = vector.shape_cast %285 : vector<2x32xf32> to vector<2x1x32xf32>
    %c0_75 = arith.constant 0 : index
    %c3_76 = arith.constant 3 : index
    %c0_77 = arith.constant 0 : index
    %287 = vector.load %arg6[%c0_75, %c3_76, %c0_77] : memref<2x8x64xf32, #tpu.memory_space<vmem>>, vector<2x1x32xf32>
    tpu.vector_store %arg6[%c0_75, %c3_76, %c0_77], %286 {strides = array<i32>} : memref<2x8x64xf32, #tpu.memory_space<vmem>>, vector<2x1x32xf32>,
    %288 = vector.extract_strided_slice %284 {offsets = [0, 0], sizes = [2, 32], strides = [1, 1]} : vector<2x128xf32> to vector<2x32xf32>
    %289 = vector.shape_cast %288 : vector<2x32xf32> to vector<2x1x32xf32>
    %c0_78 = arith.constant 0 : index
    %c4_79 = arith.constant 4 : index
    %c32_80 = arith.constant 32 : index
    %290 = vector.load %arg6[%c0_78, %c4_79, %c32_80] : memref<2x8x64xf32, #tpu.memory_space<vmem>>, vector<2x1x32xf32>
    tpu.vector_store %arg6[%c0_78, %c4_79, %c32_80], %289 {strides = array<i32>} : memref<2x8x64xf32, #tpu.memory_space<vmem>>, vector<2x1x32xf32>,
    %291 = tpu.concatenate %256, %284 in 1 : vector<2x128xf32>, vector<2x128xf32> -> vector<2x256xf32>
    %cst_81 = arith.constant dense<0.000000e+00> : vector<2x768xf32>
    %292 = tpu.matmul %291, %9, %cst_81 {dimension_numbers = #tpu.dot_dimension_numbers<[1], [0], [0], [1], [0, 0, 1, 1], [], []>} : vector<2x256xf32>, vector<256x768xf32>, vector<2x768xf32> -> vector<2x768xf32>
    %293 = vector.broadcast %10 : vector<1x768xf32> to vector<2x768xf32>
    %294 = arith.addf %292, %293 : vector<2x768xf32>
    %c0_82 = arith.constant 0 : index
    %c4_83 = arith.constant 4 : index
    %c0_84 = arith.constant 0 : index
    %295 = vector.load %arg8[%c0_82, %c4_83, %c0_84] : memref<2x8x768xf32, #tpu.memory_space<vmem>>, vector<2x1x384xf32>
    %296 = vector.shape_cast %295 : vector<2x1x384xf32> to vector<2x384xf32>
    %c0_85 = arith.constant 0 : index
    %c3_86 = arith.constant 3 : index
    %c384_87 = arith.constant 384 : index
    %297 = vector.load %arg8[%c0_85, %c3_86, %c384_87] : memref<2x8x768xf32, #tpu.memory_space<vmem>>, vector<2x1x384xf32>
    %298 = vector.shape_cast %297 : vector<2x1x384xf32> to vector<2x384xf32>
    %299 = vector.extract_strided_slice %294 {offsets = [0, 0], sizes = [2, 384], strides = [1, 1]} : vector<2x768xf32> to vector<2x384xf32>
    %300 = vector.extract_strided_slice %291 {offsets = [0, 0], sizes = [2, 128], strides = [1, 1]} : vector<2x256xf32> to vector<2x128xf32>
    %301 = vector.extract_strided_slice %296 {offsets = [0, 0], sizes = [2, 128], strides = [1, 1]} : vector<2x384xf32> to vector<2x128xf32>
    %302 = vector.extract_strided_slice %299 {offsets = [0, 0], sizes = [2, 128], strides = [1, 1]} : vector<2x384xf32> to vector<2x128xf32>
    %303 = arith.addf %301, %302 : vector<2x128xf32>
    %304 = arith.negf %303 : vector<2x128xf32>
    %305 = math.exp %304 : vector<2x128xf32>
    %cst_88 = arith.constant 1.000000e+00 : f32
    %306 = vector.broadcast %cst_88 : f32 to vector<2x128xf32>
    %307 = arith.addf %306, %305 : vector<2x128xf32>
    %308 = arith.divf %306, %307 : vector<2x128xf32>
    %309 = vector.extract_strided_slice %296 {offsets = [0, 128], sizes = [2, 128], strides = [1, 1]} : vector<2x384xf32> to vector<2x128xf32>
    %310 = vector.extract_strided_slice %299 {offsets = [0, 128], sizes = [2, 128], strides = [1, 1]} : vector<2x384xf32> to vector<2x128xf32>
    %311 = arith.addf %309, %310 : vector<2x128xf32>
    %312 = arith.negf %311 : vector<2x128xf32>
    %313 = math.exp %312 : vector<2x128xf32>
    %cst_89 = arith.constant 1.000000e+00 : f32
    %314 = vector.broadcast %cst_89 : f32 to vector<2x128xf32>
    %315 = arith.addf %314, %313 : vector<2x128xf32>
    %316 = arith.divf %314, %315 : vector<2x128xf32>
    %317 = vector.extract_strided_slice %296 {offsets = [0, 256], sizes = [2, 128], strides = [1, 1]} : vector<2x384xf32> to vector<2x128xf32>
    %318 = vector.extract_strided_slice %299 {offsets = [0, 256], sizes = [2, 128], strides = [1, 1]} : vector<2x384xf32> to vector<2x128xf32>
    %319 = arith.mulf %308, %318 : vector<2x128xf32>
    %320 = arith.addf %317, %319 : vector<2x128xf32>
    %321 = math.tanh %320 : vector<2x128xf32>
    %cst_90 = arith.constant 1.000000e+00 : f32
    %322 = vector.broadcast %cst_90 : f32 to vector<2x128xf32>
    %323 = arith.subf %322, %316 : vector<2x128xf32>
    %324 = arith.mulf %323, %321 : vector<2x128xf32>
    %325 = arith.mulf %316, %300 : vector<2x128xf32>
    %326 = arith.addf %324, %325 : vector<2x128xf32>
    %327 = vector.extract_strided_slice %294 {offsets = [0, 384], sizes = [2, 384], strides = [1, 1]} : vector<2x768xf32> to vector<2x384xf32>
    %328 = vector.extract_strided_slice %291 {offsets = [0, 128], sizes = [2, 128], strides = [1, 1]} : vector<2x256xf32> to vector<2x128xf32>
    %329 = vector.extract_strided_slice %298 {offsets = [0, 0], sizes = [2, 128], strides = [1, 1]} : vector<2x384xf32> to vector<2x128xf32>
    %330 = vector.extract_strided_slice %327 {offsets = [0, 0], sizes = [2, 128], strides = [1, 1]} : vector<2x384xf32> to vector<2x128xf32>
    %331 = arith.addf %329, %330 : vector<2x128xf32>
    %332 = arith.negf %331 : vector<2x128xf32>
    %333 = math.exp %332 : vector<2x128xf32>
    %cst_91 = arith.constant 1.000000e+00 : f32
    %334 = vector.broadcast %cst_91 : f32 to vector<2x128xf32>
    %335 = arith.addf %334, %333 : vector<2x128xf32>
    %336 = arith.divf %334, %335 : vector<2x128xf32>
    %337 = vector.extract_strided_slice %298 {offsets = [0, 128], sizes = [2, 128], strides = [1, 1]} : vector<2x384xf32> to vector<2x128xf32>
    %338 = vector.extract_strided_slice %327 {offsets = [0, 128], sizes = [2, 128], strides = [1, 1]} : vector<2x384xf32> to vector<2x128xf32>
    %339 = arith.addf %337, %338 : vector<2x128xf32>
    %340 = arith.negf %339 : vector<2x128xf32>
    %341 = math.exp %340 : vector<2x128xf32>
    %cst_92 = arith.constant 1.000000e+00 : f32
    %342 = vector.broadcast %cst_92 : f32 to vector<2x128xf32>
    %343 = arith.addf %342, %341 : vector<2x128xf32>
    %344 = arith.divf %342, %343 : vector<2x128xf32>
    %345 = vector.extract_strided_slice %298 {offsets = [0, 256], sizes = [2, 128], strides = [1, 1]} : vector<2x384xf32> to vector<2x128xf32>
    %346 = vector.extract_strided_slice %327 {offsets = [0, 256], sizes = [2, 128], strides = [1, 1]} : vector<2x384xf32> to vector<2x128xf32>
    %347 = arith.mulf %336, %346 : vector<2x128xf32>
    %348 = arith.addf %345, %347 : vector<2x128xf32>
    %349 = math.tanh %348 : vector<2x128xf32>
    %cst_93 = arith.constant 1.000000e+00 : f32
    %350 = vector.broadcast %cst_93 : f32 to vector<2x128xf32>
    %351 = arith.subf %350, %344 : vector<2x128xf32>
    %352 = arith.mulf %351, %349 : vector<2x128xf32>
    %353 = arith.mulf %344, %328 : vector<2x128xf32>
    %354 = arith.addf %352, %353 : vector<2x128xf32>
    %355 = vector.extract_strided_slice %326 {offsets = [0, 0], sizes = [2, 32], strides = [1, 1]} : vector<2x128xf32> to vector<2x32xf32>
    %356 = vector.shape_cast %355 : vector<2x32xf32> to vector<2x1x32xf32>
    %c0_94 = arith.constant 0 : index
    %c4_95 = arith.constant 4 : index
    %c0_96 = arith.constant 0 : index
    %357 = vector.load %arg6[%c0_94, %c4_95, %c0_96] : memref<2x8x64xf32, #tpu.memory_space<vmem>>, vector<2x1x32xf32>
    tpu.vector_store %arg6[%c0_94, %c4_95, %c0_96], %356 {strides = array<i32>} : memref<2x8x64xf32, #tpu.memory_space<vmem>>, vector<2x1x32xf32>,
    %358 = vector.extract_strided_slice %354 {offsets = [0, 0], sizes = [2, 32], strides = [1, 1]} : vector<2x128xf32> to vector<2x32xf32>
    %359 = vector.shape_cast %358 : vector<2x32xf32> to vector<2x1x32xf32>
    %c0_97 = arith.constant 0 : index
    %c3_98 = arith.constant 3 : index
    %c32_99 = arith.constant 32 : index
    %360 = vector.load %arg6[%c0_97, %c3_98, %c32_99] : memref<2x8x64xf32, #tpu.memory_space<vmem>>, vector<2x1x32xf32>
    tpu.vector_store %arg6[%c0_97, %c3_98, %c32_99], %359 {strides = array<i32>} : memref<2x8x64xf32, #tpu.memory_space<vmem>>, vector<2x1x32xf32>,
    %361 = tpu.concatenate %326, %354 in 1 : vector<2x128xf32>, vector<2x128xf32> -> vector<2x256xf32>
    %cst_100 = arith.constant dense<0.000000e+00> : vector<2x768xf32>
    %362 = tpu.matmul %361, %9, %cst_100 {dimension_numbers = #tpu.dot_dimension_numbers<[1], [0], [0], [1], [0, 0, 1, 1], [], []>} : vector<2x256xf32>, vector<256x768xf32>, vector<2x768xf32> -> vector<2x768xf32>
    %363 = vector.broadcast %10 : vector<1x768xf32> to vector<2x768xf32>
    %364 = arith.addf %362, %363 : vector<2x768xf32>
    %c0_101 = arith.constant 0 : index
    %c5_102 = arith.constant 5 : index
    %c0_103 = arith.constant 0 : index
    %365 = vector.load %arg8[%c0_101, %c5_102, %c0_103] : memref<2x8x768xf32, #tpu.memory_space<vmem>>, vector<2x1x384xf32>
    %366 = vector.shape_cast %365 : vector<2x1x384xf32> to vector<2x384xf32>
    %c0_104 = arith.constant 0 : index
    %c2_105 = arith.constant 2 : index
    %c384_106 = arith.constant 384 : index
    %367 = vector.load %arg8[%c0_104, %c2_105, %c384_106] : memref<2x8x768xf32, #tpu.memory_space<vmem>>, vector<2x1x384xf32>
    %368 = vector.shape_cast %367 : vector<2x1x384xf32> to vector<2x384xf32>
    %369 = vector.extract_strided_slice %364 {offsets = [0, 0], sizes = [2, 384], strides = [1, 1]} : vector<2x768xf32> to vector<2x384xf32>
    %370 = vector.extract_strided_slice %361 {offsets = [0, 0], sizes = [2, 128], strides = [1, 1]} : vector<2x256xf32> to vector<2x128xf32>
    %371 = vector.extract_strided_slice %366 {offsets = [0, 0], sizes = [2, 128], strides = [1, 1]} : vector<2x384xf32> to vector<2x128xf32>
    %372 = vector.extract_strided_slice %369 {offsets = [0, 0], sizes = [2, 128], strides = [1, 1]} : vector<2x384xf32> to vector<2x128xf32>
    %373 = arith.addf %371, %372 : vector<2x128xf32>
    %374 = arith.negf %373 : vector<2x128xf32>
    %375 = math.exp %374 : vector<2x128xf32>
    %cst_107 = arith.constant 1.000000e+00 : f32
    %376 = vector.broadcast %cst_107 : f32 to vector<2x128xf32>
    %377 = arith.addf %376, %375 : vector<2x128xf32>
    %378 = arith.divf %376, %377 : vector<2x128xf32>
    %379 = vector.extract_strided_slice %366 {offsets = [0, 128], sizes = [2, 128], strides = [1, 1]} : vector<2x384xf32> to vector<2x128xf32>
    %380 = vector.extract_strided_slice %369 {offsets = [0, 128], sizes = [2, 128], strides = [1, 1]} : vector<2x384xf32> to vector<2x128xf32>
    %381 = arith.addf %379, %380 : vector<2x128xf32>
    %382 = arith.negf %381 : vector<2x128xf32>
    %383 = math.exp %382 : vector<2x128xf32>
    %cst_108 = arith.constant 1.000000e+00 : f32
    %384 = vector.broadcast %cst_108 : f32 to vector<2x128xf32>
    %385 = arith.addf %384, %383 : vector<2x128xf32>
    %386 = arith.divf %384, %385 : vector<2x128xf32>
    %387 = vector.extract_strided_slice %366 {offsets = [0, 256], sizes = [2, 128], strides = [1, 1]} : vector<2x384xf32> to vector<2x128xf32>
    %388 = vector.extract_strided_slice %369 {offsets = [0, 256], sizes = [2, 128], strides = [1, 1]} : vector<2x384xf32> to vector<2x128xf32>
    %389 = arith.mulf %378, %388 : vector<2x128xf32>
    %390 = arith.addf %387, %389 : vector<2x128xf32>
    %391 = math.tanh %390 : vector<2x128xf32>
    %cst_109 = arith.constant 1.000000e+00 : f32
    %392 = vector.broadcast %cst_109 : f32 to vector<2x128xf32>
    %393 = arith.subf %392, %386 : vector<2x128xf32>
    %394 = arith.mulf %393, %391 : vector<2x128xf32>
    %395 = arith.mulf %386, %370 : vector<2x128xf32>
    %396 = arith.addf %394, %395 : vector<2x128xf32>
    %397 = vector.extract_strided_slice %364 {offsets = [0, 384], sizes = [2, 384], strides = [1, 1]} : vector<2x768xf32> to vector<2x384xf32>
    %398 = vector.extract_strided_slice %361 {offsets = [0, 128], sizes = [2, 128], strides = [1, 1]} : vector<2x256xf32> to vector<2x128xf32>
    %399 = vector.extract_strided_slice %368 {offsets = [0, 0], sizes = [2, 128], strides = [1, 1]} : vector<2x384xf32> to vector<2x128xf32>
    %400 = vector.extract_strided_slice %397 {offsets = [0, 0], sizes = [2, 128], strides = [1, 1]} : vector<2x384xf32> to vector<2x128xf32>
    %401 = arith.addf %399, %400 : vector<2x128xf32>
    %402 = arith.negf %401 : vector<2x128xf32>
    %403 = math.exp %402 : vector<2x128xf32>
    %cst_110 = arith.constant 1.000000e+00 : f32
    %404 = vector.broadcast %cst_110 : f32 to vector<2x128xf32>
    %405 = arith.addf %404, %403 : vector<2x128xf32>
    %406 = arith.divf %404, %405 : vector<2x128xf32>
    %407 = vector.extract_strided_slice %368 {offsets = [0, 128], sizes = [2, 128], strides = [1, 1]} : vector<2x384xf32> to vector<2x128xf32>
    %408 = vector.extract_strided_slice %397 {offsets = [0, 128], sizes = [2, 128], strides = [1, 1]} : vector<2x384xf32> to vector<2x128xf32>
    %409 = arith.addf %407, %408 : vector<2x128xf32>
    %410 = arith.negf %409 : vector<2x128xf32>
    %411 = math.exp %410 : vector<2x128xf32>
    %cst_111 = arith.constant 1.000000e+00 : f32
    %412 = vector.broadcast %cst_111 : f32 to vector<2x128xf32>
    %413 = arith.addf %412, %411 : vector<2x128xf32>
    %414 = arith.divf %412, %413 : vector<2x128xf32>
    %415 = vector.extract_strided_slice %368 {offsets = [0, 256], sizes = [2, 128], strides = [1, 1]} : vector<2x384xf32> to vector<2x128xf32>
    %416 = vector.extract_strided_slice %397 {offsets = [0, 256], sizes = [2, 128], strides = [1, 1]} : vector<2x384xf32> to vector<2x128xf32>
    %417 = arith.mulf %406, %416 : vector<2x128xf32>
    %418 = arith.addf %415, %417 : vector<2x128xf32>
    %419 = math.tanh %418 : vector<2x128xf32>
    %cst_112 = arith.constant 1.000000e+00 : f32
    %420 = vector.broadcast %cst_112 : f32 to vector<2x128xf32>
    %421 = arith.subf %420, %414 : vector<2x128xf32>
    %422 = arith.mulf %421, %419 : vector<2x128xf32>
    %423 = arith.mulf %414, %398 : vector<2x128xf32>
    %424 = arith.addf %422, %423 : vector<2x128xf32>
    %425 = vector.extract_strided_slice %396 {offsets = [0, 0], sizes = [2, 32], strides = [1, 1]} : vector<2x128xf32> to vector<2x32xf32>
    %426 = vector.shape_cast %425 : vector<2x32xf32> to vector<2x1x32xf32>
    %c0_113 = arith.constant 0 : index
    %c5_114 = arith.constant 5 : index
    %c0_115 = arith.constant 0 : index
    %427 = vector.load %arg6[%c0_113, %c5_114, %c0_115] : memref<2x8x64xf32, #tpu.memory_space<vmem>>, vector<2x1x32xf32>
    tpu.vector_store %arg6[%c0_113, %c5_114, %c0_115], %426 {strides = array<i32>} : memref<2x8x64xf32, #tpu.memory_space<vmem>>, vector<2x1x32xf32>,
    %428 = vector.extract_strided_slice %424 {offsets = [0, 0], sizes = [2, 32], strides = [1, 1]} : vector<2x128xf32> to vector<2x32xf32>
    %429 = vector.shape_cast %428 : vector<2x32xf32> to vector<2x1x32xf32>
    %c0_116 = arith.constant 0 : index
    %c2_117 = arith.constant 2 : index
    %c32_118 = arith.constant 32 : index
    %430 = vector.load %arg6[%c0_116, %c2_117, %c32_118] : memref<2x8x64xf32, #tpu.memory_space<vmem>>, vector<2x1x32xf32>
    tpu.vector_store %arg6[%c0_116, %c2_117, %c32_118], %429 {strides = array<i32>} : memref<2x8x64xf32, #tpu.memory_space<vmem>>, vector<2x1x32xf32>,
    %431 = tpu.concatenate %396, %424 in 1 : vector<2x128xf32>, vector<2x128xf32> -> vector<2x256xf32>
    %cst_119 = arith.constant dense<0.000000e+00> : vector<2x768xf32>
    %432 = tpu.matmul %431, %9, %cst_119 {dimension_numbers = #tpu.dot_dimension_numbers<[1], [0], [0], [1], [0, 0, 1, 1], [], []>} : vector<2x256xf32>, vector<256x768xf32>, vector<2x768xf32> -> vector<2x768xf32>
    %433 = vector.broadcast %10 : vector<1x768xf32> to vector<2x768xf32>
    %434 = arith.addf %432, %433 : vector<2x768xf32>
    %c0_120 = arith.constant 0 : index
    %c6_121 = arith.constant 6 : index
    %c0_122 = arith.constant 0 : index
    %435 = vector.load %arg8[%c0_120, %c6_121, %c0_122] : memref<2x8x768xf32, #tpu.memory_space<vmem>>, vector<2x1x384xf32>
    %436 = vector.shape_cast %435 : vector<2x1x384xf32> to vector<2x384xf32>
    %c0_123 = arith.constant 0 : index
    %c1_124 = arith.constant 1 : index
    %c384_125 = arith.constant 384 : index
    %437 = vector.load %arg8[%c0_123, %c1_124, %c384_125] : memref<2x8x768xf32, #tpu.memory_space<vmem>>, vector<2x1x384xf32>
    %438 = vector.shape_cast %437 : vector<2x1x384xf32> to vector<2x384xf32>
    %439 = vector.extract_strided_slice %434 {offsets = [0, 0], sizes = [2, 384], strides = [1, 1]} : vector<2x768xf32> to vector<2x384xf32>
    %440 = vector.extract_strided_slice %431 {offsets = [0, 0], sizes = [2, 128], strides = [1, 1]} : vector<2x256xf32> to vector<2x128xf32>
    %441 = vector.extract_strided_slice %436 {offsets = [0, 0], sizes = [2, 128], strides = [1, 1]} : vector<2x384xf32> to vector<2x128xf32>
    %442 = vector.extract_strided_slice %439 {offsets = [0, 0], sizes = [2, 128], strides = [1, 1]} : vector<2x384xf32> to vector<2x128xf32>
    %443 = arith.addf %441, %442 : vector<2x128xf32>
    %444 = arith.negf %443 : vector<2x128xf32>
    %445 = math.exp %444 : vector<2x128xf32>
    %cst_126 = arith.constant 1.000000e+00 : f32
    %446 = vector.broadcast %cst_126 : f32 to vector<2x128xf32>
    %447 = arith.addf %446, %445 : vector<2x128xf32>
    %448 = arith.divf %446, %447 : vector<2x128xf32>
    %449 = vector.extract_strided_slice %436 {offsets = [0, 128], sizes = [2, 128], strides = [1, 1]} : vector<2x384xf32> to vector<2x128xf32>
    %450 = vector.extract_strided_slice %439 {offsets = [0, 128], sizes = [2, 128], strides = [1, 1]} : vector<2x384xf32> to vector<2x128xf32>
    %451 = arith.addf %449, %450 : vector<2x128xf32>
    %452 = arith.negf %451 : vector<2x128xf32>
    %453 = math.exp %452 : vector<2x128xf32>
    %cst_127 = arith.constant 1.000000e+00 : f32
    %454 = vector.broadcast %cst_127 : f32 to vector<2x128xf32>
    %455 = arith.addf %454, %453 : vector<2x128xf32>
    %456 = arith.divf %454, %455 : vector<2x128xf32>
    %457 = vector.extract_strided_slice %436 {offsets = [0, 256], sizes = [2, 128], strides = [1, 1]} : vector<2x384xf32> to vector<2x128xf32>
    %458 = vector.extract_strided_slice %439 {offsets = [0, 256], sizes = [2, 128], strides = [1, 1]} : vector<2x384xf32> to vector<2x128xf32>
    %459 = arith.mulf %448, %458 : vector<2x128xf32>
    %460 = arith.addf %457, %459 : vector<2x128xf32>
    %461 = math.tanh %460 : vector<2x128xf32>
    %cst_128 = arith.constant 1.000000e+00 : f32
    %462 = vector.broadcast %cst_128 : f32 to vector<2x128xf32>
    %463 = arith.subf %462, %456 : vector<2x128xf32>
    %464 = arith.mulf %463, %461 : vector<2x128xf32>
    %465 = arith.mulf %456, %440 : vector<2x128xf32>
    %466 = arith.addf %464, %465 : vector<2x128xf32>
    %467 = vector.extract_strided_slice %434 {offsets = [0, 384], sizes = [2, 384], strides = [1, 1]} : vector<2x768xf32> to vector<2x384xf32>
    %468 = vector.extract_strided_slice %431 {offsets = [0, 128], sizes = [2, 128], strides = [1, 1]} : vector<2x256xf32> to vector<2x128xf32>
    %469 = vector.extract_strided_slice %438 {offsets = [0, 0], sizes = [2, 128], strides = [1, 1]} : vector<2x384xf32> to vector<2x128xf32>
    %470 = vector.extract_strided_slice %467 {offsets = [0, 0], sizes = [2, 128], strides = [1, 1]} : vector<2x384xf32> to vector<2x128xf32>
    %471 = arith.addf %469, %470 : vector<2x128xf32>
    %472 = arith.negf %471 : vector<2x128xf32>
    %473 = math.exp %472 : vector<2x128xf32>
    %cst_129 = arith.constant 1.000000e+00 : f32
    %474 = vector.broadcast %cst_129 : f32 to vector<2x128xf32>
    %475 = arith.addf %474, %473 : vector<2x128xf32>
    %476 = arith.divf %474, %475 : vector<2x128xf32>
    %477 = vector.extract_strided_slice %438 {offsets = [0, 128], sizes = [2, 128], strides = [1, 1]} : vector<2x384xf32> to vector<2x128xf32>
    %478 = vector.extract_strided_slice %467 {offsets = [0, 128], sizes = [2, 128], strides = [1, 1]} : vector<2x384xf32> to vector<2x128xf32>
    %479 = arith.addf %477, %478 : vector<2x128xf32>
    %480 = arith.negf %479 : vector<2x128xf32>
    %481 = math.exp %480 : vector<2x128xf32>
    %cst_130 = arith.constant 1.000000e+00 : f32
    %482 = vector.broadcast %cst_130 : f32 to vector<2x128xf32>
    %483 = arith.addf %482, %481 : vector<2x128xf32>
    %484 = arith.divf %482, %483 : vector<2x128xf32>
    %485 = vector.extract_strided_slice %438 {offsets = [0, 256], sizes = [2, 128], strides = [1, 1]} : vector<2x384xf32> to vector<2x128xf32>
    %486 = vector.extract_strided_slice %467 {offsets = [0, 256], sizes = [2, 128], strides = [1, 1]} : vector<2x384xf32> to vector<2x128xf32>
    %487 = arith.mulf %476, %486 : vector<2x128xf32>
    %488 = arith.addf %485, %487 : vector<2x128xf32>
    %489 = math.tanh %488 : vector<2x128xf32>
    %cst_131 = arith.constant 1.000000e+00 : f32
    %490 = vector.broadcast %cst_131 : f32 to vector<2x128xf32>
    %491 = arith.subf %490, %484 : vector<2x128xf32>
    %492 = arith.mulf %491, %489 : vector<2x128xf32>
    %493 = arith.mulf %484, %468 : vector<2x128xf32>
    %494 = arith.addf %492, %493 : vector<2x128xf32>
    %495 = vector.extract_strided_slice %466 {offsets = [0, 0], sizes = [2, 32], strides = [1, 1]} : vector<2x128xf32> to vector<2x32xf32>
    %496 = vector.shape_cast %495 : vector<2x32xf32> to vector<2x1x32xf32>
    %c0_132 = arith.constant 0 : index
    %c6_133 = arith.constant 6 : index
    %c0_134 = arith.constant 0 : index
    %497 = vector.load %arg6[%c0_132, %c6_133, %c0_134] : memref<2x8x64xf32, #tpu.memory_space<vmem>>, vector<2x1x32xf32>
    tpu.vector_store %arg6[%c0_132, %c6_133, %c0_134], %496 {strides = array<i32>} : memref<2x8x64xf32, #tpu.memory_space<vmem>>, vector<2x1x32xf32>,
    %498 = vector.extract_strided_slice %494 {offsets = [0, 0], sizes = [2, 32], strides = [1, 1]} : vector<2x128xf32> to vector<2x32xf32>
    %499 = vector.shape_cast %498 : vector<2x32xf32> to vector<2x1x32xf32>
    %c0_135 = arith.constant 0 : index
    %c1_136 = arith.constant 1 : index
    %c32_137 = arith.constant 32 : index
    %500 = vector.load %arg6[%c0_135, %c1_136, %c32_137] : memref<2x8x64xf32, #tpu.memory_space<vmem>>, vector<2x1x32xf32>
    tpu.vector_store %arg6[%c0_135, %c1_136, %c32_137], %499 {strides = array<i32>} : memref<2x8x64xf32, #tpu.memory_space<vmem>>, vector<2x1x32xf32>,
    %501 = tpu.concatenate %466, %494 in 1 : vector<2x128xf32>, vector<2x128xf32> -> vector<2x256xf32>
    %cst_138 = arith.constant dense<0.000000e+00> : vector<2x768xf32>
    %502 = tpu.matmul %501, %9, %cst_138 {dimension_numbers = #tpu.dot_dimension_numbers<[1], [0], [0], [1], [0, 0, 1, 1], [], []>} : vector<2x256xf32>, vector<256x768xf32>, vector<2x768xf32> -> vector<2x768xf32>
    %503 = vector.broadcast %10 : vector<1x768xf32> to vector<2x768xf32>
    %504 = arith.addf %502, %503 : vector<2x768xf32>
    %c0_139 = arith.constant 0 : index
    %c7_140 = arith.constant 7 : index
    %c0_141 = arith.constant 0 : index
    %505 = vector.load %arg8[%c0_139, %c7_140, %c0_141] : memref<2x8x768xf32, #tpu.memory_space<vmem>>, vector<2x1x384xf32>
    %506 = vector.shape_cast %505 : vector<2x1x384xf32> to vector<2x384xf32>
    %c0_142 = arith.constant 0 : index
    %c0_143 = arith.constant 0 : index
    %c384_144 = arith.constant 384 : index
    %507 = vector.load %arg8[%c0_142, %c0_143, %c384_144] : memref<2x8x768xf32, #tpu.memory_space<vmem>>, vector<2x1x384xf32>
    %508 = vector.shape_cast %507 : vector<2x1x384xf32> to vector<2x384xf32>
    %509 = vector.extract_strided_slice %504 {offsets = [0, 0], sizes = [2, 384], strides = [1, 1]} : vector<2x768xf32> to vector<2x384xf32>
    %510 = vector.extract_strided_slice %501 {offsets = [0, 0], sizes = [2, 128], strides = [1, 1]} : vector<2x256xf32> to vector<2x128xf32>
    %511 = vector.extract_strided_slice %506 {offsets = [0, 0], sizes = [2, 128], strides = [1, 1]} : vector<2x384xf32> to vector<2x128xf32>
    %512 = vector.extract_strided_slice %509 {offsets = [0, 0], sizes = [2, 128], strides = [1, 1]} : vector<2x384xf32> to vector<2x128xf32>
    %513 = arith.addf %511, %512 : vector<2x128xf32>
    %514 = arith.negf %513 : vector<2x128xf32>
    %515 = math.exp %514 : vector<2x128xf32>
    %cst_145 = arith.constant 1.000000e+00 : f32
    %516 = vector.broadcast %cst_145 : f32 to vector<2x128xf32>
    %517 = arith.addf %516, %515 : vector<2x128xf32>
    %518 = arith.divf %516, %517 : vector<2x128xf32>
    %519 = vector.extract_strided_slice %506 {offsets = [0, 128], sizes = [2, 128], strides = [1, 1]} : vector<2x384xf32> to vector<2x128xf32>
    %520 = vector.extract_strided_slice %509 {offsets = [0, 128], sizes = [2, 128], strides = [1, 1]} : vector<2x384xf32> to vector<2x128xf32>
    %521 = arith.addf %519, %520 : vector<2x128xf32>
    %522 = arith.negf %521 : vector<2x128xf32>
    %523 = math.exp %522 : vector<2x128xf32>
    %cst_146 = arith.constant 1.000000e+00 : f32
    %524 = vector.broadcast %cst_146 : f32 to vector<2x128xf32>
    %525 = arith.addf %524, %523 : vector<2x128xf32>
    %526 = arith.divf %524, %525 : vector<2x128xf32>
    %527 = vector.extract_strided_slice %506 {offsets = [0, 256], sizes = [2, 128], strides = [1, 1]} : vector<2x384xf32> to vector<2x128xf32>
    %528 = vector.extract_strided_slice %509 {offsets = [0, 256], sizes = [2, 128], strides = [1, 1]} : vector<2x384xf32> to vector<2x128xf32>
    %529 = arith.mulf %518, %528 : vector<2x128xf32>
    %530 = arith.addf %527, %529 : vector<2x128xf32>
    %531 = math.tanh %530 : vector<2x128xf32>
    %cst_147 = arith.constant 1.000000e+00 : f32
    %532 = vector.broadcast %cst_147 : f32 to vector<2x128xf32>
    %533 = arith.subf %532, %526 : vector<2x128xf32>
    %534 = arith.mulf %533, %531 : vector<2x128xf32>
    %535 = arith.mulf %526, %510 : vector<2x128xf32>
    %536 = arith.addf %534, %535 : vector<2x128xf32>
    %537 = vector.extract_strided_slice %504 {offsets = [0, 384], sizes = [2, 384], strides = [1, 1]} : vector<2x768xf32> to vector<2x384xf32>
    %538 = vector.extract_strided_slice %501 {offsets = [0, 128], sizes = [2, 128], strides = [1, 1]} : vector<2x256xf32> to vector<2x128xf32>
    %539 = vector.extract_strided_slice %508 {offsets = [0, 0], sizes = [2, 128], strides = [1, 1]} : vector<2x384xf32> to vector<2x128xf32>
    %540 = vector.extract_strided_slice %537 {offsets = [0, 0], sizes = [2, 128], strides = [1, 1]} : vector<2x384xf32> to vector<2x128xf32>
    %541 = arith.addf %539, %540 : vector<2x128xf32>
    %542 = arith.negf %541 : vector<2x128xf32>
    %543 = math.exp %542 : vector<2x128xf32>
    %cst_148 = arith.constant 1.000000e+00 : f32
    %544 = vector.broadcast %cst_148 : f32 to vector<2x128xf32>
    %545 = arith.addf %544, %543 : vector<2x128xf32>
    %546 = arith.divf %544, %545 : vector<2x128xf32>
    %547 = vector.extract_strided_slice %508 {offsets = [0, 128], sizes = [2, 128], strides = [1, 1]} : vector<2x384xf32> to vector<2x128xf32>
    %548 = vector.extract_strided_slice %537 {offsets = [0, 128], sizes = [2, 128], strides = [1, 1]} : vector<2x384xf32> to vector<2x128xf32>
    %549 = arith.addf %547, %548 : vector<2x128xf32>
    %550 = arith.negf %549 : vector<2x128xf32>
    %551 = math.exp %550 : vector<2x128xf32>
    %cst_149 = arith.constant 1.000000e+00 : f32
    %552 = vector.broadcast %cst_149 : f32 to vector<2x128xf32>
    %553 = arith.addf %552, %551 : vector<2x128xf32>
    %554 = arith.divf %552, %553 : vector<2x128xf32>
    %555 = vector.extract_strided_slice %508 {offsets = [0, 256], sizes = [2, 128], strides = [1, 1]} : vector<2x384xf32> to vector<2x128xf32>
    %556 = vector.extract_strided_slice %537 {offsets = [0, 256], sizes = [2, 128], strides = [1, 1]} : vector<2x384xf32> to vector<2x128xf32>
    %557 = arith.mulf %546, %556 : vector<2x128xf32>
    %558 = arith.addf %555, %557 : vector<2x128xf32>
    %559 = math.tanh %558 : vector<2x128xf32>
    %cst_150 = arith.constant 1.000000e+00 : f32
    %560 = vector.broadcast %cst_150 : f32 to vector<2x128xf32>
    %561 = arith.subf %560, %554 : vector<2x128xf32>
    %562 = arith.mulf %561, %559 : vector<2x128xf32>
    %563 = arith.mulf %554, %538 : vector<2x128xf32>
    %564 = arith.addf %562, %563 : vector<2x128xf32>
    %565 = vector.extract_strided_slice %536 {offsets = [0, 0], sizes = [2, 32], strides = [1, 1]} : vector<2x128xf32> to vector<2x32xf32>
    %566 = vector.shape_cast %565 : vector<2x32xf32> to vector<2x1x32xf32>
    %c0_151 = arith.constant 0 : index
    %c7_152 = arith.constant 7 : index
    %c0_153 = arith.constant 0 : index
    %567 = vector.load %arg6[%c0_151, %c7_152, %c0_153] : memref<2x8x64xf32, #tpu.memory_space<vmem>>, vector<2x1x32xf32>
    tpu.vector_store %arg6[%c0_151, %c7_152, %c0_153], %566 {strides = array<i32>} : memref<2x8x64xf32, #tpu.memory_space<vmem>>, vector<2x1x32xf32>,
    %568 = vector.extract_strided_slice %564 {offsets = [0, 0], sizes = [2, 32], strides = [1, 1]} : vector<2x128xf32> to vector<2x32xf32>
    %569 = vector.shape_cast %568 : vector<2x32xf32> to vector<2x1x32xf32>
    %c0_154 = arith.constant 0 : index
    %c0_155 = arith.constant 0 : index
    %c32_156 = arith.constant 32 : index
    %570 = vector.load %arg6[%c0_154, %c0_155, %c32_156] : memref<2x8x64xf32, #tpu.memory_space<vmem>>, vector<2x1x32xf32>
    tpu.vector_store %arg6[%c0_154, %c0_155, %c32_156], %569 {strides = array<i32>} : memref<2x8x64xf32, #tpu.memory_space<vmem>>, vector<2x1x32xf32>,
    %571 = tpu.concatenate %536, %564 in 1 : vector<2x128xf32>, vector<2x128xf32> -> vector<2x256xf32>
    %572 = vector.extract_strided_slice %571 {offsets = [0, 0], sizes = [2, 32], strides = [1, 1]} : vector<2x256xf32> to vector<2x32xf32>
    %c0_157 = arith.constant 0 : index
    %c0_158 = arith.constant 0 : index
    %c0_159 = arith.constant 0 : index
    %573 = vector.load %arg7[%c0_157, %c0_158, %c0_159] : memref<2x2x32xf32, #tpu.memory_space<vmem>>, vector<1x2x32xf32>
    %574 = vector.shape_cast %573 : vector<1x2x32xf32> to vector<2x32xf32>
    %575 = vector.shape_cast %572 : vector<2x32xf32> to vector<1x2x32xf32>
    tpu.vector_store %arg7[%c0_157, %c0_158, %c0_159], %575 {strides = array<i32>} : memref<2x2x32xf32, #tpu.memory_space<vmem>>, vector<1x2x32xf32>,
    %576 = vector.extract_strided_slice %571 {offsets = [0, 128], sizes = [2, 32], strides = [1, 1]} : vector<2x256xf32> to vector<2x32xf32>
    %c1_160 = arith.constant 1 : index
    %c0_161 = arith.constant 0 : index
    %c0_162 = arith.constant 0 : index
    %577 = vector.load %arg7[%c1_160, %c0_161, %c0_162] : memref<2x2x32xf32, #tpu.memory_space<vmem>>, vector<1x2x32xf32>
    %578 = vector.shape_cast %577 : vector<1x2x32xf32> to vector<2x32xf32>
    %579 = vector.shape_cast %576 : vector<2x32xf32> to vector<1x2x32xf32>
    tpu.vector_store %arg7[%c1_160, %c0_161, %c0_162], %579 {strides = array<i32>} : memref<2x2x32xf32, #tpu.memory_space<vmem>>, vector<1x2x32xf32>,
    return
  }
  func.func @transform_0(%arg0: i32) -> (i32, i32, i32) {
    %c0_i32 = arith.constant 0 : i32
    %c0_i32_0 = arith.constant 0 : i32
    %c0_i32_1 = arith.constant 0 : i32
    %c0_i32_2 = arith.constant 0 : i32
    return %c0_i32, %c0_i32_0, %c0_i32_1 : i32, i32, i32
  }
  func.func @transform_1(%arg0: i32) -> (i32, i32) {
    %c0_i32 = arith.constant 0 : i32
    %c0_i32_0 = arith.constant 0 : i32
    %c0_i32_1 = arith.constant 0 : i32
    return %c0_i32, %c0_i32_0 : i32, i32
  }
  func.func @transform_2(%arg0: i32) -> (i32, i32) {
    %c0_i32 = arith.constant 0 : i32
    %c0_i32_0 = arith.constant 0 : i32
    %c0_i32_1 = arith.constant 0 : i32
    return %c0_i32, %c0_i32_0 : i32, i32
  }
  func.func @transform_3(%arg0: i32) -> (i32, i32) {
    %c0_i32 = arith.constant 0 : i32
    %c0_i32_0 = arith.constant 0 : i32
    %c0_i32_1 = arith.constant 0 : i32
    return %c0_i32, %c0_i32_0 : i32, i32
  }
  func.func @transform_4(%arg0: i32) -> (i32, i32) {
    %c0_i32 = arith.constant 0 : i32
    %c0_i32_0 = arith.constant 0 : i32
    %c0_i32_1 = arith.constant 0 : i32
    return %c0_i32, %c0_i32_0 : i32, i32
  }
  func.func @transform_5(%arg0: i32) -> (i32, i32, i32) {
    %c0_i32 = arith.constant 0 : i32
    %c0_i32_0 = arith.constant 0 : i32
    %c0_i32_1 = arith.constant 0 : i32
    %c0_i32_2 = arith.constant 0 : i32
    return %c0_i32, %c0_i32_0, %c0_i32_1 : i32, i32, i32
  }
  func.func @transform_6(%arg0: i32) -> (i32, i32, i32) {
    %c0_i32 = arith.constant 0 : i32
    %c0_i32_0 = arith.constant 0 : i32
    %c0_i32_1 = arith.constant 0 : i32
    %c0_i32_2 = arith.constant 0 : i32
    return %c0_i32, %c0_i32_0, %c0_i32_1 : i32, i32, i32
  }
}

</mosaic_0001>

<llo_original>
// kernel: tpu_custom_call.1
$region0: #{tpu_custom_call.1}
  #allocation0 [shape = 'u32[]', space=smem, size = 0x4, offset = 0x4, fixed_abs, tag = 'smem constant byte address 0x4 - core index']
  #allocation1 [shape = 'u32[144,128]{1,0:T(1,128)}', space=vmem, size = 0x12000, scoped, tag = 'internal scratch']
  #allocation2 [shape = 'f32[2,8,768]{2,1,0:T(8,128)}', space=vmem, size = 0xc000, scoped, tag = 'scratch operand']
  %s0 = inlined_call_operand.hbm [shape: f32[2,8,32], index: 0, kind: input, shape index: {}]
  %s1 = inlined_call_operand.hbm [shape: f32[32,768], index: 1, kind: input, shape index: {}]
  %s2 = inlined_call_operand.hbm [shape: f32[256,768], index: 2, kind: input, shape index: {}]
  %s3 = inlined_call_operand.vmem [shape: f32[1,768], index: 3, kind: input, shape index: {}]
  %s4 = inlined_call_operand.vmem [shape: f32[1,768], index: 4, kind: input, shape index: {}]
  %s5 = inlined_call_operand.hbm [shape: f32[2,8,64], index: 5, kind: output, shape index: {0}]
  %s6 = inlined_call_operand.hbm [shape: f32[2,2,32], index: 6, kind: output, shape index: {1}]
  %7 = xla_tuple %s5, %s6
  %s8 = sld [smem:[#allocation0]]
  $region50: #{tpu_custom_call.1} parent=0
    _
  %s10 = ssub.s32 1, %s8
  %s11 = scalar_select 0, %s10, %s8
  $region1: #{tpu_custom_call.1} parent=0
    #allocation3 [shape = 'u8[8192]{0}', space=vmem, size = 0x2000, scoped, tag = 'input window, operand 0, single buffered']
    #allocation4 [shape = 's32[1]{0}', space=sflag, size = 0x4, scoped, tag = 'scoped memory for tpu_custom_call.1']
    #allocation5 [shape = 's32[1]{0}', space=sflag, size = 0x4, scoped, tag = 'scoped memory for tpu_custom_call.1']
    #allocation6 [shape = 'u8[98304]{0}', space=vmem, size = 0x18000, scoped, tag = 'input window, operand 1, single buffered']
    #allocation7 [shape = 's32[1]{0}', space=sflag, size = 0x4, scoped, tag = 'scoped memory for tpu_custom_call.1']
    #allocation8 [shape = 'u8[786432]{0}', space=vmem, size = 0xc0000, scoped, tag = 'input window, operand 2, single buffered']
    #allocation9 [shape = 'u8[8192]{0}', space=vmem, size = 0x2000, scoped, tag = 'output window, operand 0, single buffered']
    #allocation10 [shape = 'u8[2048]{0}', space=vmem, size = 0x800, scoped, tag = 'output window, operand 1, single buffered']
    #allocation11 [shape = 's32[1]{0}', space=sflag, size = 0x4, scoped, tag = 'scoped memory for tpu_custom_call.1']
    %12 = vsyncpa [#allocation4], 0
    %13 = vsyncpa [#allocation7], 0
    %14 = vsyncpa [#allocation5], 0
    %15 = vsyncpa [#allocation11], 0
    // Predicated region
    $region2: #{tpu_custom_call.1} parent=1 // pred_check
      _
    $region3: #{tpu_custom_call.1} parent=1 // pred_check_branch
      %17 = sbr.rel (0) target = $region5
    $region4: #{tpu_custom_call.1} parent=1 // pred_region
      %s19 = ssub.s32 256, 256
      %20 = vsyncadd [#allocation4], %s19
      %s21 = sshll.u32 [#allocation3], 4
      %s22 = int_to_ptr.vmem [resolvable:$true] %s21
      %27 = dma.hbm_to_vmem [thread:$0]  %s0, 256, %s22, [#allocation4], 128, 128, 8
    $region5: #{tpu_custom_call.1} parent=1 // pred_fallthru
      _
    // Predicated region
    $region6: #{tpu_custom_call.1} parent=1 // pred_check
      _
    $region7: #{tpu_custom_call.1} parent=1 // pred_check_branch
      %29 = sbr.rel (0) target = $region9
    $region8: #{tpu_custom_call.1} parent=1 // pred_region
      %s31 = ssub.s32 3072, 3072
      %32 = vsyncadd [#allocation7], %s31
      %s33 = sshll.u32 [#allocation6], 4
      %s34 = int_to_ptr.vmem [resolvable:$true] %s33
      %39 = dma.hbm_to_vmem [thread:$0]  %s1, 3072, %s34, [#allocation7], 768, 768, 48
    $region9: #{tpu_custom_call.1} parent=1 // pred_fallthru
      _
    // Predicated region
    $region10: #{tpu_custom_call.1} parent=1 // pred_check
      _
    $region11: #{tpu_custom_call.1} parent=1 // pred_check_branch
      %41 = sbr.rel (0) target = $region13
    $region12: #{tpu_custom_call.1} parent=1 // pred_region
      %s43 = ssub.s32 24576, 24576
      %44 = vsyncadd [#allocation7], %s43
      %s45 = sshll.u32 [#allocation8], 4
      %s46 = int_to_ptr.vmem [resolvable:$true] %s45
      %51 = dma.hbm_to_vmem [thread:$0]  %s2, 24576, %s46, [#allocation7], 768, 768, 48
    $region13: #{tpu_custom_call.1} parent=1 // pred_fallthru
      _
    // Predicated region
    $region14: #{tpu_custom_call.1} parent=1 // pred_check
      _
    $region15: #{tpu_custom_call.1} parent=1 // pred_check_branch
      %53 = sbr.rel (0) target = $region17
    $region16: #{tpu_custom_call.1} parent=1 // pred_region
      _
    $region17: #{tpu_custom_call.1} parent=1 // pred_fallthru
      _
    // Predicated region
    $region18: #{tpu_custom_call.1} parent=1 // pred_check
      _
    $region19: #{tpu_custom_call.1} parent=1 // pred_check_branch
      %55 = sbr.rel (0) target = $region21
    $region20: #{tpu_custom_call.1} parent=1 // pred_region
      _
    $region21: #{tpu_custom_call.1} parent=1 // pred_fallthru
      _
    // Predicated region
    $region22: #{tpu_custom_call.1} parent=1 // pred_check
      _
    $region23: #{tpu_custom_call.1} parent=1 // pred_check_branch
      %57 = sbr.rel (0) target = $region25
    $region24: #{tpu_custom_call.1} parent=1 // pred_region
      %58 = dma.done [#allocation4], 256
    $region25: #{tpu_custom_call.1} parent=1 // pred_fallthru
      _
    // Predicated region
    $region26: #{tpu_custom_call.1} parent=1 // pred_check
      _
    $region27: #{tpu_custom_call.1} parent=1 // pred_check_branch
      %60 = sbr.rel (0) target = $region29
    $region28: #{tpu_custom_call.1} parent=1 // pred_region
      %61 = dma.done [#allocation7], 3072
    $region29: #{tpu_custom_call.1} parent=1 // pred_fallthru
      _
    // Predicated region
    $region30: #{tpu_custom_call.1} parent=1 // pred_check
      _
    $region31: #{tpu_custom_call.1} parent=1 // pred_check_branch
      %63 = sbr.rel (0) target = $region33
    $region32: #{tpu_custom_call.1} parent=1 // pred_region
      %64 = dma.done [#allocation7], 24576
    $region33: #{tpu_custom_call.1} parent=1 // pred_fallthru
      _
    %v65 = vld [vmem:[#allocation3] sm:$0xff]
    %v66 = vld [vmem:[#allocation3 + $0x8] sm:$0xff]
    %v67 = vld [vmem:[#allocation6] sm:$0xff]
    %v68 = vld [vmem:[#allocation6 + $0x8] sm:$0xff]
    %v69 = vld [vmem:[#allocation6 + $0x10] sm:$0xff]
    %v70 = vld [vmem:[#allocation6 + $0x18] sm:$0xff]
    %v71 = vld [vmem:[#allocation6 + $0x20] sm:$0xff]
    %v72 = vld [vmem:[#allocation6 + $0x28] sm:$0xff]
    %v73 = vld [vmem:[#allocation6 + $0x30] sm:$0xff]
    %v74 = vld [vmem:[#allocation6 + $0x38] sm:$0xff]
    %v75 = vld [vmem:[#allocation6 + $0x40] sm:$0xff]
    %v76 = vld [vmem:[#allocation6 + $0x48] sm:$0xff]
    %v77 = vld [vmem:[#allocation6 + $0x50] sm:$0xff]
    %v78 = vld [vmem:[#allocation6 + $0x58] sm:$0xff]
    %v79 = vld [vmem:[#allocation6 + $0x60] sm:$0xff]
    %v80 = vld [vmem:[#allocation6 + $0x68] sm:$0xff]
    %v81 = vld [vmem:[#allocation6 + $0x70] sm:$0xff]
    %v82 = vld [vmem:[#allocation6 + $0x78] sm:$0xff]
    %v83 = vld [vmem:[#allocation6 + $0x80] sm:$0xff]
    %v84 = vld [vmem:[#allocation6 + $0x88] sm:$0xff]
    %v85 = vld [vmem:[#allocation6 + $0x90] sm:$0xff]
    %v86 = vld [vmem:[#allocation6 + $0x98] sm:$0xff]
    %v87 = vld [vmem:[#allocation6 + $0xa0] sm:$0xff]
    %v88 = vld [vmem:[#allocation6 + $0xa8] sm:$0xff]
    %v89 = vld [vmem:[#allocation6 + $0xb0] sm:$0xff]
    %v90 = vld [vmem:[#allocation6 + $0xb8] sm:$0xff]
    %v91 = vld [vmem:[%s3] sm:$0x3f]
    %v93 = vlaneseq
    %v94 = vshrl.u32 %v93, 7
    %v95 = vsub.s32 0, %v94
    %v96 = vrot.slane %v91, %v95
    %v97 = vlaneseq
    %v98 = vshrl.u32 %v97, 7
    %v99 = vsub.s32 1, %v98
    %v100 = vrot.slane %v91, %v99
    %v101 = vlaneseq
    %v102 = vshrl.u32 %v101, 7
    %v103 = vsub.s32 2, %v102
    %v104 = vrot.slane %v91, %v103
    %v105 = vlaneseq
    %v106 = vshrl.u32 %v105, 7
    %v107 = vsub.s32 3, %v106
    %v108 = vrot.slane %v91, %v107
    %v109 = vlaneseq
    %v110 = vshrl.u32 %v109, 7
    %v111 = vsub.s32 4, %v110
    %v112 = vrot.slane %v91, %v111
    %v113 = vlaneseq
    %v114 = vshrl.u32 %v113, 7
    %v115 = vsub.s32 5, %v114
    %v116 = vrot.slane %v91, %v115
    %vm123 = vcmask 261120
    %v125 = vsel %vm123, %v65, 0
    %v128 = vsel %vm123, %v66, 0
    %130 = vmatprep.subr.mxu0 %v68
    %131 = vmatpush1.msra.mxu0 %v67
    %132 = vmatprep.subr.mxu0 %v74
    %133 = vmatpush1.msra.mxu0 %v73
    %134 = vmatprep.subr.mxu0 %v80
    %135 = vmatpush1.msra.mxu0 %v79
    %136 = vmatprep.subr.mxu0 %v86
    %137 = vmatpush1.msra.mxu0 %v85
    %138 = vmatprep.subr.mxu0 0.0
    %139 = vmatpush1.msra.mxu0 0.0
    %140 = vmatprep.subr.mxu0 0.0
    %141 = vmatpush1.msra.mxu0 0.0
    %142 = vmatprep.subr.mxu0 0.0
    %143 = vmatpush1.msra.mxu0 0.0
    %144 = vmatprep.subr.mxu0 0.0
    %145 = vmatpush1.msra.mxu0 0.0
    %146 = vmatprep.subr.mxu0 0.0
    %147 = vmatpush1.msra.mxu0 0.0
    %148 = vmatprep.subr.mxu0 0.0
    %149 = vmatpush1.msra.mxu0 0.0
    %150 = vmatprep.subr.mxu0 0.0
    %151 = vmatpush1.msra.mxu0 0.0
    %152 = vmatprep.subr.mxu0 0.0
    %153 = vmatpush1.msra.mxu0 0.0
    %154 = vmatprep.subr.mxu0 0.0
    %155 = vmatpush1.msra.mxu0 0.0
    %156 = vmatprep.subr.mxu0 0.0
    %157 = vmatpush1.msra.mxu0 0.0
    %158 = vmatprep.subr.mxu0 0.0
    %159 = vmatpush1.msra.mxu0 0.0
    %160 = vmatprep.subr.mxu0 0.0
    %161 = vmatpush1.msra.mxu0 0.0
    %162 = vmatprep.subr.mxu0 0.0
    %163 = vmatpush1.msra.mxu0 0.0
    %164 = vmatprep.subr.mxu0 0.0
    %165 = vmatpush1.msra.mxu0 0.0
    %166 = vmatprep.subr.mxu0 0.0
    %167 = vmatpush1.msra.mxu0 0.0
    %168 = vmatprep.subr.mxu0 0.0
    %169 = vmatpush1.msra.mxu0 0.0
    %170 = vmatprep.subr.mxu0 0.0
    %171 = vmatpush1.msra.mxu0 0.0
    %172 = vmatprep.subr.mxu0 0.0
    %173 = vmatpush1.msra.mxu0 0.0
    %174 = vmatprep.subr.mxu0 0.0
    %175 = vmatpush1.msra.mxu0 0.0
    %176 = vmatprep.subr.mxu0 0.0
    %177 = vmatpush1.msra.mxu0 0.0
    %178 = vmatprep.subr.mxu0 0.0
    %179 = vmatpush1.msra.mxu0 0.0
    %180 = vmatprep.subr.mxu0 0.0
    %181 = vmatpush1.msra.mxu0 0.0
    %182 = vmatprep.subr.mxu0 0.0
    %183 = vmatpush1.msra.mxu0 0.0
    %184 = vmatprep.subr.mxu0 0.0
    %185 = vmatpush1.msra.mxu0 0.0
    %186 = vmatprep.subr.mxu0 0.0
    %187 = vmatpush1.msra.mxu0 0.0
    %188 = vmatprep.subr.mxu0 0.0
    %189 = vmatpush1.msra.mxu0 0.0
    %190 = vmatprep.subr.mxu0 0.0
    %191 = vmatpush1.msra.mxu0 0.0
    %192 = vmatprep.subr.mxu0 0.0
    %193 = vmatpush1.msra.mxu0 0.0
    %194 = vmatprep.mubr.f32.mxu0 0.0
    %195 = vmatmul.mubr.f32.gmra.mrb[0].mxu0 %v125
    %v196 = vpop.f32.mrb[0].mxu0
    %v197 = vadd.f32 %v96, %v196
    %v198 = vpop.f32.mrb[0].mxu0
    %v199 = vadd.f32 %v100, %v198
    %200 = vmatprep.mubr.f32.mxu0 0.0
    %201 = vmatmul.mubr.f32.gmra.mrb[0].mxu0 %v128
    %v202 = vpop.f32.mrb[0].mxu0
    %v203 = vadd.f32 %v96, %v202
    %v204 = vpop.f32.mrb[0].mxu0
    %v205 = vadd.f32 %v100, %v204
    %206 = vdwg.mxu0
    %207 = vmatprep.subr.mxu0 %v70
    %208 = vmatpush1.msra.mxu0 %v69
    %209 = vmatprep.subr.mxu0 %v76
    %210 = vmatpush1.msra.mxu0 %v75
    %211 = vmatprep.subr.mxu0 %v82
    %212 = vmatpush1.msra.mxu0 %v81
    %213 = vmatprep.subr.mxu0 %v88
    %214 = vmatpush1.msra.mxu0 %v87
    %215 = vmatprep.subr.mxu0 0.0
    %216 = vmatpush1.msra.mxu0 0.0
    %217 = vmatprep.subr.mxu0 0.0
    %218 = vmatpush1.msra.mxu0 0.0
    %219 = vmatprep.subr.mxu0 0.0
    %220 = vmatpush1.msra.mxu0 0.0
    %221 = vmatprep.subr.mxu0 0.0
    %222 = vmatpush1.msra.mxu0 0.0
    %223 = vmatprep.subr.mxu0 0.0
    %224 = vmatpush1.msra.mxu0 0.0
    %225 = vmatprep.subr.mxu0 0.0
    %226 = vmatpush1.msra.mxu0 0.0
    %227 = vmatprep.subr.mxu0 0.0
    %228 = vmatpush1.msra.mxu0 0.0
    %229 = vmatprep.subr.mxu0 0.0
    %230 = vmatpush1.msra.mxu0 0.0
    %231 = vmatprep.subr.mxu0 0.0
    %232 = vmatpush1.msra.mxu0 0.0
    %233 = vmatprep.subr.mxu0 0.0
    %234 = vmatpush1.msra.mxu0 0.0
    %235 = vmatprep.subr.mxu0 0.0
    %236 = vmatpush1.msra.mxu0 0.0
    %237 = vmatprep.subr.mxu0 0.0
    %238 = vmatpush1.msra.mxu0 0.0
    %239 = vmatprep.subr.mxu0 0.0
    %240 = vmatpush1.msra.mxu0 0.0
    %241 = vmatprep.subr.mxu0 0.0
    %242 = vmatpush1.msra.mxu0 0.0
    %243 = vmatprep.subr.mxu0 0.0
    %244 = vmatpush1.msra.mxu0 0.0
    %245 = vmatprep.subr.mxu0 0.0
    %246 = vmatpush1.msra.mxu0 0.0
    %247 = vmatprep.subr.mxu0 0.0
    %248 = vmatpush1.msra.mxu0 0.0
    %249 = vmatprep.subr.mxu0 0.0
    %250 = vmatpush1.msra.mxu0 0.0
    %251 = vmatprep.subr.mxu0 0.0
    %252 = vmatpush1.msra.mxu0 0.0
    %253 = vmatprep.subr.mxu0 0.0
    %254 = vmatpush1.msra.mxu0 0.0
    %255 = vmatprep.subr.mxu0 0.0
    %256 = vmatpush1.msra.mxu0 0.0
    %257 = vmatprep.subr.mxu0 0.0
    %258 = vmatpush1.msra.mxu0 0.0
    %259 = vmatprep.subr.mxu0 0.0
    %260 = vmatpush1.msra.mxu0 0.0
    %261 = vmatprep.subr.mxu0 0.0
    %262 = vmatpush1.msra.mxu0 0.0
    %263 = vmatprep.subr.mxu0 0.0
    %264 = vmatpush1.msra.mxu0 0.0
    %265 = vmatprep.subr.mxu0 0.0
    %266 = vmatpush1.msra.mxu0 0.0
    %267 = vmatprep.subr.mxu0 0.0
    %268 = vmatpush1.msra.mxu0 0.0
    %269 = vmatprep.subr.mxu0 0.0
    %270 = vmatpush1.msra.mxu0 0.0
    %271 = vmatprep.mubr.f32.mxu0 0.0
    %272 = vmatmul.mubr.f32.gmra.mrb[0].mxu0 %v125
    %v273 = vpop.f32.mrb[0].mxu0
    %v274 = vadd.f32 %v104, %v273
    %v275 = vpop.f32.mrb[0].mxu0
    %v276 = vadd.f32 %v108, %v275
    %277 = vmatprep.mubr.f32.mxu0 0.0
    %278 = vmatmul.mubr.f32.gmra.mrb[0].mxu0 %v128
    %v279 = vpop.f32.mrb[0].mxu0
    %v280 = vadd.f32 %v104, %v279
    %v281 = vpop.f32.mrb[0].mxu0
    %v282 = vadd.f32 %v108, %v281
    %283 = vdwg.mxu0
    %284 = vmatprep.subr.mxu0 %v72
    %285 = vmatpush1.msra.mxu0 %v71
    %286 = vmatprep.subr.mxu0 %v78
    %287 = vmatpush1.msra.mxu0 %v77
    %288 = vmatprep.subr.mxu0 %v84
    %289 = vmatpush1.msra.mxu0 %v83
    %290 = vmatprep.subr.mxu0 %v90
    %291 = vmatpush1.msra.mxu0 %v89
    %292 = vmatprep.subr.mxu0 0.0
    %293 = vmatpush1.msra.mxu0 0.0
    %294 = vmatprep.subr.mxu0 0.0
    %295 = vmatpush1.msra.mxu0 0.0
    %296 = vmatprep.subr.mxu0 0.0
    %297 = vmatpush1.msra.mxu0 0.0
    %298 = vmatprep.subr.mxu0 0.0
    %299 = vmatpush1.msra.mxu0 0.0
    %300 = vmatprep.subr.mxu0 0.0
    %301 = vmatpush1.msra.mxu0 0.0
    %302 = vmatprep.subr.mxu0 0.0
    %303 = vmatpush1.msra.mxu0 0.0
    %304 = vmatprep.subr.mxu0 0.0
    %305 = vmatpush1.msra.mxu0 0.0
    %306 = vmatprep.subr.mxu0 0.0
    %307 = vmatpush1.msra.mxu0 0.0
    %308 = vmatprep.subr.mxu0 0.0
    %309 = vmatpush1.msra.mxu0 0.0
    %310 = vmatprep.subr.mxu0 0.0
    %311 = vmatpush1.msra.mxu0 0.0
    %312 = vmatprep.subr.mxu0 0.0
    %313 = vmatpush1.msra.mxu0 0.0
    %314 = vmatprep.subr.mxu0 0.0
    %315 = vmatpush1.msra.mxu0 0.0
    %316 = vmatprep.subr.mxu0 0.0
    %317 = vmatpush1.msra.mxu0 0.0
    %318 = vmatprep.subr.mxu0 0.0
    %319 = vmatpush1.msra.mxu0 0.0
    %320 = vmatprep.subr.mxu0 0.0
    %321 = vmatpush1.msra.mxu0 0.0
    %322 = vmatprep.subr.mxu0 0.0
    %323 = vmatpush1.msra.mxu0 0.0
    %324 = vmatprep.subr.mxu0 0.0
    %325 = vmatpush1.msra.mxu0 0.0
    %326 = vmatprep.subr.mxu0 0.0
    %327 = vmatpush1.msra.mxu0 0.0
    %328 = vmatprep.subr.mxu0 0.0
    %329 = vmatpush1.msra.mxu0 0.0
    %330 = vmatprep.subr.mxu0 0.0
    %331 = vmatpush1.msra.mxu0 0.0
    %332 = vmatprep.subr.mxu0 0.0
    %333 = vmatpush1.msra.mxu0 0.0
    %334 = vmatprep.subr.mxu0 0.0
    %335 = vmatpush1.msra.mxu0 0.0
    %336 = vmatprep.subr.mxu0 0.0
    %337 = vmatpush1.msra.mxu0 0.0
    %338 = vmatprep.subr.mxu0 0.0
    %339 = vmatpush1.msra.mxu0 0.0
    %340 = vmatprep.subr.mxu0 0.0
    %341 = vmatpush1.msra.mxu0 0.0
    %342 = vmatprep.subr.mxu0 0.0
    %343 = vmatpush1.msra.mxu0 0.0
    %344 = vmatprep.subr.mxu0 0.0
    %345 = vmatpush1.msra.mxu0 0.0
    %346 = vmatprep.subr.mxu0 0.0
    %347 = vmatpush1.msra.mxu0 0.0
    %348 = vmatprep.mubr.f32.mxu0 0.0
    %349 = vmatmul.mubr.f32.gmra.mrb[0].mxu0 %v125
    %v350 = vpop.f32.mrb[0].mxu0
    %v351 = vadd.f32 %v112, %v350
    %v352 = vpop.f32.mrb[0].mxu0
    %v353 = vadd.f32 %v116, %v352
    %354 = vmatprep.mubr.f32.mxu0 0.0
    %355 = vmatmul.mubr.f32.gmra.mrb[0].mxu0 %v128
    %v356 = vpop.f32.mrb[0].mxu0
    %v357 = vadd.f32 %v112, %v356
    %v358 = vpop.f32.mrb[0].mxu0
    %v359 = vadd.f32 %v116, %v358
    %360 = vdwg.mxu0
    %361 = vst [vmem:[#allocation2] sm:$0xff] %v197
    %362 = vst [vmem:[#allocation2 + $0x8] sm:$0xff] %v199
    %363 = vst [vmem:[#allocation2 + $0x10] sm:$0xff] %v274
    %364 = vst [vmem:[#allocation2 + $0x18] sm:$0xff] %v276
    %365 = vst [vmem:[#allocation2 + $0x20] sm:$0xff] %v351
    %366 = vst [vmem:[#allocation2 + $0x28] sm:$0xff] %v353
    %367 = vst [vmem:[#allocation2 + $0x30] sm:$0xff] %v203
    %368 = vst [vmem:[#allocation2 + $0x38] sm:$0xff] %v205
    %369 = vst [vmem:[#allocation2 + $0x40] sm:$0xff] %v280
    %370 = vst [vmem:[#allocation2 + $0x48] sm:$0xff] %v282
    %371 = vst [vmem:[#allocation2 + $0x50] sm:$0xff] %v357
    %372 = vst [vmem:[#allocation2 + $0x58] sm:$0xff] %v359
    %v373 = vld [vmem:[#allocation8] sm:$0xff]
    %v374 = vld [vmem:[#allocation8 + $0x8] sm:$0xff]
    %v375 = vld [vmem:[#allocation8 + $0x10] sm:$0xff]
    %v376 = vld [vmem:[#allocation8 + $0x18] sm:$0xff]
    %v377 = vld [vmem:[#allocation8 + $0x20] sm:$0xff]
    %v378 = vld [vmem:[#allocation8 + $0x28] sm:$0xff]
    %v379 = vld [vmem:[#allocation8 + $0x30] sm:$0xff]
    %v380 = vld [vmem:[#allocation8 + $0x38] sm:$0xff]
    %v381 = vld [vmem:[#allocation8 + $0x40] sm:$0xff]
    %v382 = vld [vmem:[#allocation8 + $0x48] sm:$0xff]
    %v383 = vld [vmem:[#allocation8 + $0x50] sm:$0xff]
    %v384 = vld [vmem:[#allocation8 + $0x58] sm:$0xff]
    %v385 = vld [vmem:[#allocation8 + $0x60] sm:$0xff]
    %v386 = vld [vmem:[#allocation8 + $0x68] sm:$0xff]
    %v387 = vld [vmem:[#allocation8 + $0x70] sm:$0xff]
    %v388 = vld [vmem:[#allocation8 + $0x78] sm:$0xff]
    %v389 = vld [vmem:[#allocation8 + $0x80] sm:$0xff]
    %v390 = vld [vmem:[#allocation8 + $0x88] sm:$0xff]
    %v391 = vld [vmem:[#allocation8 + $0x90] sm:$0xff]
    %v392 = vld [vmem:[#allocation8 + $0x98] sm:$0xff]
    %v393 = vld [vmem:[#allocation8 + $0xa0] sm:$0xff]
    %v394 = vld [vmem:[#allocation8 + $0xa8] sm:$0xff]
    %v395 = vld [vmem:[#allocation8 + $0xb0] sm:$0xff]
    %v396 = vld [vmem:[#allocation8 + $0xb8] sm:$0xff]
    %v397 = vld [vmem:[#allocation8 + $0xc0] sm:$0xff]
    %v398 = vld [vmem:[#allocation8 + $0xc8] sm:$0xff]
    %v399 = vld [vmem:[#allocation8 + $0xd0] sm:$0xff]
    %v400 = vld [vmem:[#allocation8 + $0xd8] sm:$0xff]
    %v401 = vld [vmem:[#allocation8 + $0xe0] sm:$0xff]
    %v402 = vld [vmem:[#allocation8 + $0xe8] sm:$0xff]
    %v403 = vld [vmem:[#allocation8 + $0xf0] sm:$0xff]
    %v404 = vld [vmem:[#allocation8 + $0xf8] sm:$0xff]
    %v405 = vld [vmem:[#allocation8 + $0x100] sm:$0xff]
    %v406 = vld [vmem:[#allocation8 + $0x108] sm:$0xff]
    %v407 = vld [vmem:[#allocation8 + $0x110] sm:$0xff]
    %v408 = vld [vmem:[#allocation8 + $0x118] sm:$0xff]
    %v409 = vld [vmem:[#allocation8 + $0x120] sm:$0xff]
    %v410 = vld [vmem:[#allocation8 + $0x128] sm:$0xff]
    %v411 = vld [vmem:[#allocation8 + $0x130] sm:$0xff]
    %v412 = vld [vmem:[#allocation8 + $0x138] sm:$0xff]
    %v413 = vld [vmem:[#allocation8 + $0x140] sm:$0xff]
    %v414 = vld [vmem:[#allocation8 + $0x148] sm:$0xff]
    %v415 = vld [vmem:[#allocation8 + $0x150] sm:$0xff]
    %v416 = vld [vmem:[#allocation8 + $0x158] sm:$0xff]
    %v417 = vld [vmem:[#allocation8 + $0x160] sm:$0xff]
    %v418 = vld [vmem:[#allocation8 + $0x168] sm:$0xff]
    %v419 = vld [vmem:[#allocation8 + $0x170] sm:$0xff]
    %v420 = vld [vmem:[#allocation8 + $0x178] sm:$0xff]
    %v421 = vld [vmem:[#allocation8 + $0x180] sm:$0xff]
    %v422 = vld [vmem:[#allocation8 + $0x188] sm:$0xff]
    %v423 = vld [vmem:[#allocation8 + $0x190] sm:$0xff]
    %v424 = vld [vmem:[#allocation8 + $0x198] sm:$0xff]
    %v425 = vld [vmem:[#allocation8 + $0x1a0] sm:$0xff]
    %v426 = vld [vmem:[#allocation8 + $0x1a8] sm:$0xff]
    %v427 = vld [vmem:[#allocation8 + $0x1b0] sm:$0xff]
    %v428 = vld [vmem:[#allocation8 + $0x1b8] sm:$0xff]
    %v429 = vld [vmem:[#allocation8 + $0x1c0] sm:$0xff]
    %v430 = vld [vmem:[#allocation8 + $0x1c8] sm:$0xff]
    %v431 = vld [vmem:[#allocation8 + $0x1d0] sm:$0xff]
    %v432 = vld [vmem:[#allocation8 + $0x1d8] sm:$0xff]
    %v433 = vld [vmem:[#allocation8 + $0x1e0] sm:$0xff]
    %v434 = vld [vmem:[#allocation8 + $0x1e8] sm:$0xff]
    %v435 = vld [vmem:[#allocation8 + $0x1f0] sm:$0xff]
    %v436 = vld [vmem:[#allocation8 + $0x1f8] sm:$0xff]
    %v437 = vld [vmem:[#allocation8 + $0x200] sm:$0xff]
    %v438 = vld [vmem:[#allocation8 + $0x208] sm:$0xff]
    %v439 = vld [vmem:[#allocation8 + $0x210] sm:$0xff]
    %v440 = vld [vmem:[#allocation8 + $0x218] sm:$0xff]
    %v441 = vld [vmem:[#allocation8 + $0x220] sm:$0xff]
    %v442 = vld [vmem:[#allocation8 + $0x228] sm:$0xff]
    %v443 = vld [vmem:[#allocation8 + $0x230] sm:$0xff]
    %v444 = vld [vmem:[#allocation8 + $0x238] sm:$0xff]
    %v445 = vld [vmem:[#allocation8 + $0x240] sm:$0xff]
    %v446 = vld [vmem:[#allocation8 + $0x248] sm:$0xff]
    %v447 = vld [vmem:[#allocation8 + $0x250] sm:$0xff]
    %v448 = vld [vmem:[#allocation8 + $0x258] sm:$0xff]
    %v449 = vld [vmem:[#allocation8 + $0x260] sm:$0xff]
    %v450 = vld [vmem:[#allocation8 + $0x268] sm:$0xff]
    %v451 = vld [vmem:[#allocation8 + $0x270] sm:$0xff]
    %v452 = vld [vmem:[#allocation8 + $0x278] sm:$0xff]
    %v453 = vld [vmem:[#allocation8 + $0x280] sm:$0xff]
    %v454 = vld [vmem:[#allocation8 + $0x288] sm:$0xff]
    %v455 = vld [vmem:[#allocation8 + $0x290] sm:$0xff]
    %v456 = vld [vmem:[#allocation8 + $0x298] sm:$0xff]
    %v457 = vld [vmem:[#allocation8 + $0x2a0] sm:$0xff]
    %v458 = vld [vmem:[#allocation8 + $0x2a8] sm:$0xff]
    %v459 = vld [vmem:[#allocation8 + $0x2b0] sm:$0xff]
    %v460 = vld [vmem:[#allocation8 + $0x2b8] sm:$0xff]
    %v461 = vld [vmem:[#allocation8 + $0x2c0] sm:$0xff]
    %v462 = vld [vmem:[#allocation8 + $0x2c8] sm:$0xff]
    %v463 = vld [vmem:[#allocation8 + $0x2d0] sm:$0xff]
    %v464 = vld [vmem:[#allocation8 + $0x2d8] sm:$0xff]
    %v465 = vld [vmem:[#allocation8 + $0x2e0] sm:$0xff]
    %v466 = vld [vmem:[#allocation8 + $0x2e8] sm:$0xff]
    %v467 = vld [vmem:[#allocation8 + $0x2f0] sm:$0xff]
    %v468 = vld [vmem:[#allocation8 + $0x2f8] sm:$0xff]
    %v469 = vld [vmem:[#allocation8 + $0x300] sm:$0xff]
    %v470 = vld [vmem:[#allocation8 + $0x308] sm:$0xff]
    %v471 = vld [vmem:[#allocation8 + $0x310] sm:$0xff]
    %v472 = vld [vmem:[#allocation8 + $0x318] sm:$0xff]
    %v473 = vld [vmem:[#allocation8 + $0x320] sm:$0xff]
    %v474 = vld [vmem:[#allocation8 + $0x328] sm:$0xff]
    %v475 = vld [vmem:[#allocation8 + $0x330] sm:$0xff]
    %v476 = vld [vmem:[#allocation8 + $0x338] sm:$0xff]
    %v477 = vld [vmem:[#allocation8 + $0x340] sm:$0xff]
    %v478 = vld [vmem:[#allocation8 + $0x348] sm:$0xff]
    %v479 = vld [vmem:[#allocation8 + $0x350] sm:$0xff]
    %v480 = vld [vmem:[#allocation8 + $0x358] sm:$0xff]
    %v481 = vld [vmem:[#allocation8 + $0x360] sm:$0xff]
    %v482 = vld [vmem:[#allocation8 + $0x368] sm:$0xff]
    %v483 = vld [vmem:[#allocation8 + $0x370] sm:$0xff]
    %v484 = vld [vmem:[#allocation8 + $0x378] sm:$0xff]
    %v485 = vld [vmem:[#allocation8 + $0x380] sm:$0xff]
    %v486 = vld [vmem:[#allocation8 + $0x388] sm:$0xff]
    %v487 = vld [vmem:[#allocation8 + $0x390] sm:$0xff]
    %v488 = vld [vmem:[#allocation8 + $0x398] sm:$0xff]
    %v489 = vld [vmem:[#allocation8 + $0x3a0] sm:$0xff]
    %v490 = vld [vmem:[#allocation8 + $0x3a8] sm:$0xff]
    %v491 = vld [vmem:[#allocation8 + $0x3b0] sm:$0xff]
    %v492 = vld [vmem:[#allocation8 + $0x3b8] sm:$0xff]
    %v493 = vld [vmem:[#allocation8 + $0x3c0] sm:$0xff]
    %v494 = vld [vmem:[#allocation8 + $0x3c8] sm:$0xff]
    %v495 = vld [vmem:[#allocation8 + $0x3d0] sm:$0xff]
    %v496 = vld [vmem:[#allocation8 + $0x3d8] sm:$0xff]
    %v497 = vld [vmem:[#allocation8 + $0x3e0] sm:$0xff]
    %v498 = vld [vmem:[#allocation8 + $0x3e8] sm:$0xff]
    %v499 = vld [vmem:[#allocation8 + $0x3f0] sm:$0xff]
    %v500 = vld [vmem:[#allocation8 + $0x3f8] sm:$0xff]
    %v501 = vld [vmem:[#allocation8 + $0x400] sm:$0xff]
    %v502 = vld [vmem:[#allocation8 + $0x408] sm:$0xff]
    %v503 = vld [vmem:[#allocation8 + $0x410] sm:$0xff]
    %v504 = vld [vmem:[#allocation8 + $0x418] sm:$0xff]
    %v505 = vld [vmem:[#allocation8 + $0x420] sm:$0xff]
    %v506 = vld [vmem:[#allocation8 + $0x428] sm:$0xff]
    %v507 = vld [vmem:[#allocation8 + $0x430] sm:$0xff]
    %v508 = vld [vmem:[#allocation8 + $0x438] sm:$0xff]
    %v509 = vld [vmem:[#allocation8 + $0x440] sm:$0xff]
    %v510 = vld [vmem:[#allocation8 + $0x448] sm:$0xff]
    %v511 = vld [vmem:[#allocation8 + $0x450] sm:$0xff]
    %v512 = vld [vmem:[#allocation8 + $0x458] sm:$0xff]
    %v513 = vld [vmem:[#allocation8 + $0x460] sm:$0xff]
    %v514 = vld [vmem:[#allocation8 + $0x468] sm:$0xff]
    %v515 = vld [vmem:[#allocation8 + $0x470] sm:$0xff]
    %v516 = vld [vmem:[#allocation8 + $0x478] sm:$0xff]
    %v517 = vld [vmem:[#allocation8 + $0x480] sm:$0xff]
    %v518 = vld [vmem:[#allocation8 + $0x488] sm:$0xff]
    %v519 = vld [vmem:[#allocation8 + $0x490] sm:$0xff]
    %v520 = vld [vmem:[#allocation8 + $0x498] sm:$0xff]
    %v521 = vld [vmem:[#allocation8 + $0x4a0] sm:$0xff]
    %v522 = vld [vmem:[#allocation8 + $0x4a8] sm:$0xff]
    %v523 = vld [vmem:[#allocation8 + $0x4b0] sm:$0xff]
    %v524 = vld [vmem:[#allocation8 + $0x4b8] sm:$0xff]
    %v525 = vld [vmem:[#allocation8 + $0x4c0] sm:$0xff]
    %v526 = vld [vmem:[#allocation8 + $0x4c8] sm:$0xff]
    %v527 = vld [vmem:[#allocation8 + $0x4d0] sm:$0xff]
    %v528 = vld [vmem:[#allocation8 + $0x4d8] sm:$0xff]
    %v529 = vld [vmem:[#allocation8 + $0x4e0] sm:$0xff]
    %v530 = vld [vmem:[#allocation8 + $0x4e8] sm:$0xff]
    %v531 = vld [vmem:[#allocation8 + $0x4f0] sm:$0xff]
    %v532 = vld [vmem:[#allocation8 + $0x4f8] sm:$0xff]
    %v533 = vld [vmem:[#allocation8 + $0x500] sm:$0xff]
    %v534 = vld [vmem:[#allocation8 + $0x508] sm:$0xff]
    %v535 = vld [vmem:[#allocation8 + $0x510] sm:$0xff]
    %v536 = vld [vmem:[#allocation8 + $0x518] sm:$0xff]
    %v537 = vld [vmem:[#allocation8 + $0x520] sm:$0xff]
    %v538 = vld [vmem:[#allocation8 + $0x528] sm:$0xff]
    %v539 = vld [vmem:[#allocation8 + $0x530] sm:$0xff]
    %v540 = vld [vmem:[#allocation8 + $0x538] sm:$0xff]
    %v541 = vld [vmem:[#allocation8 + $0x540] sm:$0xff]
    %v542 = vld [vmem:[#allocation8 + $0x548] sm:$0xff]
    %v543 = vld [vmem:[#allocation8 + $0x550] sm:$0xff]
    %v544 = vld [vmem:[#allocation8 + $0x558] sm:$0xff]
    %v545 = vld [vmem:[#allocation8 + $0x560] sm:$0xff]
    %v546 = vld [vmem:[#allocation8 + $0x568] sm:$0xff]
    %v547 = vld [vmem:[#allocation8 + $0x570] sm:$0xff]
    %v548 = vld [vmem:[#allocation8 + $0x578] sm:$0xff]
    %v549 = vld [vmem:[#allocation8 + $0x580] sm:$0xff]
    %v550 = vld [vmem:[#allocation8 + $0x588] sm:$0xff]
    %v551 = vld [vmem:[#allocation8 + $0x590] sm:$0xff]
    %v552 = vld [vmem:[#allocation8 + $0x598] sm:$0xff]
    %v553 = vld [vmem:[#allocation8 + $0x5a0] sm:$0xff]
    %v554 = vld [vmem:[#allocation8 + $0x5a8] sm:$0xff]
    %v555 = vld [vmem:[#allocation8 + $0x5b0] sm:$0xff]
    %v556 = vld [vmem:[#allocation8 + $0x5b8] sm:$0xff]
    %v557 = vld [vmem:[#allocation8 + $0x5c0] sm:$0xff]
    %v558 = vld [vmem:[#allocation8 + $0x5c8] sm:$0xff]
    %v559 = vld [vmem:[#allocation8 + $0x5d0] sm:$0xff]
    %v560 = vld [vmem:[#allocation8 + $0x5d8] sm:$0xff]
    %v561 = vld [vmem:[#allocation8 + $0x5e0] sm:$0xff]
    %v562 = vld [vmem:[#allocation8 + $0x5e8] sm:$0xff]
    %v563 = vld [vmem:[#allocation8 + $0x5f0] sm:$0xff]
    %v564 = vld [vmem:[#allocation8 + $0x5f8] sm:$0xff]
    %v565 = vld [vmem:[%s4] sm:$0x3f]
    %v567 = vlaneseq
    %v568 = vshrl.u32 %v567, 7
    %v569 = vsub.s32 0, %v568
    %v570 = vrot.slane %v565, %v569
    %v571 = vlaneseq
    %v572 = vshrl.u32 %v571, 7
    %v573 = vsub.s32 1, %v572
    %v574 = vrot.slane %v565, %v573
    %v575 = vlaneseq
    %v576 = vshrl.u32 %v575, 7
    %v577 = vsub.s32 2, %v576
    %v578 = vrot.slane %v565, %v577
    %v579 = vlaneseq
    %v580 = vshrl.u32 %v579, 7
    %v581 = vsub.s32 3, %v580
    %v582 = vrot.slane %v565, %v581
    %v583 = vlaneseq
    %v584 = vshrl.u32 %v583, 7
    %v585 = vsub.s32 4, %v584
    %v586 = vrot.slane %v565, %v585
    %v587 = vlaneseq
    %v588 = vshrl.u32 %v587, 7
    %v589 = vsub.s32 5, %v588
    %v590 = vrot.slane %v565, %v589
    %597 = vmatprep.subr.mxu0 %v374
    %598 = vmatpush1.msra.mxu0 %v373
    %599 = vmatprep.subr.mxu0 %v380
    %600 = vmatpush1.msra.mxu0 %v379
    %601 = vmatprep.subr.mxu0 %v386
    %602 = vmatpush1.msra.mxu0 %v385
    %603 = vmatprep.subr.mxu0 %v392
    %604 = vmatpush1.msra.mxu0 %v391
    %605 = vmatprep.subr.mxu0 %v398
    %606 = vmatpush1.msra.mxu0 %v397
    %607 = vmatprep.subr.mxu0 %v404
    %608 = vmatpush1.msra.mxu0 %v403
    %609 = vmatprep.subr.mxu0 %v410
    %610 = vmatpush1.msra.mxu0 %v409
    %611 = vmatprep.subr.mxu0 %v416
    %612 = vmatpush1.msra.mxu0 %v415
    %613 = vmatprep.subr.mxu0 %v422
    %614 = vmatpush1.msra.mxu0 %v421
    %615 = vmatprep.subr.mxu0 %v428
    %616 = vmatpush1.msra.mxu0 %v427
    %617 = vmatprep.subr.mxu0 %v434
    %618 = vmatpush1.msra.mxu0 %v433
    %619 = vmatprep.subr.mxu0 %v440
    %620 = vmatpush1.msra.mxu0 %v439
    %621 = vmatprep.subr.mxu0 %v446
    %622 = vmatpush1.msra.mxu0 %v445
    %623 = vmatprep.subr.mxu0 %v452
    %624 = vmatpush1.msra.mxu0 %v451
    %625 = vmatprep.subr.mxu0 %v458
    %626 = vmatpush1.msra.mxu0 %v457
    %627 = vmatprep.subr.mxu0 %v464
    %628 = vmatpush1.msra.mxu0 %v463
    %629 = vmatprep.subr.mxu0 %v470
    %630 = vmatpush1.msra.mxu0 %v469
    %631 = vmatprep.subr.mxu0 %v476
    %632 = vmatpush1.msra.mxu0 %v475
    %633 = vmatprep.subr.mxu0 %v482
    %634 = vmatpush1.msra.mxu0 %v481
    %635 = vmatprep.subr.mxu0 %v488
    %636 = vmatpush1.msra.mxu0 %v487
    %637 = vmatprep.subr.mxu0 %v494
    %638 = vmatpush1.msra.mxu0 %v493
    %639 = vmatprep.subr.mxu0 %v500
    %640 = vmatpush1.msra.mxu0 %v499
    %641 = vmatprep.subr.mxu0 %v506
    %642 = vmatpush1.msra.mxu0 %v505
    %643 = vmatprep.subr.mxu0 %v512
    %644 = vmatpush1.msra.mxu0 %v511
    %645 = vmatprep.subr.mxu0 %v518
    %646 = vmatpush1.msra.mxu0 %v517
    %647 = vmatprep.subr.mxu0 %v524
    %648 = vmatpush1.msra.mxu0 %v523
    %649 = vmatprep.subr.mxu0 %v530
    %650 = vmatpush1.msra.mxu0 %v529
    %651 = vmatprep.subr.mxu0 %v536
    %652 = vmatpush1.msra.mxu0 %v535
    %653 = vmatprep.subr.mxu0 %v542
    %654 = vmatpush1.msra.mxu0 %v541
    %655 = vmatprep.subr.mxu0 %v548
    %656 = vmatpush1.msra.mxu0 %v547
    %657 = vmatprep.subr.mxu0 %v554
    %658 = vmatpush1.msra.mxu0 %v553
    %659 = vmatprep.subr.mxu0 %v560
    %660 = vmatpush1.msra.mxu0 %v559
    %661 = vmatprep.mubr.f32.mxu0 0.0
    %662 = vmatmul.mubr.f32.gmra.mrb[0].mxu0 0.0
    %v663 = vpop.f32.mrb[0].mxu0
    %v664 = vadd.f32 %v570, %v663
    %v665 = vpop.f32.mrb[0].mxu0
    %v666 = vadd.f32 %v574, %v665
    %667 = vdwg.mxu0
    %668 = vmatprep.subr.mxu0 %v376
    %669 = vmatpush1.msra.mxu0 %v375
    %670 = vmatprep.subr.mxu0 %v382
    %671 = vmatpush1.msra.mxu0 %v381
    %672 = vmatprep.subr.mxu0 %v388
    %673 = vmatpush1.msra.mxu0 %v387
    %674 = vmatprep.subr.mxu0 %v394
    %675 = vmatpush1.msra.mxu0 %v393
    %676 = vmatprep.subr.mxu0 %v400
    %677 = vmatpush1.msra.mxu0 %v399
    %678 = vmatprep.subr.mxu0 %v406
    %679 = vmatpush1.msra.mxu0 %v405
    %680 = vmatprep.subr.mxu0 %v412
    %681 = vmatpush1.msra.mxu0 %v411
    %682 = vmatprep.subr.mxu0 %v418
    %683 = vmatpush1.msra.mxu0 %v417
    %684 = vmatprep.subr.mxu0 %v424
    %685 = vmatpush1.msra.mxu0 %v423
    %686 = vmatprep.subr.mxu0 %v430
    %687 = vmatpush1.msra.mxu0 %v429
    %688 = vmatprep.subr.mxu0 %v436
    %689 = vmatpush1.msra.mxu0 %v435
    %690 = vmatprep.subr.mxu0 %v442
    %691 = vmatpush1.msra.mxu0 %v441
    %692 = vmatprep.subr.mxu0 %v448
    %693 = vmatpush1.msra.mxu0 %v447
    %694 = vmatprep.subr.mxu0 %v454
    %695 = vmatpush1.msra.mxu0 %v453
    %696 = vmatprep.subr.mxu0 %v460
    %697 = vmatpush1.msra.mxu0 %v459
    %698 = vmatprep.subr.mxu0 %v466
    %699 = vmatpush1.msra.mxu0 %v465
    %700 = vmatprep.subr.mxu0 %v472
    %701 = vmatpush1.msra.mxu0 %v471
    %702 = vmatprep.subr.mxu0 %v478
    %703 = vmatpush1.msra.mxu0 %v477
    %704 = vmatprep.subr.mxu0 %v484
    %705 = vmatpush1.msra.mxu0 %v483
    %706 = vmatprep.subr.mxu0 %v490
    %707 = vmatpush1.msra.mxu0 %v489
    %708 = vmatprep.subr.mxu0 %v496
    %709 = vmatpush1.msra.mxu0 %v495
    %710 = vmatprep.subr.mxu0 %v502
    %711 = vmatpush1.msra.mxu0 %v501
    %712 = vmatprep.subr.mxu0 %v508
    %713 = vmatpush1.msra.mxu0 %v507
    %714 = vmatprep.subr.mxu0 %v514
    %715 = vmatpush1.msra.mxu0 %v513
    %716 = vmatprep.subr.mxu0 %v520
    %717 = vmatpush1.msra.mxu0 %v519
    %718 = vmatprep.subr.mxu0 %v526
    %719 = vmatpush1.msra.mxu0 %v525
    %720 = vmatprep.subr.mxu0 %v532
    %721 = vmatpush1.msra.mxu0 %v531
    %722 = vmatprep.subr.mxu0 %v538
    %723 = vmatpush1.msra.mxu0 %v537
    %724 = vmatprep.subr.mxu0 %v544
    %725 = vmatpush1.msra.mxu0 %v543
    %726 = vmatprep.subr.mxu0 %v550
    %727 = vmatpush1.msra.mxu0 %v549
    %728 = vmatprep.subr.mxu0 %v556
    %729 = vmatpush1.msra.mxu0 %v555
    %730 = vmatprep.subr.mxu0 %v562
    %731 = vmatpush1.msra.mxu0 %v561
    %732 = vmatprep.mubr.f32.mxu0 0.0
    %733 = vmatmul.mubr.f32.gmra.mrb[0].mxu0 0.0
    %v734 = vpop.f32.mrb[0].mxu0
    %v735 = vadd.f32 %v578, %v734
    %v736 = vpop.f32.mrb[0].mxu0
    %v737 = vadd.f32 %v582, %v736
    %738 = vdwg.mxu0
    %739 = vmatprep.subr.mxu0 %v378
    %740 = vmatpush1.msra.mxu0 %v377
    %741 = vmatprep.subr.mxu0 %v384
    %742 = vmatpush1.msra.mxu0 %v383
    %743 = vmatprep.subr.mxu0 %v390
    %744 = vmatpush1.msra.mxu0 %v389
    %745 = vmatprep.subr.mxu0 %v396
    %746 = vmatpush1.msra.mxu0 %v395
    %747 = vmatprep.subr.mxu0 %v402
    %748 = vmatpush1.msra.mxu0 %v401
    %749 = vmatprep.subr.mxu0 %v408
    %750 = vmatpush1.msra.mxu0 %v407
    %751 = vmatprep.subr.mxu0 %v414
    %752 = vmatpush1.msra.mxu0 %v413
    %753 = vmatprep.subr.mxu0 %v420
    %754 = vmatpush1.msra.mxu0 %v419
    %755 = vmatprep.subr.mxu0 %v426
    %756 = vmatpush1.msra.mxu0 %v425
    %757 = vmatprep.subr.mxu0 %v432
    %758 = vmatpush1.msra.mxu0 %v431
    %759 = vmatprep.subr.mxu0 %v438
    %760 = vmatpush1.msra.mxu0 %v437
    %761 = vmatprep.subr.mxu0 %v444
    %762 = vmatpush1.msra.mxu0 %v443
    %763 = vmatprep.subr.mxu0 %v450
    %764 = vmatpush1.msra.mxu0 %v449
    %765 = vmatprep.subr.mxu0 %v456
    %766 = vmatpush1.msra.mxu0 %v455
    %767 = vmatprep.subr.mxu0 %v462
    %768 = vmatpush1.msra.mxu0 %v461
    %769 = vmatprep.subr.mxu0 %v468
    %770 = vmatpush1.msra.mxu0 %v467
    %771 = vmatprep.subr.mxu0 %v474
    %772 = vmatpush1.msra.mxu0 %v473
    %773 = vmatprep.subr.mxu0 %v480
    %774 = vmatpush1.msra.mxu0 %v479
    %775 = vmatprep.subr.mxu0 %v486
    %776 = vmatpush1.msra.mxu0 %v485
    %777 = vmatprep.subr.mxu0 %v492
    %778 = vmatpush1.msra.mxu0 %v491
    %779 = vmatprep.subr.mxu0 %v498
    %780 = vmatpush1.msra.mxu0 %v497
    %781 = vmatprep.subr.mxu0 %v504
    %782 = vmatpush1.msra.mxu0 %v503
    %783 = vmatprep.subr.mxu0 %v510
    %784 = vmatpush1.msra.mxu0 %v509
    %785 = vmatprep.subr.mxu0 %v516
    %786 = vmatpush1.msra.mxu0 %v515
    %787 = vmatprep.subr.mxu0 %v522
    %788 = vmatpush1.msra.mxu0 %v521
    %789 = vmatprep.subr.mxu0 %v528
    %790 = vmatpush1.msra.mxu0 %v527
    %791 = vmatprep.subr.mxu0 %v534
    %792 = vmatpush1.msra.mxu0 %v533
    %793 = vmatprep.subr.mxu0 %v540
    %794 = vmatpush1.msra.mxu0 %v539
    %795 = vmatprep.subr.mxu0 %v546
    %796 = vmatpush1.msra.mxu0 %v545
    %797 = vmatprep.subr.mxu0 %v552
    %798 = vmatpush1.msra.mxu0 %v551
    %799 = vmatprep.subr.mxu0 %v558
    %800 = vmatpush1.msra.mxu0 %v557
    %801 = vmatprep.subr.mxu0 %v564
    %802 = vmatpush1.msra.mxu0 %v563
    %803 = vmatprep.mubr.f32.mxu0 0.0
    %804 = vmatmul.mubr.f32.gmra.mrb[0].mxu0 0.0
    %v805 = vpop.f32.mrb[0].mxu0
    %v806 = vadd.f32 %v586, %v805
    %v807 = vpop.f32.mrb[0].mxu0
    %v808 = vadd.f32 %v590, %v807
    %809 = vdwg.mxu0
    %v810 = vld [vmem:[#allocation2] ss:$8 sm:$0x7]
    %s811 = scalar_lea.vmem [#allocation2], 48
    %v812 = vld [vmem:[%s811] ss:$8 sm:$0x7]
    %s813 = scalar_lea.vmem [#allocation2], 31
    %v814 = vld [vmem:[%s813] ss:$8 sm:$0x7]
    %s815 = scalar_lea.vmem [#allocation2], 79
    %v816 = vld [vmem:[%s815] ss:$8 sm:$0x7]
    %v819 = vunpack.c.l.s4 1966171168
    %v820 = vunpack.c.0.s8 %v819
    %v821 = vlaneseq
    %v822 = vshrl.u32 %v821, 7
    %v823 = vsub.s32 %v820, %v822
    %v824 = vrot.slane %v664, %v823
    %v825 = vcombine.high %v824, %v824
    %v827 = vunpack.c.l.s4 1966171168
    %v828 = vunpack.c.0.s8 %v827
    %v829 = vlaneseq
    %v830 = vshrl.u32 %v829, 7
    %v831 = vsub.s32 %v828, %v830
    %v832 = vrot.slane %v824, %v831
    %v834 = vunpack.c.l.s4 1966171168
    %v835 = vunpack.c.0.s8 %v834
    %v836 = vlaneseq
    %v837 = vshrl.u32 %v836, 7
    %v838 = vsub.s32 %v835, %v837
    %v839 = vrot.slane %v825, %v838
    %v842 = vadd.f32 %v810, %v832
    %v843 = vadd.f32 %v812, %v839
    %v844 = vxor.u32 %v842, 2147483648
    %v845 = vxor.u32 %v843, 2147483648
    %v846 = vmul.f32 %v844, 1.442695
    %v847 = vpow.pop %v846
    %v848 = vmul.f32 %v845, 1.442695
    %v849 = vpow.pop %v848
    %v850 = vadd.f32 %v847, 1.0
    %v851 = vadd.f32 %v849, 1.0
    %v852 = vrcp.pop %v850
    %v853 = vmul.f32 1.0, %v852
    %v854 = vrcp.pop %v851
    %v855 = vmul.f32 1.0, %v854
    %v858 = vrot.slane %v810, 1
    %v859 = vrot.slane %v812, 1
    %v864 = vunpack.c.l.s4 1966171168
    %v865 = vunpack.c.0.s8 %v864
    %v866 = vlaneseq
    %v867 = vshrl.u32 %v866, 7
    %v868 = vsub.s32 %v865, %v867
    %v869 = vrot.slane %v666, %v868
    %v870 = vcombine.high %v869, %v869
    %v872 = vunpack.c.l.s4 1966171168
    %v873 = vunpack.c.0.s8 %v872
    %v874 = vlaneseq
    %v875 = vshrl.u32 %v874, 7
    %v876 = vsub.s32 %v873, %v875
    %v877 = vrot.slane %v869, %v876
    %v879 = vunpack.c.l.s4 1966171168
    %v880 = vunpack.c.0.s8 %v879
    %v881 = vlaneseq
    %v882 = vshrl.u32 %v881, 7
    %v883 = vsub.s32 %v880, %v882
    %v884 = vrot.slane %v870, %v883
    %v887 = vadd.f32 %v858, %v877
    %v888 = vadd.f32 %v859, %v884
    %v889 = vxor.u32 %v887, 2147483648
    %v890 = vxor.u32 %v888, 2147483648
    %v891 = vmul.f32 %v889, 1.442695
    %v892 = vpow.pop %v891
    %v893 = vmul.f32 %v890, 1.442695
    %v894 = vpow.pop %v893
    %v895 = vadd.f32 %v892, 1.0
    %v896 = vadd.f32 %v894, 1.0
    %v897 = vrcp.pop %v895
    %v898 = vmul.f32 1.0, %v897
    %v899 = vrcp.pop %v896
    %v900 = vmul.f32 1.0, %v899
    %v903 = vunpack.c.l.s4 1966171168
    %v904 = vunpack.c.0.s8 %v903
    %v905 = vlaneseq
    %v906 = vshrl.u32 %v905, 7
    %v907 = vsub.s32 %v904, %v906
    %v908 = vrot.slane %v735, %v907
    %v909 = vcombine.high %v908, %v908
    %v911 = vunpack.c.l.s4 1966171168
    %v912 = vunpack.c.0.s8 %v911
    %v913 = vlaneseq
    %v914 = vshrl.u32 %v913, 7
    %v915 = vsub.s32 %v912, %v914
    %v916 = vrot.slane %v908, %v915
    %v918 = vunpack.c.l.s4 1966171168
    %v919 = vunpack.c.0.s8 %v918
    %v920 = vlaneseq
    %v921 = vshrl.u32 %v920, 7
    %v922 = vsub.s32 %v919, %v921
    %v923 = vrot.slane %v909, %v922
    %v926 = vmul.f32 %v853, %v916
    %v927 = vmul.f32 %v855, %v923
    %v928 = vrot.slane %v810, 2
    %v929 = vrot.slane %v812, 2
    %v932 = vadd.f32 %v928, %v926
    %v933 = vadd.f32 %v929, %v927
    %v934 = vtanh.pop %v932
    %v935 = vtanh.pop %v933
    %v936 = vsub.f32 1.0, %v898
    %v937 = vsub.f32 1.0, %v900
    %v938 = vmul.f32 %v936, %v934
    %v939 = vmul.f32 %v937, %v935
    %v940 = vmul.f32 %v898, 0.0
    %v941 = vmul.f32 %v900, 0.0
    %v942 = vadd.f32 %v938, %v940
    %v943 = vadd.f32 %v939, %v941
    %v946 = vunpack.c.l.s4 1966171168
    %v947 = vunpack.c.0.s8 %v946
    %v948 = vlaneseq
    %v949 = vshrl.u32 %v948, 7
    %v950 = vsub.s32 %v947, %v949
    %v951 = vrot.slane %v737, %v950
    %v952 = vcombine.high %v951, %v951
    %v954 = vunpack.c.l.s4 1966171168
    %v955 = vunpack.c.0.s8 %v954
    %v956 = vlaneseq
    %v957 = vshrl.u32 %v956, 7
    %v958 = vsub.s32 %v955, %v957
    %v959 = vrot.slane %v951, %v958
    %v961 = vunpack.c.l.s4 1966171168
    %v962 = vunpack.c.0.s8 %v961
    %v963 = vlaneseq
    %v964 = vshrl.u32 %v963, 7
    %v965 = vsub.s32 %v962, %v964
    %v966 = vrot.slane %v952, %v965
    %v969 = vadd.f32 %v814, %v959
    %v970 = vadd.f32 %v816, %v966
    %v971 = vxor.u32 %v969, 2147483648
    %v972 = vxor.u32 %v970, 2147483648
    %v973 = vmul.f32 %v971, 1.442695
    %v974 = vpow.pop %v973
    %v975 = vmul.f32 %v972, 1.442695
    %v976 = vpow.pop %v975
    %v977 = vadd.f32 %v974, 1.0
    %v978 = vadd.f32 %v976, 1.0
    %v979 = vrcp.pop %v977
    %v980 = vmul.f32 1.0, %v979
    %v981 = vrcp.pop %v978
    %v982 = vmul.f32 1.0, %v981
    %v985 = vrot.slane %v814, 1
    %v986 = vrot.slane %v816, 1
    %v991 = vunpack.c.l.s4 1966171168
    %v992 = vunpack.c.0.s8 %v991
    %v993 = vlaneseq
    %v994 = vshrl.u32 %v993, 7
    %v995 = vsub.s32 %v992, %v994
    %v996 = vrot.slane %v806, %v995
    %v997 = vcombine.high %v996, %v996
    %v999 = vunpack.c.l.s4 1966171168
    %v1000 = vunpack.c.0.s8 %v999
    %v1001 = vlaneseq
    %v1002 = vshrl.u32 %v1001, 7
    %v1003 = vsub.s32 %v1000, %v1002
    %v1004 = vrot.slane %v996, %v1003
    %v1006 = vunpack.c.l.s4 1966171168
    %v1007 = vunpack.c.0.s8 %v1006
    %v1008 = vlaneseq
    %v1009 = vshrl.u32 %v1008, 7
    %v1010 = vsub.s32 %v1007, %v1009
    %v1011 = vrot.slane %v997, %v1010
    %v1014 = vadd.f32 %v985, %v1004
    %v1015 = vadd.f32 %v986, %v1011
    %v1016 = vxor.u32 %v1014, 2147483648
    %v1017 = vxor.u32 %v1015, 2147483648
    %v1018 = vmul.f32 %v1016, 1.442695
    %v1019 = vpow.pop %v1018
    %v1020 = vmul.f32 %v1017, 1.442695
    %v1021 = vpow.pop %v1020
    %v1022 = vadd.f32 %v1019, 1.0
    %v1023 = vadd.f32 %v1021, 1.0
    %v1024 = vrcp.pop %v1022
    %v1025 = vmul.f32 1.0, %v1024
    %v1026 = vrcp.pop %v1023
    %v1027 = vmul.f32 1.0, %v1026
    %v1030 = vunpack.c.l.s4 1966171168
    %v1031 = vunpack.c.0.s8 %v1030
    %v1032 = vlaneseq
    %v1033 = vshrl.u32 %v1032, 7
    %v1034 = vsub.s32 %v1031, %v1033
    %v1035 = vrot.slane %v808, %v1034
    %v1036 = vcombine.high %v1035, %v1035
    %v1038 = vunpack.c.l.s4 1966171168
    %v1039 = vunpack.c.0.s8 %v1038
    %v1040 = vlaneseq
    %v1041 = vshrl.u32 %v1040, 7
    %v1042 = vsub.s32 %v1039, %v1041
    %v1043 = vrot.slane %v1035, %v1042
    %v1045 = vunpack.c.l.s4 1966171168
    %v1046 = vunpack.c.0.s8 %v1045
    %v1047 = vlaneseq
    %v1048 = vshrl.u32 %v1047, 7
    %v1049 = vsub.s32 %v1046, %v1048
    %v1050 = vrot.slane %v1036, %v1049
    %v1053 = vmul.f32 %v980, %v1043
    %v1054 = vmul.f32 %v982, %v1050
    %v1055 = vrot.slane %v814, 2
    %v1056 = vrot.slane %v816, 2
    %v1059 = vadd.f32 %v1055, %v1053
    %v1060 = vadd.f32 %v1056, %v1054
    %v1061 = vtanh.pop %v1059
    %v1062 = vtanh.pop %v1060
    %v1063 = vsub.f32 1.0, %v1025
    %v1064 = vsub.f32 1.0, %v1027
    %v1065 = vmul.f32 %v1063, %v1061
    %v1066 = vmul.f32 %v1064, %v1062
    %v1067 = vmul.f32 %v1025, 0.0
    %v1068 = vmul.f32 %v1027, 0.0
    %v1069 = vadd.f32 %v1065, %v1067
    %v1070 = vadd.f32 %v1066, %v1068
    %vm1071 = vcmask 253952
    %1072 = vst.msk [vmem:[#allocation9] sm:$0x1] %vm1071, %v942
    %1073 = vst.msk [vmem:[#allocation9 + $0x8] sm:$0x1] %vm1071, %v943
    %v1076 = vlaneseq
    %v1077 = vshrl.u32 %v1076, 7
    %v1078 = vsub.s32 0, %v1077
    %v1079 = vrot.slane %v1069, %v1078
    %v1080 = vlaneseq
    %v1081 = vshrl.u32 %v1080, 7
    %v1082 = vsub.s32 0, %v1081
    %v1083 = vrot.slane %v1070, %v1082
    %1084 = vrot.lane.b32.xlu0 %v1079, 32
    %v1085 = vpop.permute.xlu0 %1084
    %1086 = vrot.lane.b32.xlu0 %v1083, 32
    %v1087 = vpop.permute.xlu0 %1086
    %vm1090 = vcmask 516352
    %1091 = vst.msk [vmem:[#allocation9 + $0x7] sm:$0x1] %vm1090, %v1085
    %1092 = vst.msk [vmem:[#allocation9 + $0xf] sm:$0x1] %vm1090, %v1087
    %v1095 = vcombine.low %v942, %v943
    %v1097 = vunpack.c.l.s4 1966171168
    %v1098 = vunpack.c.0.s8 %v1097
    %v1099 = vlaneseq
    %v1100 = vshrl.u32 %v1099, 7
    %v1101 = vsub.s32 %v1098, %v1100
    %v1102 = vrot.slane %v1095, %v1101
    %v1104 = vunpack.c.l.s4 1966171168
    %v1105 = vunpack.c.0.s8 %v1104
    %v1106 = vlaneseq
    %v1107 = vshrl.u32 %v1106, 7
    %v1108 = vsub.s32 %v1105, %v1107
    %v1109 = vrot.slane %v1102, %v1108
    %v1111 = vcombine.low %v1069, %v1070
    %v1113 = vunpack.c.l.s4 1966171168
    %v1114 = vunpack.c.0.s8 %v1113
    %v1115 = vlaneseq
    %v1116 = vshrl.u32 %v1115, 7
    %v1117 = vsub.s32 %v1114, %v1116
    %v1118 = vrot.slane %v1111, %v1117
    %v1120 = vunpack.c.l.s4 1966171168
    %v1121 = vunpack.c.0.s8 %v1120
    %v1122 = vlaneseq
    %v1123 = vshrl.u32 %v1122, 7
    %v1124 = vsub.s32 %v1121, %v1123
    %v1125 = vrot.slane %v1118, %v1124
    %1127 = vmatprep.subr.mxu0 %v374
    %1128 = vmatpush1.msra.mxu0 %v373
    %1129 = vmatprep.subr.mxu0 %v380
    %1130 = vmatpush1.msra.mxu0 %v379
    %1131 = vmatprep.subr.mxu0 %v386
    %1132 = vmatpush1.msra.mxu0 %v385
    %1133 = vmatprep.subr.mxu0 %v392
    %1134 = vmatpush1.msra.mxu0 %v391
    %1135 = vmatprep.subr.mxu0 %v398
    %1136 = vmatpush1.msra.mxu0 %v397
    %1137 = vmatprep.subr.mxu0 %v404
    %1138 = vmatpush1.msra.mxu0 %v403
    %1139 = vmatprep.subr.mxu0 %v410
    %1140 = vmatpush1.msra.mxu0 %v409
    %1141 = vmatprep.subr.mxu0 %v416
    %1142 = vmatpush1.msra.mxu0 %v415
    %1143 = vmatprep.subr.mxu0 %v422
    %1144 = vmatpush1.msra.mxu0 %v421
    %1145 = vmatprep.subr.mxu0 %v428
    %1146 = vmatpush1.msra.mxu0 %v427
    %1147 = vmatprep.subr.mxu0 %v434
    %1148 = vmatpush1.msra.mxu0 %v433
    %1149 = vmatprep.subr.mxu0 %v440
    %1150 = vmatpush1.msra.mxu0 %v439
    %1151 = vmatprep.subr.mxu0 %v446
    %1152 = vmatpush1.msra.mxu0 %v445
    %1153 = vmatprep.subr.mxu0 %v452
    %1154 = vmatpush1.msra.mxu0 %v451
    %1155 = vmatprep.subr.mxu0 %v458
    %1156 = vmatpush1.msra.mxu0 %v457
    %1157 = vmatprep.subr.mxu0 %v464
    %1158 = vmatpush1.msra.mxu0 %v463
    %1159 = vmatprep.subr.mxu0 %v470
    %1160 = vmatpush1.msra.mxu0 %v469
    %1161 = vmatprep.subr.mxu0 %v476
    %1162 = vmatpush1.msra.mxu0 %v475
    %1163 = vmatprep.subr.mxu0 %v482
    %1164 = vmatpush1.msra.mxu0 %v481
    %1165 = vmatprep.subr.mxu0 %v488
    %1166 = vmatpush1.msra.mxu0 %v487
    %1167 = vmatprep.subr.mxu0 %v494
    %1168 = vmatpush1.msra.mxu0 %v493
    %1169 = vmatprep.subr.mxu0 %v500
    %1170 = vmatpush1.msra.mxu0 %v499
    %1171 = vmatprep.subr.mxu0 %v506
    %1172 = vmatpush1.msra.mxu0 %v505
    %1173 = vmatprep.subr.mxu0 %v512
    %1174 = vmatpush1.msra.mxu0 %v511
    %1175 = vmatprep.subr.mxu0 %v518
    %1176 = vmatpush1.msra.mxu0 %v517
    %1177 = vmatprep.subr.mxu0 %v524
    %1178 = vmatpush1.msra.mxu0 %v523
    %1179 = vmatprep.subr.mxu0 %v530
    %1180 = vmatpush1.msra.mxu0 %v529
    %1181 = vmatprep.subr.mxu0 %v536
    %1182 = vmatpush1.msra.mxu0 %v535
    %1183 = vmatprep.subr.mxu0 %v542
    %1184 = vmatpush1.msra.mxu0 %v541
    %1185 = vmatprep.subr.mxu0 %v548
    %1186 = vmatpush1.msra.mxu0 %v547
    %1187 = vmatprep.subr.mxu0 %v554
    %1188 = vmatpush1.msra.mxu0 %v553
    %1189 = vmatprep.subr.mxu0 %v560
    %1190 = vmatpush1.msra.mxu0 %v559
    %1191 = vmatprep.mubr.f32.mxu0 %v1125
    %1192 = vmatmul.mubr.f32.gmra.mrb[0].mxu0 %v1109
    %v1193 = vpop.f32.mrb[0].mxu0
    %v1194 = vadd.f32 %v570, %v1193
    %v1195 = vpop.f32.mrb[0].mxu0
    %v1196 = vadd.f32 %v574, %v1195
    %1197 = vdwg.mxu0
    %1198 = vmatprep.subr.mxu0 %v376
    %1199 = vmatpush1.msra.mxu0 %v375
    %1200 = vmatprep.subr.mxu0 %v382
    %1201 = vmatpush1.msra.mxu0 %v381
    %1202 = vmatprep.subr.mxu0 %v388
    %1203 = vmatpush1.msra.mxu0 %v387
    %1204 = vmatprep.subr.mxu0 %v394
    %1205 = vmatpush1.msra.mxu0 %v393
    %1206 = vmatprep.subr.mxu0 %v400
    %1207 = vmatpush1.msra.mxu0 %v399
    %1208 = vmatprep.subr.mxu0 %v406
    %1209 = vmatpush1.msra.mxu0 %v405
    %1210 = vmatprep.subr.mxu0 %v412
    %1211 = vmatpush1.msra.mxu0 %v411
    %1212 = vmatprep.subr.mxu0 %v418
    %1213 = vmatpush1.msra.mxu0 %v417
    %1214 = vmatprep.subr.mxu0 %v424
    %1215 = vmatpush1.msra.mxu0 %v423
    %1216 = vmatprep.subr.mxu0 %v430
    %1217 = vmatpush1.msra.mxu0 %v429
    %1218 = vmatprep.subr.mxu0 %v436
    %1219 = vmatpush1.msra.mxu0 %v435
    %1220 = vmatprep.subr.mxu0 %v442
    %1221 = vmatpush1.msra.mxu0 %v441
    %1222 = vmatprep.subr.mxu0 %v448
    %1223 = vmatpush1.msra.mxu0 %v447
    %1224 = vmatprep.subr.mxu0 %v454
    %1225 = vmatpush1.msra.mxu0 %v453
    %1226 = vmatprep.subr.mxu0 %v460
    %1227 = vmatpush1.msra.mxu0 %v459
    %1228 = vmatprep.subr.mxu0 %v466
    %1229 = vmatpush1.msra.mxu0 %v465
    %1230 = vmatprep.subr.mxu0 %v472
    %1231 = vmatpush1.msra.mxu0 %v471
    %1232 = vmatprep.subr.mxu0 %v478
    %1233 = vmatpush1.msra.mxu0 %v477
    %1234 = vmatprep.subr.mxu0 %v484
    %1235 = vmatpush1.msra.mxu0 %v483
    %1236 = vmatprep.subr.mxu0 %v490
    %1237 = vmatpush1.msra.mxu0 %v489
    %1238 = vmatprep.subr.mxu0 %v496
    %1239 = vmatpush1.msra.mxu0 %v495
    %1240 = vmatprep.subr.mxu0 %v502
    %1241 = vmatpush1.msra.mxu0 %v501
    %1242 = vmatprep.subr.mxu0 %v508
    %1243 = vmatpush1.msra.mxu0 %v507
    %1244 = vmatprep.subr.mxu0 %v514
    %1245 = vmatpush1.msra.mxu0 %v513
    %1246 = vmatprep.subr.mxu0 %v520
    %1247 = vmatpush1.msra.mxu0 %v519
    %1248 = vmatprep.subr.mxu0 %v526
    %1249 = vmatpush1.msra.mxu0 %v525
    %1250 = vmatprep.subr.mxu0 %v532
    %1251 = vmatpush1.msra.mxu0 %v531
    %1252 = vmatprep.subr.mxu0 %v538
    %1253 = vmatpush1.msra.mxu0 %v537
    %1254 = vmatprep.subr.mxu0 %v544
    %1255 = vmatpush1.msra.mxu0 %v543
    %1256 = vmatprep.subr.mxu0 %v550
    %1257 = vmatpush1.msra.mxu0 %v549
    %1258 = vmatprep.subr.mxu0 %v556
    %1259 = vmatpush1.msra.mxu0 %v555
    %1260 = vmatprep.subr.mxu0 %v562
    %1261 = vmatpush1.msra.mxu0 %v561
    %1262 = vmatprep.mubr.f32.mxu0 %v1125
    %1263 = vmatmul.mubr.f32.gmra.mrb[0].mxu0 %v1109
    %v1264 = vpop.f32.mrb[0].mxu0
    %v1265 = vadd.f32 %v578, %v1264
    %v1266 = vpop.f32.mrb[0].mxu0
    %v1267 = vadd.f32 %v582, %v1266
    %1268 = vdwg.mxu0
    %1269 = vmatprep.subr.mxu0 %v378
    %1270 = vmatpush1.msra.mxu0 %v377
    %1271 = vmatprep.subr.mxu0 %v384
    %1272 = vmatpush1.msra.mxu0 %v383
    %1273 = vmatprep.subr.mxu0 %v390
    %1274 = vmatpush1.msra.mxu0 %v389
    %1275 = vmatprep.subr.mxu0 %v396
    %1276 = vmatpush1.msra.mxu0 %v395
    %1277 = vmatprep.subr.mxu0 %v402
    %1278 = vmatpush1.msra.mxu0 %v401
    %1279 = vmatprep.subr.mxu0 %v408
    %1280 = vmatpush1.msra.mxu0 %v407
    %1281 = vmatprep.subr.mxu0 %v414
    %1282 = vmatpush1.msra.mxu0 %v413
    %1283 = vmatprep.subr.mxu0 %v420
    %1284 = vmatpush1.msra.mxu0 %v419
    %1285 = vmatprep.subr.mxu0 %v426
    %1286 = vmatpush1.msra.mxu0 %v425
    %1287 = vmatprep.subr.mxu0 %v432
    %1288 = vmatpush1.msra.mxu0 %v431
    %1289 = vmatprep.subr.mxu0 %v438
    %1290 = vmatpush1.msra.mxu0 %v437
    %1291 = vmatprep.subr.mxu0 %v444
    %1292 = vmatpush1.msra.mxu0 %v443
    %1293 = vmatprep.subr.mxu0 %v450
    %1294 = vmatpush1.msra.mxu0 %v449
    %1295 = vmatprep.subr.mxu0 %v456
    %1296 = vmatpush1.msra.mxu0 %v455
    %1297 = vmatprep.subr.mxu0 %v462
    %1298 = vmatpush1.msra.mxu0 %v461
    %1299 = vmatprep.subr.mxu0 %v468
    %1300 = vmatpush1.msra.mxu0 %v467
    %1301 = vmatprep.subr.mxu0 %v474
    %1302 = vmatpush1.msra.mxu0 %v473
    %1303 = vmatprep.subr.mxu0 %v480
    %1304 = vmatpush1.msra.mxu0 %v479
    %1305 = vmatprep.subr.mxu0 %v486
    %1306 = vmatpush1.msra.mxu0 %v485
    %1307 = vmatprep.subr.mxu0 %v492
    %1308 = vmatpush1.msra.mxu0 %v491
    %1309 = vmatprep.subr.mxu0 %v498
    %1310 = vmatpush1.msra.mxu0 %v497
    %1311 = vmatprep.subr.mxu0 %v504
    %1312 = vmatpush1.msra.mxu0 %v503
    %1313 = vmatprep.subr.mxu0 %v510
    %1314 = vmatpush1.msra.mxu0 %v509
    %1315 = vmatprep.subr.mxu0 %v516
    %1316 = vmatpush1.msra.mxu0 %v515
    %1317 = vmatprep.subr.mxu0 %v522
    %1318 = vmatpush1.msra.mxu0 %v521
    %1319 = vmatprep.subr.mxu0 %v528
    %1320 = vmatpush1.msra.mxu0 %v527
    %1321 = vmatprep.subr.mxu0 %v534
    %1322 = vmatpush1.msra.mxu0 %v533
    %1323 = vmatprep.subr.mxu0 %v540
    %1324 = vmatpush1.msra.mxu0 %v539
    %1325 = vmatprep.subr.mxu0 %v546
    %1326 = vmatpush1.msra.mxu0 %v545
    %1327 = vmatprep.subr.mxu0 %v552
    %1328 = vmatpush1.msra.mxu0 %v551
    %1329 = vmatprep.subr.mxu0 %v558
    %1330 = vmatpush1.msra.mxu0 %v557
    %1331 = vmatprep.subr.mxu0 %v564
    %1332 = vmatpush1.msra.mxu0 %v563
    %1333 = vmatprep.mubr.f32.mxu0 %v1125
    %1334 = vmatmul.mubr.f32.gmra.mrb[0].mxu0 %v1109
    %v1335 = vpop.f32.mrb[0].mxu0
    %v1336 = vadd.f32 %v586, %v1335
    %v1337 = vpop.f32.mrb[0].mxu0
    %v1338 = vadd.f32 %v590, %v1337
    %1339 = vdwg.mxu0
    %s1340 = scalar_lea.vmem [#allocation2], 1
    %v1341 = vld [vmem:[%s1340] ss:$8 sm:$0x7]
    %s1342 = scalar_lea.vmem [#allocation2], 49
    %v1343 = vld [vmem:[%s1342] ss:$8 sm:$0x7]
    %s1344 = scalar_lea.vmem [#allocation2], 30
    %v1345 = vld [vmem:[%s1344] ss:$8 sm:$0x7]
    %s1346 = scalar_lea.vmem [#allocation2], 78
    %v1347 = vld [vmem:[%s1346] ss:$8 sm:$0x7]
    %v1350 = vunpack.c.l.s4 1966171168
    %v1351 = vunpack.c.0.s8 %v1350
    %v1352 = vlaneseq
    %v1353 = vshrl.u32 %v1352, 7
    %v1354 = vsub.s32 %v1351, %v1353
    %v1355 = vrot.slane %v1194, %v1354
    %v1356 = vcombine.high %v1355, %v1355
    %v1358 = vunpack.c.l.s4 1966171168
    %v1359 = vunpack.c.0.s8 %v1358
    %v1360 = vlaneseq
    %v1361 = vshrl.u32 %v1360, 7
    %v1362 = vsub.s32 %v1359, %v1361
    %v1363 = vrot.slane %v1355, %v1362
    %v1365 = vunpack.c.l.s4 1966171168
    %v1366 = vunpack.c.0.s8 %v1365
    %v1367 = vlaneseq
    %v1368 = vshrl.u32 %v1367, 7
    %v1369 = vsub.s32 %v1366, %v1368
    %v1370 = vrot.slane %v1356, %v1369
    %v1373 = vadd.f32 %v1341, %v1363
    %v1374 = vadd.f32 %v1343, %v1370
    %v1375 = vxor.u32 %v1373, 2147483648
    %v1376 = vxor.u32 %v1374, 2147483648
    %v1377 = vmul.f32 %v1375, 1.442695
    %v1378 = vpow.pop %v1377
    %v1379 = vmul.f32 %v1376, 1.442695
    %v1380 = vpow.pop %v1379
    %v1381 = vadd.f32 %v1378, 1.0
    %v1382 = vadd.f32 %v1380, 1.0
    %v1383 = vrcp.pop %v1381
    %v1384 = vmul.f32 1.0, %v1383
    %v1385 = vrcp.pop %v1382
    %v1386 = vmul.f32 1.0, %v1385
    %v1389 = vrot.slane %v1341, 1
    %v1390 = vrot.slane %v1343, 1
    %v1395 = vunpack.c.l.s4 1966171168
    %v1396 = vunpack.c.0.s8 %v1395
    %v1397 = vlaneseq
    %v1398 = vshrl.u32 %v1397, 7
    %v1399 = vsub.s32 %v1396, %v1398
    %v1400 = vrot.slane %v1196, %v1399
    %v1401 = vcombine.high %v1400, %v1400
    %v1403 = vunpack.c.l.s4 1966171168
    %v1404 = vunpack.c.0.s8 %v1403
    %v1405 = vlaneseq
    %v1406 = vshrl.u32 %v1405, 7
    %v1407 = vsub.s32 %v1404, %v1406
    %v1408 = vrot.slane %v1400, %v1407
    %v1410 = vunpack.c.l.s4 1966171168
    %v1411 = vunpack.c.0.s8 %v1410
    %v1412 = vlaneseq
    %v1413 = vshrl.u32 %v1412, 7
    %v1414 = vsub.s32 %v1411, %v1413
    %v1415 = vrot.slane %v1401, %v1414
    %v1418 = vadd.f32 %v1389, %v1408
    %v1419 = vadd.f32 %v1390, %v1415
    %v1420 = vxor.u32 %v1418, 2147483648
    %v1421 = vxor.u32 %v1419, 2147483648
    %v1422 = vmul.f32 %v1420, 1.442695
    %v1423 = vpow.pop %v1422
    %v1424 = vmul.f32 %v1421, 1.442695
    %v1425 = vpow.pop %v1424
    %v1426 = vadd.f32 %v1423, 1.0
    %v1427 = vadd.f32 %v1425, 1.0
    %v1428 = vrcp.pop %v1426
    %v1429 = vmul.f32 1.0, %v1428
    %v1430 = vrcp.pop %v1427
    %v1431 = vmul.f32 1.0, %v1430
    %v1434 = vunpack.c.l.s4 1966171168
    %v1435 = vunpack.c.0.s8 %v1434
    %v1436 = vlaneseq
    %v1437 = vshrl.u32 %v1436, 7
    %v1438 = vsub.s32 %v1435, %v1437
    %v1439 = vrot.slane %v1265, %v1438
    %v1440 = vcombine.high %v1439, %v1439
    %v1442 = vunpack.c.l.s4 1966171168
    %v1443 = vunpack.c.0.s8 %v1442
    %v1444 = vlaneseq
    %v1445 = vshrl.u32 %v1444, 7
    %v1446 = vsub.s32 %v1443, %v1445
    %v1447 = vrot.slane %v1439, %v1446
    %v1449 = vunpack.c.l.s4 1966171168
    %v1450 = vunpack.c.0.s8 %v1449
    %v1451 = vlaneseq
    %v1452 = vshrl.u32 %v1451, 7
    %v1453 = vsub.s32 %v1450, %v1452
    %v1454 = vrot.slane %v1440, %v1453
    %v1457 = vmul.f32 %v1384, %v1447
    %v1458 = vmul.f32 %v1386, %v1454
    %v1459 = vrot.slane %v1341, 2
    %v1460 = vrot.slane %v1343, 2
    %v1463 = vadd.f32 %v1459, %v1457
    %v1464 = vadd.f32 %v1460, %v1458
    %v1465 = vtanh.pop %v1463
    %v1466 = vtanh.pop %v1464
    %v1467 = vsub.f32 1.0, %v1429
    %v1468 = vsub.f32 1.0, %v1431
    %v1469 = vmul.f32 %v1467, %v1465
    %v1470 = vmul.f32 %v1468, %v1466
    %v1472 = vunpack.c.l.s4 1966171168
    %v1473 = vunpack.c.0.s8 %v1472
    %v1474 = vlaneseq
    %v1475 = vshrl.u32 %v1474, 7
    %v1476 = vsub.s32 %v1473, %v1475
    %v1477 = vrot.slane %v1109, %v1476
    %v1478 = vcombine.high %v1477, %v1477
    %v1480 = vunpack.c.l.s4 1966171168
    %v1481 = vunpack.c.0.s8 %v1480
    %v1482 = vlaneseq
    %v1483 = vshrl.u32 %v1482, 7
    %v1484 = vsub.s32 %v1481, %v1483
    %v1485 = vrot.slane %v1477, %v1484
    %v1487 = vunpack.c.l.s4 1966171168
    %v1488 = vunpack.c.0.s8 %v1487
    %v1489 = vlaneseq
    %v1490 = vshrl.u32 %v1489, 7
    %v1491 = vsub.s32 %v1488, %v1490
    %v1492 = vrot.slane %v1478, %v1491
    %v1495 = vmul.f32 %v1429, %v1485
    %v1496 = vmul.f32 %v1431, %v1492
    %v1497 = vadd.f32 %v1469, %v1495
    %v1498 = vadd.f32 %v1470, %v1496
    %v1501 = vunpack.c.l.s4 1966171168
    %v1502 = vunpack.c.0.s8 %v1501
    %v1503 = vlaneseq
    %v1504 = vshrl.u32 %v1503, 7
    %v1505 = vsub.s32 %v1502, %v1504
    %v1506 = vrot.slane %v1267, %v1505
    %v1507 = vcombine.high %v1506, %v1506
    %v1509 = vunpack.c.l.s4 1966171168
    %v1510 = vunpack.c.0.s8 %v1509
    %v1511 = vlaneseq
    %v1512 = vshrl.u32 %v1511, 7
    %v1513 = vsub.s32 %v1510, %v1512
    %v1514 = vrot.slane %v1506, %v1513
    %v1516 = vunpack.c.l.s4 1966171168
    %v1517 = vunpack.c.0.s8 %v1516
    %v1518 = vlaneseq
    %v1519 = vshrl.u32 %v1518, 7
    %v1520 = vsub.s32 %v1517, %v1519
    %v1521 = vrot.slane %v1507, %v1520
    %v1524 = vadd.f32 %v1345, %v1514
    %v1525 = vadd.f32 %v1347, %v1521
    %v1526 = vxor.u32 %v1524, 2147483648
    %v1527 = vxor.u32 %v1525, 2147483648
    %v1528 = vmul.f32 %v1526, 1.442695
    %v1529 = vpow.pop %v1528
    %v1530 = vmul.f32 %v1527, 1.442695
    %v1531 = vpow.pop %v1530
    %v1532 = vadd.f32 %v1529, 1.0
    %v1533 = vadd.f32 %v1531, 1.0
    %v1534 = vrcp.pop %v1532
    %v1535 = vmul.f32 1.0, %v1534
    %v1536 = vrcp.pop %v1533
    %v1537 = vmul.f32 1.0, %v1536
    %v1540 = vrot.slane %v1345, 1
    %v1541 = vrot.slane %v1347, 1
    %v1546 = vunpack.c.l.s4 1966171168
    %v1547 = vunpack.c.0.s8 %v1546
    %v1548 = vlaneseq
    %v1549 = vshrl.u32 %v1548, 7
    %v1550 = vsub.s32 %v1547, %v1549
    %v1551 = vrot.slane %v1336, %v1550
    %v1552 = vcombine.high %v1551, %v1551
    %v1554 = vunpack.c.l.s4 1966171168
    %v1555 = vunpack.c.0.s8 %v1554
    %v1556 = vlaneseq
    %v1557 = vshrl.u32 %v1556, 7
    %v1558 = vsub.s32 %v1555, %v1557
    %v1559 = vrot.slane %v1551, %v1558
    %v1561 = vunpack.c.l.s4 1966171168
    %v1562 = vunpack.c.0.s8 %v1561
    %v1563 = vlaneseq
    %v1564 = vshrl.u32 %v1563, 7
    %v1565 = vsub.s32 %v1562, %v1564
    %v1566 = vrot.slane %v1552, %v1565
    %v1569 = vadd.f32 %v1540, %v1559
    %v1570 = vadd.f32 %v1541, %v1566
    %v1571 = vxor.u32 %v1569, 2147483648
    %v1572 = vxor.u32 %v1570, 2147483648
    %v1573 = vmul.f32 %v1571, 1.442695
    %v1574 = vpow.pop %v1573
    %v1575 = vmul.f32 %v1572, 1.442695
    %v1576 = vpow.pop %v1575
    %v1577 = vadd.f32 %v1574, 1.0
    %v1578 = vadd.f32 %v1576, 1.0
    %v1579 = vrcp.pop %v1577
    %v1580 = vmul.f32 1.0, %v1579
    %v1581 = vrcp.pop %v1578
    %v1582 = vmul.f32 1.0, %v1581
    %v1585 = vunpack.c.l.s4 1966171168
    %v1586 = vunpack.c.0.s8 %v1585
    %v1587 = vlaneseq
    %v1588 = vshrl.u32 %v1587, 7
    %v1589 = vsub.s32 %v1586, %v1588
    %v1590 = vrot.slane %v1338, %v1589
    %v1591 = vcombine.high %v1590, %v1590
    %v1593 = vunpack.c.l.s4 1966171168
    %v1594 = vunpack.c.0.s8 %v1593
    %v1595 = vlaneseq
    %v1596 = vshrl.u32 %v1595, 7
    %v1597 = vsub.s32 %v1594, %v1596
    %v1598 = vrot.slane %v1590, %v1597
    %v1600 = vunpack.c.l.s4 1966171168
    %v1601 = vunpack.c.0.s8 %v1600
    %v1602 = vlaneseq
    %v1603 = vshrl.u32 %v1602, 7
    %v1604 = vsub.s32 %v1601, %v1603
    %v1605 = vrot.slane %v1591, %v1604
    %v1608 = vmul.f32 %v1535, %v1598
    %v1609 = vmul.f32 %v1537, %v1605
    %v1610 = vrot.slane %v1345, 2
    %v1611 = vrot.slane %v1347, 2
    %v1614 = vadd.f32 %v1610, %v1608
    %v1615 = vadd.f32 %v1611, %v1609
    %v1616 = vtanh.pop %v1614
    %v1617 = vtanh.pop %v1615
    %v1618 = vsub.f32 1.0, %v1580
    %v1619 = vsub.f32 1.0, %v1582
    %v1620 = vmul.f32 %v1618, %v1616
    %v1621 = vmul.f32 %v1619, %v1617
    %v1623 = vunpack.c.l.s4 1966171168
    %v1624 = vunpack.c.0.s8 %v1623
    %v1625 = vlaneseq
    %v1626 = vshrl.u32 %v1625, 7
    %v1627 = vsub.s32 %v1624, %v1626
    %v1628 = vrot.slane %v1125, %v1627
    %v1629 = vcombine.high %v1628, %v1628
    %v1631 = vunpack.c.l.s4 1966171168
    %v1632 = vunpack.c.0.s8 %v1631
    %v1633 = vlaneseq
    %v1634 = vshrl.u32 %v1633, 7
    %v1635 = vsub.s32 %v1632, %v1634
    %v1636 = vrot.slane %v1628, %v1635
    %v1638 = vunpack.c.l.s4 1966171168
    %v1639 = vunpack.c.0.s8 %v1638
    %v1640 = vlaneseq
    %v1641 = vshrl.u32 %v1640, 7
    %v1642 = vsub.s32 %v1639, %v1641
    %v1643 = vrot.slane %v1629, %v1642
    %v1646 = vmul.f32 %v1580, %v1636
    %v1647 = vmul.f32 %v1582, %v1643
    %v1648 = vadd.f32 %v1620, %v1646
    %v1649 = vadd.f32 %v1621, %v1647
    %1650 = vst.msk [vmem:[#allocation9 + $0x1] sm:$0x1] %vm1071, %v1497
    %1651 = vst.msk [vmem:[#allocation9 + $0x9] sm:$0x1] %vm1071, %v1498
    %v1654 = vlaneseq
    %v1655 = vshrl.u32 %v1654, 7
    %v1656 = vsub.s32 0, %v1655
    %v1657 = vrot.slane %v1648, %v1656
    %v1658 = vlaneseq
    %v1659 = vshrl.u32 %v1658, 7
    %v1660 = vsub.s32 0, %v1659
    %v1661 = vrot.slane %v1649, %v1660
    %1662 = vrot.lane.b32.xlu0 %v1657, 32
    %v1663 = vpop.permute.xlu0 %1662
    %1664 = vrot.lane.b32.xlu0 %v1661, 32
    %v1665 = vpop.permute.xlu0 %1664
    %1668 = vst.msk [vmem:[#allocation9 + $0x6] sm:$0x1] %vm1090, %v1663
    %1669 = vst.msk [vmem:[#allocation9 + $0xe] sm:$0x1] %vm1090, %v1665
    %v1672 = vcombine.low %v1497, %v1498
    %v1674 = vunpack.c.l.s4 1966171168
    %v1675 = vunpack.c.0.s8 %v1674
    %v1676 = vlaneseq
    %v1677 = vshrl.u32 %v1676, 7
    %v1678 = vsub.s32 %v1675, %v1677
    %v1679 = vrot.slane %v1672, %v1678
    %v1681 = vunpack.c.l.s4 1966171168
    %v1682 = vunpack.c.0.s8 %v1681
    %v1683 = vlaneseq
    %v1684 = vshrl.u32 %v1683, 7
    %v1685 = vsub.s32 %v1682, %v1684
    %v1686 = vrot.slane %v1679, %v1685
    %v1688 = vcombine.low %v1648, %v1649
    %v1690 = vunpack.c.l.s4 1966171168
    %v1691 = vunpack.c.0.s8 %v1690
    %v1692 = vlaneseq
    %v1693 = vshrl.u32 %v1692, 7
    %v1694 = vsub.s32 %v1691, %v1693
    %v1695 = vrot.slane %v1688, %v1694
    %v1697 = vunpack.c.l.s4 1966171168
    %v1698 = vunpack.c.0.s8 %v1697
    %v1699 = vlaneseq
    %v1700 = vshrl.u32 %v1699, 7
    %v1701 = vsub.s32 %v1698, %v1700
    %v1702 = vrot.slane %v1695, %v1701
    %1704 = vmatprep.subr.mxu0 %v374
    %1705 = vmatpush1.msra.mxu0 %v373
    %1706 = vmatprep.subr.mxu0 %v380
    %1707 = vmatpush1.msra.mxu0 %v379
    %1708 = vmatprep.subr.mxu0 %v386
    %1709 = vmatpush1.msra.mxu0 %v385
    %1710 = vmatprep.subr.mxu0 %v392
    %1711 = vmatpush1.msra.mxu0 %v391
    %1712 = vmatprep.subr.mxu0 %v398
    %1713 = vmatpush1.msra.mxu0 %v397
    %1714 = vmatprep.subr.mxu0 %v404
    %1715 = vmatpush1.msra.mxu0 %v403
    %1716 = vmatprep.subr.mxu0 %v410
    %1717 = vmatpush1.msra.mxu0 %v409
    %1718 = vmatprep.subr.mxu0 %v416
    %1719 = vmatpush1.msra.mxu0 %v415
    %1720 = vmatprep.subr.mxu0 %v422
    %1721 = vmatpush1.msra.mxu0 %v421
    %1722 = vmatprep.subr.mxu0 %v428
    %1723 = vmatpush1.msra.mxu0 %v427
    %1724 = vmatprep.subr.mxu0 %v434
    %1725 = vmatpush1.msra.mxu0 %v433
    %1726 = vmatprep.subr.mxu0 %v440
    %1727 = vmatpush1.msra.mxu0 %v439
    %1728 = vmatprep.subr.mxu0 %v446
    %1729 = vmatpush1.msra.mxu0 %v445
    %1730 = vmatprep.subr.mxu0 %v452
    %1731 = vmatpush1.msra.mxu0 %v451
    %1732 = vmatprep.subr.mxu0 %v458
    %1733 = vmatpush1.msra.mxu0 %v457
    %1734 = vmatprep.subr.mxu0 %v464
    %1735 = vmatpush1.msra.mxu0 %v463
    %1736 = vmatprep.subr.mxu0 %v470
    %1737 = vmatpush1.msra.mxu0 %v469
    %1738 = vmatprep.subr.mxu0 %v476
    %1739 = vmatpush1.msra.mxu0 %v475
    %1740 = vmatprep.subr.mxu0 %v482
    %1741 = vmatpush1.msra.mxu0 %v481
    %1742 = vmatprep.subr.mxu0 %v488
    %1743 = vmatpush1.msra.mxu0 %v487
    %1744 = vmatprep.subr.mxu0 %v494
    %1745 = vmatpush1.msra.mxu0 %v493
    %1746 = vmatprep.subr.mxu0 %v500
    %1747 = vmatpush1.msra.mxu0 %v499
    %1748 = vmatprep.subr.mxu0 %v506
    %1749 = vmatpush1.msra.mxu0 %v505
    %1750 = vmatprep.subr.mxu0 %v512
    %1751 = vmatpush1.msra.mxu0 %v511
    %1752 = vmatprep.subr.mxu0 %v518
    %1753 = vmatpush1.msra.mxu0 %v517
    %1754 = vmatprep.subr.mxu0 %v524
    %1755 = vmatpush1.msra.mxu0 %v523
    %1756 = vmatprep.subr.mxu0 %v530
    %1757 = vmatpush1.msra.mxu0 %v529
    %1758 = vmatprep.subr.mxu0 %v536
    %1759 = vmatpush1.msra.mxu0 %v535
    %1760 = vmatprep.subr.mxu0 %v542
    %1761 = vmatpush1.msra.mxu0 %v541
    %1762 = vmatprep.subr.mxu0 %v548
    %1763 = vmatpush1.msra.mxu0 %v547
    %1764 = vmatprep.subr.mxu0 %v554
    %1765 = vmatpush1.msra.mxu0 %v553
    %1766 = vmatprep.subr.mxu0 %v560
    %1767 = vmatpush1.msra.mxu0 %v559
    %1768 = vmatprep.mubr.f32.mxu0 %v1702
    %1769 = vmatmul.mubr.f32.gmra.mrb[0].mxu0 %v1686
    %v1770 = vpop.f32.mrb[0].mxu0
    %v1771 = vadd.f32 %v570, %v1770
    %v1772 = vpop.f32.mrb[0].mxu0
    %v1773 = vadd.f32 %v574, %v1772
    %1774 = vdwg.mxu0
    %1775 = vmatprep.subr.mxu0 %v376
    %1776 = vmatpush1.msra.mxu0 %v375
    %1777 = vmatprep.subr.mxu0 %v382
    %1778 = vmatpush1.msra.mxu0 %v381
    %1779 = vmatprep.subr.mxu0 %v388
    %1780 = vmatpush1.msra.mxu0 %v387
    %1781 = vmatprep.subr.mxu0 %v394
    %1782 = vmatpush1.msra.mxu0 %v393
    %1783 = vmatprep.subr.mxu0 %v400
    %1784 = vmatpush1.msra.mxu0 %v399
    %1785 = vmatprep.subr.mxu0 %v406
    %1786 = vmatpush1.msra.mxu0 %v405
    %1787 = vmatprep.subr.mxu0 %v412
    %1788 = vmatpush1.msra.mxu0 %v411
    %1789 = vmatprep.subr.mxu0 %v418
    %1790 = vmatpush1.msra.mxu0 %v417
    %1791 = vmatprep.subr.mxu0 %v424
    %1792 = vmatpush1.msra.mxu0 %v423
    %1793 = vmatprep.subr.mxu0 %v430
    %1794 = vmatpush1.msra.mxu0 %v429
    %1795 = vmatprep.subr.mxu0 %v436
    %1796 = vmatpush1.msra.mxu0 %v435
    %1797 = vmatprep.subr.mxu0 %v442
    %1798 = vmatpush1.msra.mxu0 %v441
    %1799 = vmatprep.subr.mxu0 %v448
    %1800 = vmatpush1.msra.mxu0 %v447
    %1801 = vmatprep.subr.mxu0 %v454
    %1802 = vmatpush1.msra.mxu0 %v453
    %1803 = vmatprep.subr.mxu0 %v460
    %1804 = vmatpush1.msra.mxu0 %v459
    %1805 = vmatprep.subr.mxu0 %v466
    %1806 = vmatpush1.msra.mxu0 %v465
    %1807 = vmatprep.subr.mxu0 %v472
    %1808 = vmatpush1.msra.mxu0 %v471
    %1809 = vmatprep.subr.mxu0 %v478
    %1810 = vmatpush1.msra.mxu0 %v477
    %1811 = vmatprep.subr.mxu0 %v484
    %1812 = vmatpush1.msra.mxu0 %v483
    %1813 = vmatprep.subr.mxu0 %v490
    %1814 = vmatpush1.msra.mxu0 %v489
    %1815 = vmatprep.subr.mxu0 %v496
    %1816 = vmatpush1.msra.mxu0 %v495
    %1817 = vmatprep.subr.mxu0 %v502
    %1818 = vmatpush1.msra.mxu0 %v501
    %1819 = vmatprep.subr.mxu0 %v508
    %1820 = vmatpush1.msra.mxu0 %v507
    %1821 = vmatprep.subr.mxu0 %v514
    %1822 = vmatpush1.msra.mxu0 %v513
    %1823 = vmatprep.subr.mxu0 %v520
    %1824 = vmatpush1.msra.mxu0 %v519
    %1825 = vmatprep.subr.mxu0 %v526
    %1826 = vmatpush1.msra.mxu0 %v525
    %1827 = vmatprep.subr.mxu0 %v532
    %1828 = vmatpush1.msra.mxu0 %v531
    %1829 = vmatprep.subr.mxu0 %v538
    %1830 = vmatpush1.msra.mxu0 %v537
    %1831 = vmatprep.subr.mxu0 %v544
    %1832 = vmatpush1.msra.mxu0 %v543
    %1833 = vmatprep.subr.mxu0 %v550
    %1834 = vmatpush1.msra.mxu0 %v549
    %1835 = vmatprep.subr.mxu0 %v556
    %1836 = vmatpush1.msra.mxu0 %v555
    %1837 = vmatprep.subr.mxu0 %v562
    %1838 = vmatpush1.msra.mxu0 %v561
    %1839 = vmatprep.mubr.f32.mxu0 %v1702
    %1840 = vmatmul.mubr.f32.gmra.mrb[0].mxu0 %v1686
    %v1841 = vpop.f32.mrb[0].mxu0
    %v1842 = vadd.f32 %v578, %v1841
    %v1843 = vpop.f32.mrb[0].mxu0
    %v1844 = vadd.f32 %v582, %v1843
    %1845 = vdwg.mxu0
    %1846 = vmatprep.subr.mxu0 %v378
    %1847 = vmatpush1.msra.mxu0 %v377
    %1848 = vmatprep.subr.mxu0 %v384
    %1849 = vmatpush1.msra.mxu0 %v383
    %1850 = vmatprep.subr.mxu0 %v390
    %1851 = vmatpush1.msra.mxu0 %v389
    %1852 = vmatprep.subr.mxu0 %v396
    %1853 = vmatpush1.msra.mxu0 %v395
    %1854 = vmatprep.subr.mxu0 %v402
    %1855 = vmatpush1.msra.mxu0 %v401
    %1856 = vmatprep.subr.mxu0 %v408
    %1857 = vmatpush1.msra.mxu0 %v407
    %1858 = vmatprep.subr.mxu0 %v414
    %1859 = vmatpush1.msra.mxu0 %v413
    %1860 = vmatprep.subr.mxu0 %v420
    %1861 = vmatpush1.msra.mxu0 %v419
    %1862 = vmatprep.subr.mxu0 %v426
    %1863 = vmatpush1.msra.mxu0 %v425
    %1864 = vmatprep.subr.mxu0 %v432
    %1865 = vmatpush1.msra.mxu0 %v431
    %1866 = vmatprep.subr.mxu0 %v438
    %1867 = vmatpush1.msra.mxu0 %v437
    %1868 = vmatprep.subr.mxu0 %v444
    %1869 = vmatpush1.msra.mxu0 %v443
    %1870 = vmatprep.subr.mxu0 %v450
    %1871 = vmatpush1.msra.mxu0 %v449
    %1872 = vmatprep.subr.mxu0 %v456
    %1873 = vmatpush1.msra.mxu0 %v455
    %1874 = vmatprep.subr.mxu0 %v462
    %1875 = vmatpush1.msra.mxu0 %v461
    %1876 = vmatprep.subr.mxu0 %v468
    %1877 = vmatpush1.msra.mxu0 %v467
    %1878 = vmatprep.subr.mxu0 %v474
    %1879 = vmatpush1.msra.mxu0 %v473
    %1880 = vmatprep.subr.mxu0 %v480
    %1881 = vmatpush1.msra.mxu0 %v479
    %1882 = vmatprep.subr.mxu0 %v486
    %1883 = vmatpush1.msra.mxu0 %v485
    %1884 = vmatprep.subr.mxu0 %v492
    %1885 = vmatpush1.msra.mxu0 %v491
    %1886 = vmatprep.subr.mxu0 %v498
    %1887 = vmatpush1.msra.mxu0 %v497
    %1888 = vmatprep.subr.mxu0 %v504
    %1889 = vmatpush1.msra.mxu0 %v503
    %1890 = vmatprep.subr.mxu0 %v510
    %1891 = vmatpush1.msra.mxu0 %v509
    %1892 = vmatprep.subr.mxu0 %v516
    %1893 = vmatpush1.msra.mxu0 %v515
    %1894 = vmatprep.subr.mxu0 %v522
    %1895 = vmatpush1.msra.mxu0 %v521
    %1896 = vmatprep.subr.mxu0 %v528
    %1897 = vmatpush1.msra.mxu0 %v527
    %1898 = vmatprep.subr.mxu0 %v534
    %1899 = vmatpush1.msra.mxu0 %v533
    %1900 = vmatprep.subr.mxu0 %v540
    %1901 = vmatpush1.msra.mxu0 %v539
    %1902 = vmatprep.subr.mxu0 %v546
    %1903 = vmatpush1.msra.mxu0 %v545
    %1904 = vmatprep.subr.mxu0 %v552
    %1905 = vmatpush1.msra.mxu0 %v551
    %1906 = vmatprep.subr.mxu0 %v558
    %1907 = vmatpush1.msra.mxu0 %v557
    %1908 = vmatprep.subr.mxu0 %v564
    %1909 = vmatpush1.msra.mxu0 %v563
    %1910 = vmatprep.mubr.f32.mxu0 %v1702
    %1911 = vmatmul.mubr.f32.gmra.mrb[0].mxu0 %v1686
    %v1912 = vpop.f32.mrb[0].mxu0
    %v1913 = vadd.f32 %v586, %v1912
    %v1914 = vpop.f32.mrb[0].mxu0
    %v1915 = vadd.f32 %v590, %v1914
    %1916 = vdwg.mxu0
    %s1917 = scalar_lea.vmem [#allocation2], 2
    %v1918 = vld [vmem:[%s1917] ss:$8 sm:$0x7]
    %s1919 = scalar_lea.vmem [#allocation2], 50
    %v1920 = vld [vmem:[%s1919] ss:$8 sm:$0x7]
    %s1921 = scalar_lea.vmem [#allocation2], 29
    %v1922 = vld [vmem:[%s1921] ss:$8 sm:$0x7]
    %s1923 = scalar_lea.vmem [#allocation2], 77
    %v1924 = vld [vmem:[%s1923] ss:$8 sm:$0x7]
    %v1927 = vunpack.c.l.s4 1966171168
    %v1928 = vunpack.c.0.s8 %v1927
    %v1929 = vlaneseq
    %v1930 = vshrl.u32 %v1929, 7
    %v1931 = vsub.s32 %v1928, %v1930
    %v1932 = vrot.slane %v1771, %v1931
    %v1933 = vcombine.high %v1932, %v1932
    %v1935 = vunpack.c.l.s4 1966171168
    %v1936 = vunpack.c.0.s8 %v1935
    %v1937 = vlaneseq
    %v1938 = vshrl.u32 %v1937, 7
    %v1939 = vsub.s32 %v1936, %v1938
    %v1940 = vrot.slane %v1932, %v1939
    %v1942 = vunpack.c.l.s4 1966171168
    %v1943 = vunpack.c.0.s8 %v1942
    %v1944 = vlaneseq
    %v1945 = vshrl.u32 %v1944, 7
    %v1946 = vsub.s32 %v1943, %v1945
    %v1947 = vrot.slane %v1933, %v1946
    %v1950 = vadd.f32 %v1918, %v1940
    %v1951 = vadd.f32 %v1920, %v1947
    %v1952 = vxor.u32 %v1950, 2147483648
    %v1953 = vxor.u32 %v1951, 2147483648
    %v1954 = vmul.f32 %v1952, 1.442695
    %v1955 = vpow.pop %v1954
    %v1956 = vmul.f32 %v1953, 1.442695
    %v1957 = vpow.pop %v1956
    %v1958 = vadd.f32 %v1955, 1.0
    %v1959 = vadd.f32 %v1957, 1.0
    %v1960 = vrcp.pop %v1958
    %v1961 = vmul.f32 1.0, %v1960
    %v1962 = vrcp.pop %v1959
    %v1963 = vmul.f32 1.0, %v1962
    %v1966 = vrot.slane %v1918, 1
    %v1967 = vrot.slane %v1920, 1
    %v1972 = vunpack.c.l.s4 1966171168
    %v1973 = vunpack.c.0.s8 %v1972
    %v1974 = vlaneseq
    %v1975 = vshrl.u32 %v1974, 7
    %v1976 = vsub.s32 %v1973, %v1975
    %v1977 = vrot.slane %v1773, %v1976
    %v1978 = vcombine.high %v1977, %v1977
    %v1980 = vunpack.c.l.s4 1966171168
    %v1981 = vunpack.c.0.s8 %v1980
    %v1982 = vlaneseq
    %v1983 = vshrl.u32 %v1982, 7
    %v1984 = vsub.s32 %v1981, %v1983
    %v1985 = vrot.slane %v1977, %v1984
    %v1987 = vunpack.c.l.s4 1966171168
    %v1988 = vunpack.c.0.s8 %v1987
    %v1989 = vlaneseq
    %v1990 = vshrl.u32 %v1989, 7
    %v1991 = vsub.s32 %v1988, %v1990
    %v1992 = vrot.slane %v1978, %v1991
    %v1995 = vadd.f32 %v1966, %v1985
    %v1996 = vadd.f32 %v1967, %v1992
    %v1997 = vxor.u32 %v1995, 2147483648
    %v1998 = vxor.u32 %v1996, 2147483648
    %v1999 = vmul.f32 %v1997, 1.442695
    %v2000 = vpow.pop %v1999
    %v2001 = vmul.f32 %v1998, 1.442695
    %v2002 = vpow.pop %v2001
    %v2003 = vadd.f32 %v2000, 1.0
    %v2004 = vadd.f32 %v2002, 1.0
    %v2005 = vrcp.pop %v2003
    %v2006 = vmul.f32 1.0, %v2005
    %v2007 = vrcp.pop %v2004
    %v2008 = vmul.f32 1.0, %v2007
    %v2011 = vunpack.c.l.s4 1966171168
    %v2012 = vunpack.c.0.s8 %v2011
    %v2013 = vlaneseq
    %v2014 = vshrl.u32 %v2013, 7
    %v2015 = vsub.s32 %v2012, %v2014
    %v2016 = vrot.slane %v1842, %v2015
    %v2017 = vcombine.high %v2016, %v2016
    %v2019 = vunpack.c.l.s4 1966171168
    %v2020 = vunpack.c.0.s8 %v2019
    %v2021 = vlaneseq
    %v2022 = vshrl.u32 %v2021, 7
    %v2023 = vsub.s32 %v2020, %v2022
    %v2024 = vrot.slane %v2016, %v2023
    %v2026 = vunpack.c.l.s4 1966171168
    %v2027 = vunpack.c.0.s8 %v2026
    %v2028 = vlaneseq
    %v2029 = vshrl.u32 %v2028, 7
    %v2030 = vsub.s32 %v2027, %v2029
    %v2031 = vrot.slane %v2017, %v2030
    %v2034 = vmul.f32 %v1961, %v2024
    %v2035 = vmul.f32 %v1963, %v2031
    %v2036 = vrot.slane %v1918, 2
    %v2037 = vrot.slane %v1920, 2
    %v2040 = vadd.f32 %v2036, %v2034
    %v2041 = vadd.f32 %v2037, %v2035
    %v2042 = vtanh.pop %v2040
    %v2043 = vtanh.pop %v2041
    %v2044 = vsub.f32 1.0, %v2006
    %v2045 = vsub.f32 1.0, %v2008
    %v2046 = vmul.f32 %v2044, %v2042
    %v2047 = vmul.f32 %v2045, %v2043
    %v2049 = vunpack.c.l.s4 1966171168
    %v2050 = vunpack.c.0.s8 %v2049
    %v2051 = vlaneseq
    %v2052 = vshrl.u32 %v2051, 7
    %v2053 = vsub.s32 %v2050, %v2052
    %v2054 = vrot.slane %v1686, %v2053
    %v2055 = vcombine.high %v2054, %v2054
    %v2057 = vunpack.c.l.s4 1966171168
    %v2058 = vunpack.c.0.s8 %v2057
    %v2059 = vlaneseq
    %v2060 = vshrl.u32 %v2059, 7
    %v2061 = vsub.s32 %v2058, %v2060
    %v2062 = vrot.slane %v2054, %v2061
    %v2064 = vunpack.c.l.s4 1966171168
    %v2065 = vunpack.c.0.s8 %v2064
    %v2066 = vlaneseq
    %v2067 = vshrl.u32 %v2066, 7
    %v2068 = vsub.s32 %v2065, %v2067
    %v2069 = vrot.slane %v2055, %v2068
    %v2072 = vmul.f32 %v2006, %v2062
    %v2073 = vmul.f32 %v2008, %v2069
    %v2074 = vadd.f32 %v2046, %v2072
    %v2075 = vadd.f32 %v2047, %v2073
    %v2078 = vunpack.c.l.s4 1966171168
    %v2079 = vunpack.c.0.s8 %v2078
    %v2080 = vlaneseq
    %v2081 = vshrl.u32 %v2080, 7
    %v2082 = vsub.s32 %v2079, %v2081
    %v2083 = vrot.slane %v1844, %v2082
    %v2084 = vcombine.high %v2083, %v2083
    %v2086 = vunpack.c.l.s4 1966171168
    %v2087 = vunpack.c.0.s8 %v2086
    %v2088 = vlaneseq
    %v2089 = vshrl.u32 %v2088, 7
    %v2090 = vsub.s32 %v2087, %v2089
    %v2091 = vrot.slane %v2083, %v2090
    %v2093 = vunpack.c.l.s4 1966171168
    %v2094 = vunpack.c.0.s8 %v2093
    %v2095 = vlaneseq
    %v2096 = vshrl.u32 %v2095, 7
    %v2097 = vsub.s32 %v2094, %v2096
    %v2098 = vrot.slane %v2084, %v2097
    %v2101 = vadd.f32 %v1922, %v2091
    %v2102 = vadd.f32 %v1924, %v2098
    %v2103 = vxor.u32 %v2101, 2147483648
    %v2104 = vxor.u32 %v2102, 2147483648
    %v2105 = vmul.f32 %v2103, 1.442695
    %v2106 = vpow.pop %v2105
    %v2107 = vmul.f32 %v2104, 1.442695
    %v2108 = vpow.pop %v2107
    %v2109 = vadd.f32 %v2106, 1.0
    %v2110 = vadd.f32 %v2108, 1.0
    %v2111 = vrcp.pop %v2109
    %v2112 = vmul.f32 1.0, %v2111
    %v2113 = vrcp.pop %v2110
    %v2114 = vmul.f32 1.0, %v2113
    %v2117 = vrot.slane %v1922, 1
    %v2118 = vrot.slane %v1924, 1
    %v2123 = vunpack.c.l.s4 1966171168
    %v2124 = vunpack.c.0.s8 %v2123
    %v2125 = vlaneseq
    %v2126 = vshrl.u32 %v2125, 7
    %v2127 = vsub.s32 %v2124, %v2126
    %v2128 = vrot.slane %v1913, %v2127
    %v2129 = vcombine.high %v2128, %v2128
    %v2131 = vunpack.c.l.s4 1966171168
    %v2132 = vunpack.c.0.s8 %v2131
    %v2133 = vlaneseq
    %v2134 = vshrl.u32 %v2133, 7
    %v2135 = vsub.s32 %v2132, %v2134
    %v2136 = vrot.slane %v2128, %v2135
    %v2138 = vunpack.c.l.s4 1966171168
    %v2139 = vunpack.c.0.s8 %v2138
    %v2140 = vlaneseq
    %v2141 = vshrl.u32 %v2140, 7
    %v2142 = vsub.s32 %v2139, %v2141
    %v2143 = vrot.slane %v2129, %v2142
    %v2146 = vadd.f32 %v2117, %v2136
    %v2147 = vadd.f32 %v2118, %v2143
    %v2148 = vxor.u32 %v2146, 2147483648
    %v2149 = vxor.u32 %v2147, 2147483648
    %v2150 = vmul.f32 %v2148, 1.442695
    %v2151 = vpow.pop %v2150
    %v2152 = vmul.f32 %v2149, 1.442695
    %v2153 = vpow.pop %v2152
    %v2154 = vadd.f32 %v2151, 1.0
    %v2155 = vadd.f32 %v2153, 1.0
    %v2156 = vrcp.pop %v2154
    %v2157 = vmul.f32 1.0, %v2156
    %v2158 = vrcp.pop %v2155
    %v2159 = vmul.f32 1.0, %v2158
    %v2162 = vunpack.c.l.s4 1966171168
    %v2163 = vunpack.c.0.s8 %v2162
    %v2164 = vlaneseq
    %v2165 = vshrl.u32 %v2164, 7
    %v2166 = vsub.s32 %v2163, %v2165
    %v2167 = vrot.slane %v1915, %v2166
    %v2168 = vcombine.high %v2167, %v2167
    %v2170 = vunpack.c.l.s4 1966171168
    %v2171 = vunpack.c.0.s8 %v2170
    %v2172 = vlaneseq
    %v2173 = vshrl.u32 %v2172, 7
    %v2174 = vsub.s32 %v2171, %v2173
    %v2175 = vrot.slane %v2167, %v2174
    %v2177 = vunpack.c.l.s4 1966171168
    %v2178 = vunpack.c.0.s8 %v2177
    %v2179 = vlaneseq
    %v2180 = vshrl.u32 %v2179, 7
    %v2181 = vsub.s32 %v2178, %v2180
    %v2182 = vrot.slane %v2168, %v2181
    %v2185 = vmul.f32 %v2112, %v2175
    %v2186 = vmul.f32 %v2114, %v2182
    %v2187 = vrot.slane %v1922, 2
    %v2188 = vrot.slane %v1924, 2
    %v2191 = vadd.f32 %v2187, %v2185
    %v2192 = vadd.f32 %v2188, %v2186
    %v2193 = vtanh.pop %v2191
    %v2194 = vtanh.pop %v2192
    %v2195 = vsub.f32 1.0, %v2157
    %v2196 = vsub.f32 1.0, %v2159
    %v2197 = vmul.f32 %v2195, %v2193
    %v2198 = vmul.f32 %v2196, %v2194
    %v2200 = vunpack.c.l.s4 1966171168
    %v2201 = vunpack.c.0.s8 %v2200
    %v2202 = vlaneseq
    %v2203 = vshrl.u32 %v2202, 7
    %v2204 = vsub.s32 %v2201, %v2203
    %v2205 = vrot.slane %v1702, %v2204
    %v2206 = vcombine.high %v2205, %v2205
    %v2208 = vunpack.c.l.s4 1966171168
    %v2209 = vunpack.c.0.s8 %v2208
    %v2210 = vlaneseq
    %v2211 = vshrl.u32 %v2210, 7
    %v2212 = vsub.s32 %v2209, %v2211
    %v2213 = vrot.slane %v2205, %v2212
    %v2215 = vunpack.c.l.s4 1966171168
    %v2216 = vunpack.c.0.s8 %v2215
    %v2217 = vlaneseq
    %v2218 = vshrl.u32 %v2217, 7
    %v2219 = vsub.s32 %v2216, %v2218
    %v2220 = vrot.slane %v2206, %v2219
    %v2223 = vmul.f32 %v2157, %v2213
    %v2224 = vmul.f32 %v2159, %v2220
    %v2225 = vadd.f32 %v2197, %v2223
    %v2226 = vadd.f32 %v2198, %v2224
    %2227 = vst.msk [vmem:[#allocation9 + $0x2] sm:$0x1] %vm1071, %v2074
    %2228 = vst.msk [vmem:[#allocation9 + $0xa] sm:$0x1] %vm1071, %v2075
    %v2231 = vlaneseq
    %v2232 = vshrl.u32 %v2231, 7
    %v2233 = vsub.s32 0, %v2232
    %v2234 = vrot.slane %v2225, %v2233
    %v2235 = vlaneseq
    %v2236 = vshrl.u32 %v2235, 7
    %v2237 = vsub.s32 0, %v2236
    %v2238 = vrot.slane %v2226, %v2237
    %2239 = vrot.lane.b32.xlu0 %v2234, 32
    %v2240 = vpop.permute.xlu0 %2239
    %2241 = vrot.lane.b32.xlu0 %v2238, 32
    %v2242 = vpop.permute.xlu0 %2241
    %2245 = vst.msk [vmem:[#allocation9 + $0x5] sm:$0x1] %vm1090, %v2240
    %2246 = vst.msk [vmem:[#allocation9 + $0xd] sm:$0x1] %vm1090, %v2242
    %v2249 = vcombine.low %v2074, %v2075
    %v2251 = vunpack.c.l.s4 1966171168
    %v2252 = vunpack.c.0.s8 %v2251
    %v2253 = vlaneseq
    %v2254 = vshrl.u32 %v2253, 7
    %v2255 = vsub.s32 %v2252, %v2254
    %v2256 = vrot.slane %v2249, %v2255
    %v2258 = vunpack.c.l.s4 1966171168
    %v2259 = vunpack.c.0.s8 %v2258
    %v2260 = vlaneseq
    %v2261 = vshrl.u32 %v2260, 7
    %v2262 = vsub.s32 %v2259, %v2261
    %v2263 = vrot.slane %v2256, %v2262
    %v2265 = vcombine.low %v2225, %v2226
    %v2267 = vunpack.c.l.s4 1966171168
    %v2268 = vunpack.c.0.s8 %v2267
    %v2269 = vlaneseq
    %v2270 = vshrl.u32 %v2269, 7
    %v2271 = vsub.s32 %v2268, %v2270
    %v2272 = vrot.slane %v2265, %v2271
    %v2274 = vunpack.c.l.s4 1966171168
    %v2275 = vunpack.c.0.s8 %v2274
    %v2276 = vlaneseq
    %v2277 = vshrl.u32 %v2276, 7
    %v2278 = vsub.s32 %v2275, %v2277
    %v2279 = vrot.slane %v2272, %v2278
    %2281 = vmatprep.subr.mxu0 %v374
    %2282 = vmatpush1.msra.mxu0 %v373
    %2283 = vmatprep.subr.mxu0 %v380
    %2284 = vmatpush1.msra.mxu0 %v379
    %2285 = vmatprep.subr.mxu0 %v386
    %2286 = vmatpush1.msra.mxu0 %v385
    %2287 = vmatprep.subr.mxu0 %v392
    %2288 = vmatpush1.msra.mxu0 %v391
    %2289 = vmatprep.subr.mxu0 %v398
    %2290 = vmatpush1.msra.mxu0 %v397
    %2291 = vmatprep.subr.mxu0 %v404
    %2292 = vmatpush1.msra.mxu0 %v403
    %2293 = vmatprep.subr.mxu0 %v410
    %2294 = vmatpush1.msra.mxu0 %v409
    %2295 = vmatprep.subr.mxu0 %v416
    %2296 = vmatpush1.msra.mxu0 %v415
    %2297 = vmatprep.subr.mxu0 %v422
    %2298 = vmatpush1.msra.mxu0 %v421
    %2299 = vmatprep.subr.mxu0 %v428
    %2300 = vmatpush1.msra.mxu0 %v427
    %2301 = vmatprep.subr.mxu0 %v434
    %2302 = vmatpush1.msra.mxu0 %v433
    %2303 = vmatprep.subr.mxu0 %v440
    %2304 = vmatpush1.msra.mxu0 %v439
    %2305 = vmatprep.subr.mxu0 %v446
    %2306 = vmatpush1.msra.mxu0 %v445
    %2307 = vmatprep.subr.mxu0 %v452
    %2308 = vmatpush1.msra.mxu0 %v451
    %2309 = vmatprep.subr.mxu0 %v458
    %2310 = vmatpush1.msra.mxu0 %v457
    %2311 = vmatprep.subr.mxu0 %v464
    %2312 = vmatpush1.msra.mxu0 %v463
    %2313 = vmatprep.subr.mxu0 %v470
    %2314 = vmatpush1.msra.mxu0 %v469
    %2315 = vmatprep.subr.mxu0 %v476
    %2316 = vmatpush1.msra.mxu0 %v475
    %2317 = vmatprep.subr.mxu0 %v482
    %2318 = vmatpush1.msra.mxu0 %v481
    %2319 = vmatprep.subr.mxu0 %v488
    %2320 = vmatpush1.msra.mxu0 %v487
    %2321 = vmatprep.subr.mxu0 %v494
    %2322 = vmatpush1.msra.mxu0 %v493
    %2323 = vmatprep.subr.mxu0 %v500
    %2324 = vmatpush1.msra.mxu0 %v499
    %2325 = vmatprep.subr.mxu0 %v506
    %2326 = vmatpush1.msra.mxu0 %v505
    %2327 = vmatprep.subr.mxu0 %v512
    %2328 = vmatpush1.msra.mxu0 %v511
    %2329 = vmatprep.subr.mxu0 %v518
    %2330 = vmatpush1.msra.mxu0 %v517
    %2331 = vmatprep.subr.mxu0 %v524
    %2332 = vmatpush1.msra.mxu0 %v523
    %2333 = vmatprep.subr.mxu0 %v530
    %2334 = vmatpush1.msra.mxu0 %v529
    %2335 = vmatprep.subr.mxu0 %v536
    %2336 = vmatpush1.msra.mxu0 %v535
    %2337 = vmatprep.subr.mxu0 %v542
    %2338 = vmatpush1.msra.mxu0 %v541
    %2339 = vmatprep.subr.mxu0 %v548
    %2340 = vmatpush1.msra.mxu0 %v547
    %2341 = vmatprep.subr.mxu0 %v554
    %2342 = vmatpush1.msra.mxu0 %v553
    %2343 = vmatprep.subr.mxu0 %v560
    %2344 = vmatpush1.msra.mxu0 %v559
    %2345 = vmatprep.mubr.f32.mxu0 %v2279
    %2346 = vmatmul.mubr.f32.gmra.mrb[0].mxu0 %v2263
    %v2347 = vpop.f32.mrb[0].mxu0
    %v2348 = vadd.f32 %v570, %v2347
    %v2349 = vpop.f32.mrb[0].mxu0
    %v2350 = vadd.f32 %v574, %v2349
    %2351 = vdwg.mxu0
    %2352 = vmatprep.subr.mxu0 %v376
    %2353 = vmatpush1.msra.mxu0 %v375
    %2354 = vmatprep.subr.mxu0 %v382
    %2355 = vmatpush1.msra.mxu0 %v381
    %2356 = vmatprep.subr.mxu0 %v388
    %2357 = vmatpush1.msra.mxu0 %v387
    %2358 = vmatprep.subr.mxu0 %v394
    %2359 = vmatpush1.msra.mxu0 %v393
    %2360 = vmatprep.subr.mxu0 %v400
    %2361 = vmatpush1.msra.mxu0 %v399
    %2362 = vmatprep.subr.mxu0 %v406
    %2363 = vmatpush1.msra.mxu0 %v405
    %2364 = vmatprep.subr.mxu0 %v412
    %2365 = vmatpush1.msra.mxu0 %v411
    %2366 = vmatprep.subr.mxu0 %v418
    %2367 = vmatpush1.msra.mxu0 %v417
    %2368 = vmatprep.subr.mxu0 %v424
    %2369 = vmatpush1.msra.mxu0 %v423
    %2370 = vmatprep.subr.mxu0 %v430
    %2371 = vmatpush1.msra.mxu0 %v429
    %2372 = vmatprep.subr.mxu0 %v436
    %2373 = vmatpush1.msra.mxu0 %v435
    %2374 = vmatprep.subr.mxu0 %v442
    %2375 = vmatpush1.msra.mxu0 %v441
    %2376 = vmatprep.subr.mxu0 %v448
    %2377 = vmatpush1.msra.mxu0 %v447
    %2378 = vmatprep.subr.mxu0 %v454
    %2379 = vmatpush1.msra.mxu0 %v453
    %2380 = vmatprep.subr.mxu0 %v460
    %2381 = vmatpush1.msra.mxu0 %v459
    %2382 = vmatprep.subr.mxu0 %v466
    %2383 = vmatpush1.msra.mxu0 %v465
    %2384 = vmatprep.subr.mxu0 %v472
    %2385 = vmatpush1.msra.mxu0 %v471
    %2386 = vmatprep.subr.mxu0 %v478
    %2387 = vmatpush1.msra.mxu0 %v477
    %2388 = vmatprep.subr.mxu0 %v484
    %2389 = vmatpush1.msra.mxu0 %v483
    %2390 = vmatprep.subr.mxu0 %v490
    %2391 = vmatpush1.msra.mxu0 %v489
    %2392 = vmatprep.subr.mxu0 %v496
    %2393 = vmatpush1.msra.mxu0 %v495
    %2394 = vmatprep.subr.mxu0 %v502
    %2395 = vmatpush1.msra.mxu0 %v501
    %2396 = vmatprep.subr.mxu0 %v508
    %2397 = vmatpush1.msra.mxu0 %v507
    %2398 = vmatprep.subr.mxu0 %v514
    %2399 = vmatpush1.msra.mxu0 %v513
    %2400 = vmatprep.subr.mxu0 %v520
    %2401 = vmatpush1.msra.mxu0 %v519
    %2402 = vmatprep.subr.mxu0 %v526
    %2403 = vmatpush1.msra.mxu0 %v525
    %2404 = vmatprep.subr.mxu0 %v532
    %2405 = vmatpush1.msra.mxu0 %v531
    %2406 = vmatprep.subr.mxu0 %v538
    %2407 = vmatpush1.msra.mxu0 %v537
    %2408 = vmatprep.subr.mxu0 %v544
    %2409 = vmatpush1.msra.mxu0 %v543
    %2410 = vmatprep.subr.mxu0 %v550
    %2411 = vmatpush1.msra.mxu0 %v549
    %2412 = vmatprep.subr.mxu0 %v556
    %2413 = vmatpush1.msra.mxu0 %v555
    %2414 = vmatprep.subr.mxu0 %v562
    %2415 = vmatpush1.msra.mxu0 %v561
    %2416 = vmatprep.mubr.f32.mxu0 %v2279
    %2417 = vmatmul.mubr.f32.gmra.mrb[0].mxu0 %v2263
    %v2418 = vpop.f32.mrb[0].mxu0
    %v2419 = vadd.f32 %v578, %v2418
    %v2420 = vpop.f32.mrb[0].mxu0
    %v2421 = vadd.f32 %v582, %v2420
    %2422 = vdwg.mxu0
    %2423 = vmatprep.subr.mxu0 %v378
    %2424 = vmatpush1.msra.mxu0 %v377
    %2425 = vmatprep.subr.mxu0 %v384
    %2426 = vmatpush1.msra.mxu0 %v383
    %2427 = vmatprep.subr.mxu0 %v390
    %2428 = vmatpush1.msra.mxu0 %v389
    %2429 = vmatprep.subr.mxu0 %v396
    %2430 = vmatpush1.msra.mxu0 %v395
    %2431 = vmatprep.subr.mxu0 %v402
    %2432 = vmatpush1.msra.mxu0 %v401
    %2433 = vmatprep.subr.mxu0 %v408
    %2434 = vmatpush1.msra.mxu0 %v407
    %2435 = vmatprep.subr.mxu0 %v414
    %2436 = vmatpush1.msra.mxu0 %v413
    %2437 = vmatprep.subr.mxu0 %v420
    %2438 = vmatpush1.msra.mxu0 %v419
    %2439 = vmatprep.subr.mxu0 %v426
    %2440 = vmatpush1.msra.mxu0 %v425
    %2441 = vmatprep.subr.mxu0 %v432
    %2442 = vmatpush1.msra.mxu0 %v431
    %2443 = vmatprep.subr.mxu0 %v438
    %2444 = vmatpush1.msra.mxu0 %v437
    %2445 = vmatprep.subr.mxu0 %v444
    %2446 = vmatpush1.msra.mxu0 %v443
    %2447 = vmatprep.subr.mxu0 %v450
    %2448 = vmatpush1.msra.mxu0 %v449
    %2449 = vmatprep.subr.mxu0 %v456
    %2450 = vmatpush1.msra.mxu0 %v455
    %2451 = vmatprep.subr.mxu0 %v462
    %2452 = vmatpush1.msra.mxu0 %v461
    %2453 = vmatprep.subr.mxu0 %v468
    %2454 = vmatpush1.msra.mxu0 %v467
    %2455 = vmatprep.subr.mxu0 %v474
    %2456 = vmatpush1.msra.mxu0 %v473
    %2457 = vmatprep.subr.mxu0 %v480
    %2458 = vmatpush1.msra.mxu0 %v479
    %2459 = vmatprep.subr.mxu0 %v486
    %2460 = vmatpush1.msra.mxu0 %v485
    %2461 = vmatprep.subr.mxu0 %v492
    %2462 = vmatpush1.msra.mxu0 %v491
    %2463 = vmatprep.subr.mxu0 %v498
    %2464 = vmatpush1.msra.mxu0 %v497
    %2465 = vmatprep.subr.mxu0 %v504
    %2466 = vmatpush1.msra.mxu0 %v503
    %2467 = vmatprep.subr.mxu0 %v510
    %2468 = vmatpush1.msra.mxu0 %v509
    %2469 = vmatprep.subr.mxu0 %v516
    %2470 = vmatpush1.msra.mxu0 %v515
    %2471 = vmatprep.subr.mxu0 %v522
    %2472 = vmatpush1.msra.mxu0 %v521
    %2473 = vmatprep.subr.mxu0 %v528
    %2474 = vmatpush1.msra.mxu0 %v527
    %2475 = vmatprep.subr.mxu0 %v534
    %2476 = vmatpush1.msra.mxu0 %v533
    %2477 = vmatprep.subr.mxu0 %v540
    %2478 = vmatpush1.msra.mxu0 %v539
    %2479 = vmatprep.subr.mxu0 %v546
    %2480 = vmatpush1.msra.mxu0 %v545
    %2481 = vmatprep.subr.mxu0 %v552
    %2482 = vmatpush1.msra.mxu0 %v551
    %2483 = vmatprep.subr.mxu0 %v558
    %2484 = vmatpush1.msra.mxu0 %v557
    %2485 = vmatprep.subr.mxu0 %v564
    %2486 = vmatpush1.msra.mxu0 %v563
    %2487 = vmatprep.mubr.f32.mxu0 %v2279
    %2488 = vmatmul.mubr.f32.gmra.mrb[0].mxu0 %v2263
    %v2489 = vpop.f32.mrb[0].mxu0
    %v2490 = vadd.f32 %v586, %v2489
    %v2491 = vpop.f32.mrb[0].mxu0
    %v2492 = vadd.f32 %v590, %v2491
    %2493 = vdwg.mxu0
    %s2494 = scalar_lea.vmem [#allocation2], 3
    %v2495 = vld [vmem:[%s2494] ss:$8 sm:$0x7]
    %s2496 = scalar_lea.vmem [#allocation2], 51
    %v2497 = vld [vmem:[%s2496] ss:$8 sm:$0x7]
    %s2498 = scalar_lea.vmem [#allocation2], 28
    %v2499 = vld [vmem:[%s2498] ss:$8 sm:$0x7]
    %s2500 = scalar_lea.vmem [#allocation2], 76
    %v2501 = vld [vmem:[%s2500] ss:$8 sm:$0x7]
    %v2504 = vunpack.c.l.s4 1966171168
    %v2505 = vunpack.c.0.s8 %v2504
    %v2506 = vlaneseq
    %v2507 = vshrl.u32 %v2506, 7
    %v2508 = vsub.s32 %v2505, %v2507
    %v2509 = vrot.slane %v2348, %v2508
    %v2510 = vcombine.high %v2509, %v2509
    %v2512 = vunpack.c.l.s4 1966171168
    %v2513 = vunpack.c.0.s8 %v2512
    %v2514 = vlaneseq
    %v2515 = vshrl.u32 %v2514, 7
    %v2516 = vsub.s32 %v2513, %v2515
    %v2517 = vrot.slane %v2509, %v2516
    %v2519 = vunpack.c.l.s4 1966171168
    %v2520 = vunpack.c.0.s8 %v2519
    %v2521 = vlaneseq
    %v2522 = vshrl.u32 %v2521, 7
    %v2523 = vsub.s32 %v2520, %v2522
    %v2524 = vrot.slane %v2510, %v2523
    %v2527 = vadd.f32 %v2495, %v2517
    %v2528 = vadd.f32 %v2497, %v2524
    %v2529 = vxor.u32 %v2527, 2147483648
    %v2530 = vxor.u32 %v2528, 2147483648
    %v2531 = vmul.f32 %v2529, 1.442695
    %v2532 = vpow.pop %v2531
    %v2533 = vmul.f32 %v2530, 1.442695
    %v2534 = vpow.pop %v2533
    %v2535 = vadd.f32 %v2532, 1.0
    %v2536 = vadd.f32 %v2534, 1.0
    %v2537 = vrcp.pop %v2535
    %v2538 = vmul.f32 1.0, %v2537
    %v2539 = vrcp.pop %v2536
    %v2540 = vmul.f32 1.0, %v2539
    %v2543 = vrot.slane %v2495, 1
    %v2544 = vrot.slane %v2497, 1
    %v2549 = vunpack.c.l.s4 1966171168
    %v2550 = vunpack.c.0.s8 %v2549
    %v2551 = vlaneseq
    %v2552 = vshrl.u32 %v2551, 7
    %v2553 = vsub.s32 %v2550, %v2552
    %v2554 = vrot.slane %v2350, %v2553
    %v2555 = vcombine.high %v2554, %v2554
    %v2557 = vunpack.c.l.s4 1966171168
    %v2558 = vunpack.c.0.s8 %v2557
    %v2559 = vlaneseq
    %v2560 = vshrl.u32 %v2559, 7
    %v2561 = vsub.s32 %v2558, %v2560
    %v2562 = vrot.slane %v2554, %v2561
    %v2564 = vunpack.c.l.s4 1966171168
    %v2565 = vunpack.c.0.s8 %v2564
    %v2566 = vlaneseq
    %v2567 = vshrl.u32 %v2566, 7
    %v2568 = vsub.s32 %v2565, %v2567
    %v2569 = vrot.slane %v2555, %v2568
    %v2572 = vadd.f32 %v2543, %v2562
    %v2573 = vadd.f32 %v2544, %v2569
    %v2574 = vxor.u32 %v2572, 2147483648
    %v2575 = vxor.u32 %v2573, 2147483648
    %v2576 = vmul.f32 %v2574, 1.442695
    %v2577 = vpow.pop %v2576
    %v2578 = vmul.f32 %v2575, 1.442695
    %v2579 = vpow.pop %v2578
    %v2580 = vadd.f32 %v2577, 1.0
    %v2581 = vadd.f32 %v2579, 1.0
    %v2582 = vrcp.pop %v2580
    %v2583 = vmul.f32 1.0, %v2582
    %v2584 = vrcp.pop %v2581
    %v2585 = vmul.f32 1.0, %v2584
    %v2588 = vunpack.c.l.s4 1966171168
    %v2589 = vunpack.c.0.s8 %v2588
    %v2590 = vlaneseq
    %v2591 = vshrl.u32 %v2590, 7
    %v2592 = vsub.s32 %v2589, %v2591
    %v2593 = vrot.slane %v2419, %v2592
    %v2594 = vcombine.high %v2593, %v2593
    %v2596 = vunpack.c.l.s4 1966171168
    %v2597 = vunpack.c.0.s8 %v2596
    %v2598 = vlaneseq
    %v2599 = vshrl.u32 %v2598, 7
    %v2600 = vsub.s32 %v2597, %v2599
    %v2601 = vrot.slane %v2593, %v2600
    %v2603 = vunpack.c.l.s4 1966171168
    %v2604 = vunpack.c.0.s8 %v2603
    %v2605 = vlaneseq
    %v2606 = vshrl.u32 %v2605, 7
    %v2607 = vsub.s32 %v2604, %v2606
    %v2608 = vrot.slane %v2594, %v2607
    %v2611 = vmul.f32 %v2538, %v2601
    %v2612 = vmul.f32 %v2540, %v2608
    %v2613 = vrot.slane %v2495, 2
    %v2614 = vrot.slane %v2497, 2
    %v2617 = vadd.f32 %v2613, %v2611
    %v2618 = vadd.f32 %v2614, %v2612
    %v2619 = vtanh.pop %v2617
    %v2620 = vtanh.pop %v2618
    %v2621 = vsub.f32 1.0, %v2583
    %v2622 = vsub.f32 1.0, %v2585
    %v2623 = vmul.f32 %v2621, %v2619
    %v2624 = vmul.f32 %v2622, %v2620
    %v2626 = vunpack.c.l.s4 1966171168
    %v2627 = vunpack.c.0.s8 %v2626
    %v2628 = vlaneseq
    %v2629 = vshrl.u32 %v2628, 7
    %v2630 = vsub.s32 %v2627, %v2629
    %v2631 = vrot.slane %v2263, %v2630
    %v2632 = vcombine.high %v2631, %v2631
    %v2634 = vunpack.c.l.s4 1966171168
    %v2635 = vunpack.c.0.s8 %v2634
    %v2636 = vlaneseq
    %v2637 = vshrl.u32 %v2636, 7
    %v2638 = vsub.s32 %v2635, %v2637
    %v2639 = vrot.slane %v2631, %v2638
    %v2641 = vunpack.c.l.s4 1966171168
    %v2642 = vunpack.c.0.s8 %v2641
    %v2643 = vlaneseq
    %v2644 = vshrl.u32 %v2643, 7
    %v2645 = vsub.s32 %v2642, %v2644
    %v2646 = vrot.slane %v2632, %v2645
    %v2649 = vmul.f32 %v2583, %v2639
    %v2650 = vmul.f32 %v2585, %v2646
    %v2651 = vadd.f32 %v2623, %v2649
    %v2652 = vadd.f32 %v2624, %v2650
    %v2655 = vunpack.c.l.s4 1966171168
    %v2656 = vunpack.c.0.s8 %v2655
    %v2657 = vlaneseq
    %v2658 = vshrl.u32 %v2657, 7
    %v2659 = vsub.s32 %v2656, %v2658
    %v2660 = vrot.slane %v2421, %v2659
    %v2661 = vcombine.high %v2660, %v2660
    %v2663 = vunpack.c.l.s4 1966171168
    %v2664 = vunpack.c.0.s8 %v2663
    %v2665 = vlaneseq
    %v2666 = vshrl.u32 %v2665, 7
    %v2667 = vsub.s32 %v2664, %v2666
    %v2668 = vrot.slane %v2660, %v2667
    %v2670 = vunpack.c.l.s4 1966171168
    %v2671 = vunpack.c.0.s8 %v2670
    %v2672 = vlaneseq
    %v2673 = vshrl.u32 %v2672, 7
    %v2674 = vsub.s32 %v2671, %v2673
    %v2675 = vrot.slane %v2661, %v2674
    %v2678 = vadd.f32 %v2499, %v2668
    %v2679 = vadd.f32 %v2501, %v2675
    %v2680 = vxor.u32 %v2678, 2147483648
    %v2681 = vxor.u32 %v2679, 2147483648
    %v2682 = vmul.f32 %v2680, 1.442695
    %v2683 = vpow.pop %v2682
    %v2684 = vmul.f32 %v2681, 1.442695
    %v2685 = vpow.pop %v2684
    %v2686 = vadd.f32 %v2683, 1.0
    %v2687 = vadd.f32 %v2685, 1.0
    %v2688 = vrcp.pop %v2686
    %v2689 = vmul.f32 1.0, %v2688
    %v2690 = vrcp.pop %v2687
    %v2691 = vmul.f32 1.0, %v2690
    %v2694 = vrot.slane %v2499, 1
    %v2695 = vrot.slane %v2501, 1
    %v2700 = vunpack.c.l.s4 1966171168
    %v2701 = vunpack.c.0.s8 %v2700
    %v2702 = vlaneseq
    %v2703 = vshrl.u32 %v2702, 7
    %v2704 = vsub.s32 %v2701, %v2703
    %v2705 = vrot.slane %v2490, %v2704
    %v2706 = vcombine.high %v2705, %v2705
    %v2708 = vunpack.c.l.s4 1966171168
    %v2709 = vunpack.c.0.s8 %v2708
    %v2710 = vlaneseq
    %v2711 = vshrl.u32 %v2710, 7
    %v2712 = vsub.s32 %v2709, %v2711
    %v2713 = vrot.slane %v2705, %v2712
    %v2715 = vunpack.c.l.s4 1966171168
    %v2716 = vunpack.c.0.s8 %v2715
    %v2717 = vlaneseq
    %v2718 = vshrl.u32 %v2717, 7
    %v2719 = vsub.s32 %v2716, %v2718
    %v2720 = vrot.slane %v2706, %v2719
    %v2723 = vadd.f32 %v2694, %v2713
    %v2724 = vadd.f32 %v2695, %v2720
    %v2725 = vxor.u32 %v2723, 2147483648
    %v2726 = vxor.u32 %v2724, 2147483648
    %v2727 = vmul.f32 %v2725, 1.442695
    %v2728 = vpow.pop %v2727
    %v2729 = vmul.f32 %v2726, 1.442695
    %v2730 = vpow.pop %v2729
    %v2731 = vadd.f32 %v2728, 1.0
    %v2732 = vadd.f32 %v2730, 1.0
    %v2733 = vrcp.pop %v2731
    %v2734 = vmul.f32 1.0, %v2733
    %v2735 = vrcp.pop %v2732
    %v2736 = vmul.f32 1.0, %v2735
    %v2739 = vunpack.c.l.s4 1966171168
    %v2740 = vunpack.c.0.s8 %v2739
    %v2741 = vlaneseq
    %v2742 = vshrl.u32 %v2741, 7
    %v2743 = vsub.s32 %v2740, %v2742
    %v2744 = vrot.slane %v2492, %v2743
    %v2745 = vcombine.high %v2744, %v2744
    %v2747 = vunpack.c.l.s4 1966171168
    %v2748 = vunpack.c.0.s8 %v2747
    %v2749 = vlaneseq
    %v2750 = vshrl.u32 %v2749, 7
    %v2751 = vsub.s32 %v2748, %v2750
    %v2752 = vrot.slane %v2744, %v2751
    %v2754 = vunpack.c.l.s4 1966171168
    %v2755 = vunpack.c.0.s8 %v2754
    %v2756 = vlaneseq
    %v2757 = vshrl.u32 %v2756, 7
    %v2758 = vsub.s32 %v2755, %v2757
    %v2759 = vrot.slane %v2745, %v2758
    %v2762 = vmul.f32 %v2689, %v2752
    %v2763 = vmul.f32 %v2691, %v2759
    %v2764 = vrot.slane %v2499, 2
    %v2765 = vrot.slane %v2501, 2
    %v2768 = vadd.f32 %v2764, %v2762
    %v2769 = vadd.f32 %v2765, %v2763
    %v2770 = vtanh.pop %v2768
    %v2771 = vtanh.pop %v2769
    %v2772 = vsub.f32 1.0, %v2734
    %v2773 = vsub.f32 1.0, %v2736
    %v2774 = vmul.f32 %v2772, %v2770
    %v2775 = vmul.f32 %v2773, %v2771
    %v2777 = vunpack.c.l.s4 1966171168
    %v2778 = vunpack.c.0.s8 %v2777
    %v2779 = vlaneseq
    %v2780 = vshrl.u32 %v2779, 7
    %v2781 = vsub.s32 %v2778, %v2780
    %v2782 = vrot.slane %v2279, %v2781
    %v2783 = vcombine.high %v2782, %v2782
    %v2785 = vunpack.c.l.s4 1966171168
    %v2786 = vunpack.c.0.s8 %v2785
    %v2787 = vlaneseq
    %v2788 = vshrl.u32 %v2787, 7
    %v2789 = vsub.s32 %v2786, %v2788
    %v2790 = vrot.slane %v2782, %v2789
    %v2792 = vunpack.c.l.s4 1966171168
    %v2793 = vunpack.c.0.s8 %v2792
    %v2794 = vlaneseq
    %v2795 = vshrl.u32 %v2794, 7
    %v2796 = vsub.s32 %v2793, %v2795
    %v2797 = vrot.slane %v2783, %v2796
    %v2800 = vmul.f32 %v2734, %v2790
    %v2801 = vmul.f32 %v2736, %v2797
    %v2802 = vadd.f32 %v2774, %v2800
    %v2803 = vadd.f32 %v2775, %v2801
    %2804 = vst.msk [vmem:[#allocation9 + $0x3] sm:$0x1] %vm1071, %v2651
    %2805 = vst.msk [vmem:[#allocation9 + $0xb] sm:$0x1] %vm1071, %v2652
    %v2808 = vlaneseq
    %v2809 = vshrl.u32 %v2808, 7
    %v2810 = vsub.s32 0, %v2809
    %v2811 = vrot.slane %v2802, %v2810
    %v2812 = vlaneseq
    %v2813 = vshrl.u32 %v2812, 7
    %v2814 = vsub.s32 0, %v2813
    %v2815 = vrot.slane %v2803, %v2814
    %2816 = vrot.lane.b32.xlu0 %v2811, 32
    %v2817 = vpop.permute.xlu0 %2816
    %2818 = vrot.lane.b32.xlu0 %v2815, 32
    %v2819 = vpop.permute.xlu0 %2818
    %2822 = vst.msk [vmem:[#allocation9 + $0x4] sm:$0x1] %vm1090, %v2817
    %2823 = vst.msk [vmem:[#allocation9 + $0xc] sm:$0x1] %vm1090, %v2819
    %v2826 = vcombine.low %v2651, %v2652
    %v2828 = vunpack.c.l.s4 1966171168
    %v2829 = vunpack.c.0.s8 %v2828
    %v2830 = vlaneseq
    %v2831 = vshrl.u32 %v2830, 7
    %v2832 = vsub.s32 %v2829, %v2831
    %v2833 = vrot.slane %v2826, %v2832
    %v2835 = vunpack.c.l.s4 1966171168
    %v2836 = vunpack.c.0.s8 %v2835
    %v2837 = vlaneseq
    %v2838 = vshrl.u32 %v2837, 7
    %v2839 = vsub.s32 %v2836, %v2838
    %v2840 = vrot.slane %v2833, %v2839
    %v2842 = vcombine.low %v2802, %v2803
    %v2844 = vunpack.c.l.s4 1966171168
    %v2845 = vunpack.c.0.s8 %v2844
    %v2846 = vlaneseq
    %v2847 = vshrl.u32 %v2846, 7
    %v2848 = vsub.s32 %v2845, %v2847
    %v2849 = vrot.slane %v2842, %v2848
    %v2851 = vunpack.c.l.s4 1966171168
    %v2852 = vunpack.c.0.s8 %v2851
    %v2853 = vlaneseq
    %v2854 = vshrl.u32 %v2853, 7
    %v2855 = vsub.s32 %v2852, %v2854
    %v2856 = vrot.slane %v2849, %v2855
    %2858 = vmatprep.subr.mxu0 %v374
    %2859 = vmatpush1.msra.mxu0 %v373
    %2860 = vmatprep.subr.mxu0 %v380
    %2861 = vmatpush1.msra.mxu0 %v379
    %2862 = vmatprep.subr.mxu0 %v386
    %2863 = vmatpush1.msra.mxu0 %v385
    %2864 = vmatprep.subr.mxu0 %v392
    %2865 = vmatpush1.msra.mxu0 %v391
    %2866 = vmatprep.subr.mxu0 %v398
    %2867 = vmatpush1.msra.mxu0 %v397
    %2868 = vmatprep.subr.mxu0 %v404
    %2869 = vmatpush1.msra.mxu0 %v403
    %2870 = vmatprep.subr.mxu0 %v410
    %2871 = vmatpush1.msra.mxu0 %v409
    %2872 = vmatprep.subr.mxu0 %v416
    %2873 = vmatpush1.msra.mxu0 %v415
    %2874 = vmatprep.subr.mxu0 %v422
    %2875 = vmatpush1.msra.mxu0 %v421
    %2876 = vmatprep.subr.mxu0 %v428
    %2877 = vmatpush1.msra.mxu0 %v427
    %2878 = vmatprep.subr.mxu0 %v434
    %2879 = vmatpush1.msra.mxu0 %v433
    %2880 = vmatprep.subr.mxu0 %v440
    %2881 = vmatpush1.msra.mxu0 %v439
    %2882 = vmatprep.subr.mxu0 %v446
    %2883 = vmatpush1.msra.mxu0 %v445
    %2884 = vmatprep.subr.mxu0 %v452
    %2885 = vmatpush1.msra.mxu0 %v451
    %2886 = vmatprep.subr.mxu0 %v458
    %2887 = vmatpush1.msra.mxu0 %v457
    %2888 = vmatprep.subr.mxu0 %v464
    %2889 = vmatpush1.msra.mxu0 %v463
    %2890 = vmatprep.subr.mxu0 %v470
    %2891 = vmatpush1.msra.mxu0 %v469
    %2892 = vmatprep.subr.mxu0 %v476
    %2893 = vmatpush1.msra.mxu0 %v475
    %2894 = vmatprep.subr.mxu0 %v482
    %2895 = vmatpush1.msra.mxu0 %v481
    %2896 = vmatprep.subr.mxu0 %v488
    %2897 = vmatpush1.msra.mxu0 %v487
    %2898 = vmatprep.subr.mxu0 %v494
    %2899 = vmatpush1.msra.mxu0 %v493
    %2900 = vmatprep.subr.mxu0 %v500
    %2901 = vmatpush1.msra.mxu0 %v499
    %2902 = vmatprep.subr.mxu0 %v506
    %2903 = vmatpush1.msra.mxu0 %v505
    %2904 = vmatprep.subr.mxu0 %v512
    %2905 = vmatpush1.msra.mxu0 %v511
    %2906 = vmatprep.subr.mxu0 %v518
    %2907 = vmatpush1.msra.mxu0 %v517
    %2908 = vmatprep.subr.mxu0 %v524
    %2909 = vmatpush1.msra.mxu0 %v523
    %2910 = vmatprep.subr.mxu0 %v530
    %2911 = vmatpush1.msra.mxu0 %v529
    %2912 = vmatprep.subr.mxu0 %v536
    %2913 = vmatpush1.msra.mxu0 %v535
    %2914 = vmatprep.subr.mxu0 %v542
    %2915 = vmatpush1.msra.mxu0 %v541
    %2916 = vmatprep.subr.mxu0 %v548
    %2917 = vmatpush1.msra.mxu0 %v547
    %2918 = vmatprep.subr.mxu0 %v554
    %2919 = vmatpush1.msra.mxu0 %v553
    %2920 = vmatprep.subr.mxu0 %v560
    %2921 = vmatpush1.msra.mxu0 %v559
    %2922 = vmatprep.mubr.f32.mxu0 %v2856
    %2923 = vmatmul.mubr.f32.gmra.mrb[0].mxu0 %v2840
    %v2924 = vpop.f32.mrb[0].mxu0
    %v2925 = vadd.f32 %v570, %v2924
    %v2926 = vpop.f32.mrb[0].mxu0
    %v2927 = vadd.f32 %v574, %v2926
    %2928 = vdwg.mxu0
    %2929 = vmatprep.subr.mxu0 %v376
    %2930 = vmatpush1.msra.mxu0 %v375
    %2931 = vmatprep.subr.mxu0 %v382
    %2932 = vmatpush1.msra.mxu0 %v381
    %2933 = vmatprep.subr.mxu0 %v388
    %2934 = vmatpush1.msra.mxu0 %v387
    %2935 = vmatprep.subr.mxu0 %v394
    %2936 = vmatpush1.msra.mxu0 %v393
    %2937 = vmatprep.subr.mxu0 %v400
    %2938 = vmatpush1.msra.mxu0 %v399
    %2939 = vmatprep.subr.mxu0 %v406
    %2940 = vmatpush1.msra.mxu0 %v405
    %2941 = vmatprep.subr.mxu0 %v412
    %2942 = vmatpush1.msra.mxu0 %v411
    %2943 = vmatprep.subr.mxu0 %v418
    %2944 = vmatpush1.msra.mxu0 %v417
    %2945 = vmatprep.subr.mxu0 %v424
    %2946 = vmatpush1.msra.mxu0 %v423
    %2947 = vmatprep.subr.mxu0 %v430
    %2948 = vmatpush1.msra.mxu0 %v429
    %2949 = vmatprep.subr.mxu0 %v436
    %2950 = vmatpush1.msra.mxu0 %v435
    %2951 = vmatprep.subr.mxu0 %v442
    %2952 = vmatpush1.msra.mxu0 %v441
    %2953 = vmatprep.subr.mxu0 %v448
    %2954 = vmatpush1.msra.mxu0 %v447
    %2955 = vmatprep.subr.mxu0 %v454
    %2956 = vmatpush1.msra.mxu0 %v453
    %2957 = vmatprep.subr.mxu0 %v460
    %2958 = vmatpush1.msra.mxu0 %v459
    %2959 = vmatprep.subr.mxu0 %v466
    %2960 = vmatpush1.msra.mxu0 %v465
    %2961 = vmatprep.subr.mxu0 %v472
    %2962 = vmatpush1.msra.mxu0 %v471
    %2963 = vmatprep.subr.mxu0 %v478
    %2964 = vmatpush1.msra.mxu0 %v477
    %2965 = vmatprep.subr.mxu0 %v484
    %2966 = vmatpush1.msra.mxu0 %v483
    %2967 = vmatprep.subr.mxu0 %v490
    %2968 = vmatpush1.msra.mxu0 %v489
    %2969 = vmatprep.subr.mxu0 %v496
    %2970 = vmatpush1.msra.mxu0 %v495
    %2971 = vmatprep.subr.mxu0 %v502
    %2972 = vmatpush1.msra.mxu0 %v501
    %2973 = vmatprep.subr.mxu0 %v508
    %2974 = vmatpush1.msra.mxu0 %v507
    %2975 = vmatprep.subr.mxu0 %v514
    %2976 = vmatpush1.msra.mxu0 %v513
    %2977 = vmatprep.subr.mxu0 %v520
    %2978 = vmatpush1.msra.mxu0 %v519
    %2979 = vmatprep.subr.mxu0 %v526
    %2980 = vmatpush1.msra.mxu0 %v525
    %2981 = vmatprep.subr.mxu0 %v532
    %2982 = vmatpush1.msra.mxu0 %v531
    %2983 = vmatprep.subr.mxu0 %v538
    %2984 = vmatpush1.msra.mxu0 %v537
    %2985 = vmatprep.subr.mxu0 %v544
    %2986 = vmatpush1.msra.mxu0 %v543
    %2987 = vmatprep.subr.mxu0 %v550
    %2988 = vmatpush1.msra.mxu0 %v549
    %2989 = vmatprep.subr.mxu0 %v556
    %2990 = vmatpush1.msra.mxu0 %v555
    %2991 = vmatprep.subr.mxu0 %v562
    %2992 = vmatpush1.msra.mxu0 %v561
    %2993 = vmatprep.mubr.f32.mxu0 %v2856
    %2994 = vmatmul.mubr.f32.gmra.mrb[0].mxu0 %v2840
    %v2995 = vpop.f32.mrb[0].mxu0
    %v2996 = vadd.f32 %v578, %v2995
    %v2997 = vpop.f32.mrb[0].mxu0
    %v2998 = vadd.f32 %v582, %v2997
    %2999 = vdwg.mxu0
    %3000 = vmatprep.subr.mxu0 %v378
    %3001 = vmatpush1.msra.mxu0 %v377
    %3002 = vmatprep.subr.mxu0 %v384
    %3003 = vmatpush1.msra.mxu0 %v383
    %3004 = vmatprep.subr.mxu0 %v390
    %3005 = vmatpush1.msra.mxu0 %v389
    %3006 = vmatprep.subr.mxu0 %v396
    %3007 = vmatpush1.msra.mxu0 %v395
    %3008 = vmatprep.subr.mxu0 %v402
    %3009 = vmatpush1.msra.mxu0 %v401
    %3010 = vmatprep.subr.mxu0 %v408
    %3011 = vmatpush1.msra.mxu0 %v407
    %3012 = vmatprep.subr.mxu0 %v414
    %3013 = vmatpush1.msra.mxu0 %v413
    %3014 = vmatprep.subr.mxu0 %v420
    %3015 = vmatpush1.msra.mxu0 %v419
    %3016 = vmatprep.subr.mxu0 %v426
    %3017 = vmatpush1.msra.mxu0 %v425
    %3018 = vmatprep.subr.mxu0 %v432
    %3019 = vmatpush1.msra.mxu0 %v431
    %3020 = vmatprep.subr.mxu0 %v438
    %3021 = vmatpush1.msra.mxu0 %v437
    %3022 = vmatprep.subr.mxu0 %v444
    %3023 = vmatpush1.msra.mxu0 %v443
    %3024 = vmatprep.subr.mxu0 %v450
    %3025 = vmatpush1.msra.mxu0 %v449
    %3026 = vmatprep.subr.mxu0 %v456
    %3027 = vmatpush1.msra.mxu0 %v455
    %3028 = vmatprep.subr.mxu0 %v462
    %3029 = vmatpush1.msra.mxu0 %v461
    %3030 = vmatprep.subr.mxu0 %v468
    %3031 = vmatpush1.msra.mxu0 %v467
    %3032 = vmatprep.subr.mxu0 %v474
    %3033 = vmatpush1.msra.mxu0 %v473
    %3034 = vmatprep.subr.mxu0 %v480
    %3035 = vmatpush1.msra.mxu0 %v479
    %3036 = vmatprep.subr.mxu0 %v486
    %3037 = vmatpush1.msra.mxu0 %v485
    %3038 = vmatprep.subr.mxu0 %v492
    %3039 = vmatpush1.msra.mxu0 %v491
    %3040 = vmatprep.subr.mxu0 %v498
    %3041 = vmatpush1.msra.mxu0 %v497
    %3042 = vmatprep.subr.mxu0 %v504
    %3043 = vmatpush1.msra.mxu0 %v503
    %3044 = vmatprep.subr.mxu0 %v510
    %3045 = vmatpush1.msra.mxu0 %v509
    %3046 = vmatprep.subr.mxu0 %v516
    %3047 = vmatpush1.msra.mxu0 %v515
    %3048 = vmatprep.subr.mxu0 %v522
    %3049 = vmatpush1.msra.mxu0 %v521
    %3050 = vmatprep.subr.mxu0 %v528
    %3051 = vmatpush1.msra.mxu0 %v527
    %3052 = vmatprep.subr.mxu0 %v534
    %3053 = vmatpush1.msra.mxu0 %v533
    %3054 = vmatprep.subr.mxu0 %v540
    %3055 = vmatpush1.msra.mxu0 %v539
    %3056 = vmatprep.subr.mxu0 %v546
    %3057 = vmatpush1.msra.mxu0 %v545
    %3058 = vmatprep.subr.mxu0 %v552
    %3059 = vmatpush1.msra.mxu0 %v551
    %3060 = vmatprep.subr.mxu0 %v558
    %3061 = vmatpush1.msra.mxu0 %v557
    %3062 = vmatprep.subr.mxu0 %v564
    %3063 = vmatpush1.msra.mxu0 %v563
    %3064 = vmatprep.mubr.f32.mxu0 %v2856
    %3065 = vmatmul.mubr.f32.gmra.mrb[0].mxu0 %v2840
    %v3066 = vpop.f32.mrb[0].mxu0
    %v3067 = vadd.f32 %v586, %v3066
    %v3068 = vpop.f32.mrb[0].mxu0
    %v3069 = vadd.f32 %v590, %v3068
    %3070 = vdwg.mxu0
    %s3071 = scalar_lea.vmem [#allocation2], 4
    %v3072 = vld [vmem:[%s3071] ss:$8 sm:$0x7]
    %s3073 = scalar_lea.vmem [#allocation2], 52
    %v3074 = vld [vmem:[%s3073] ss:$8 sm:$0x7]
    %s3075 = scalar_lea.vmem [#allocation2], 27
    %v3076 = vld [vmem:[%s3075] ss:$8 sm:$0x7]
    %s3077 = scalar_lea.vmem [#allocation2], 75
    %v3078 = vld [vmem:[%s3077] ss:$8 sm:$0x7]
    %v3081 = vunpack.c.l.s4 1966171168
    %v3082 = vunpack.c.0.s8 %v3081
    %v3083 = vlaneseq
    %v3084 = vshrl.u32 %v3083, 7
    %v3085 = vsub.s32 %v3082, %v3084
    %v3086 = vrot.slane %v2925, %v3085
    %v3087 = vcombine.high %v3086, %v3086
    %v3089 = vunpack.c.l.s4 1966171168
    %v3090 = vunpack.c.0.s8 %v3089
    %v3091 = vlaneseq
    %v3092 = vshrl.u32 %v3091, 7
    %v3093 = vsub.s32 %v3090, %v3092
    %v3094 = vrot.slane %v3086, %v3093
    %v3096 = vunpack.c.l.s4 1966171168
    %v3097 = vunpack.c.0.s8 %v3096
    %v3098 = vlaneseq
    %v3099 = vshrl.u32 %v3098, 7
    %v3100 = vsub.s32 %v3097, %v3099
    %v3101 = vrot.slane %v3087, %v3100
    %v3104 = vadd.f32 %v3072, %v3094
    %v3105 = vadd.f32 %v3074, %v3101
    %v3106 = vxor.u32 %v3104, 2147483648
    %v3107 = vxor.u32 %v3105, 2147483648
    %v3108 = vmul.f32 %v3106, 1.442695
    %v3109 = vpow.pop %v3108
    %v3110 = vmul.f32 %v3107, 1.442695
    %v3111 = vpow.pop %v3110
    %v3112 = vadd.f32 %v3109, 1.0
    %v3113 = vadd.f32 %v3111, 1.0
    %v3114 = vrcp.pop %v3112
    %v3115 = vmul.f32 1.0, %v3114
    %v3116 = vrcp.pop %v3113
    %v3117 = vmul.f32 1.0, %v3116
    %v3120 = vrot.slane %v3072, 1
    %v3121 = vrot.slane %v3074, 1
    %v3126 = vunpack.c.l.s4 1966171168
    %v3127 = vunpack.c.0.s8 %v3126
    %v3128 = vlaneseq
    %v3129 = vshrl.u32 %v3128, 7
    %v3130 = vsub.s32 %v3127, %v3129
    %v3131 = vrot.slane %v2927, %v3130
    %v3132 = vcombine.high %v3131, %v3131
    %v3134 = vunpack.c.l.s4 1966171168
    %v3135 = vunpack.c.0.s8 %v3134
    %v3136 = vlaneseq
    %v3137 = vshrl.u32 %v3136, 7
    %v3138 = vsub.s32 %v3135, %v3137
    %v3139 = vrot.slane %v3131, %v3138
    %v3141 = vunpack.c.l.s4 1966171168
    %v3142 = vunpack.c.0.s8 %v3141
    %v3143 = vlaneseq
    %v3144 = vshrl.u32 %v3143, 7
    %v3145 = vsub.s32 %v3142, %v3144
    %v3146 = vrot.slane %v3132, %v3145
    %v3149 = vadd.f32 %v3120, %v3139
    %v3150 = vadd.f32 %v3121, %v3146
    %v3151 = vxor.u32 %v3149, 2147483648
    %v3152 = vxor.u32 %v3150, 2147483648
    %v3153 = vmul.f32 %v3151, 1.442695
    %v3154 = vpow.pop %v3153
    %v3155 = vmul.f32 %v3152, 1.442695
    %v3156 = vpow.pop %v3155
    %v3157 = vadd.f32 %v3154, 1.0
    %v3158 = vadd.f32 %v3156, 1.0
    %v3159 = vrcp.pop %v3157
    %v3160 = vmul.f32 1.0, %v3159
    %v3161 = vrcp.pop %v3158
    %v3162 = vmul.f32 1.0, %v3161
    %v3165 = vunpack.c.l.s4 1966171168
    %v3166 = vunpack.c.0.s8 %v3165
    %v3167 = vlaneseq
    %v3168 = vshrl.u32 %v3167, 7
    %v3169 = vsub.s32 %v3166, %v3168
    %v3170 = vrot.slane %v2996, %v3169
    %v3171 = vcombine.high %v3170, %v3170
    %v3173 = vunpack.c.l.s4 1966171168
    %v3174 = vunpack.c.0.s8 %v3173
    %v3175 = vlaneseq
    %v3176 = vshrl.u32 %v3175, 7
    %v3177 = vsub.s32 %v3174, %v3176
    %v3178 = vrot.slane %v3170, %v3177
    %v3180 = vunpack.c.l.s4 1966171168
    %v3181 = vunpack.c.0.s8 %v3180
    %v3182 = vlaneseq
    %v3183 = vshrl.u32 %v3182, 7
    %v3184 = vsub.s32 %v3181, %v3183
    %v3185 = vrot.slane %v3171, %v3184
    %v3188 = vmul.f32 %v3115, %v3178
    %v3189 = vmul.f32 %v3117, %v3185
    %v3190 = vrot.slane %v3072, 2
    %v3191 = vrot.slane %v3074, 2
    %v3194 = vadd.f32 %v3190, %v3188
    %v3195 = vadd.f32 %v3191, %v3189
    %v3196 = vtanh.pop %v3194
    %v3197 = vtanh.pop %v3195
    %v3198 = vsub.f32 1.0, %v3160
    %v3199 = vsub.f32 1.0, %v3162
    %v3200 = vmul.f32 %v3198, %v3196
    %v3201 = vmul.f32 %v3199, %v3197
    %v3203 = vunpack.c.l.s4 1966171168
    %v3204 = vunpack.c.0.s8 %v3203
    %v3205 = vlaneseq
    %v3206 = vshrl.u32 %v3205, 7
    %v3207 = vsub.s32 %v3204, %v3206
    %v3208 = vrot.slane %v2840, %v3207
    %v3209 = vcombine.high %v3208, %v3208
    %v3211 = vunpack.c.l.s4 1966171168
    %v3212 = vunpack.c.0.s8 %v3211
    %v3213 = vlaneseq
    %v3214 = vshrl.u32 %v3213, 7
    %v3215 = vsub.s32 %v3212, %v3214
    %v3216 = vrot.slane %v3208, %v3215
    %v3218 = vunpack.c.l.s4 1966171168
    %v3219 = vunpack.c.0.s8 %v3218
    %v3220 = vlaneseq
    %v3221 = vshrl.u32 %v3220, 7
    %v3222 = vsub.s32 %v3219, %v3221
    %v3223 = vrot.slane %v3209, %v3222
    %v3226 = vmul.f32 %v3160, %v3216
    %v3227 = vmul.f32 %v3162, %v3223
    %v3228 = vadd.f32 %v3200, %v3226
    %v3229 = vadd.f32 %v3201, %v3227
    %v3232 = vunpack.c.l.s4 1966171168
    %v3233 = vunpack.c.0.s8 %v3232
    %v3234 = vlaneseq
    %v3235 = vshrl.u32 %v3234, 7
    %v3236 = vsub.s32 %v3233, %v3235
    %v3237 = vrot.slane %v2998, %v3236
    %v3238 = vcombine.high %v3237, %v3237
    %v3240 = vunpack.c.l.s4 1966171168
    %v3241 = vunpack.c.0.s8 %v3240
    %v3242 = vlaneseq
    %v3243 = vshrl.u32 %v3242, 7
    %v3244 = vsub.s32 %v3241, %v3243
    %v3245 = vrot.slane %v3237, %v3244
    %v3247 = vunpack.c.l.s4 1966171168
    %v3248 = vunpack.c.0.s8 %v3247
    %v3249 = vlaneseq
    %v3250 = vshrl.u32 %v3249, 7
    %v3251 = vsub.s32 %v3248, %v3250
    %v3252 = vrot.slane %v3238, %v3251
    %v3255 = vadd.f32 %v3076, %v3245
    %v3256 = vadd.f32 %v3078, %v3252
    %v3257 = vxor.u32 %v3255, 2147483648
    %v3258 = vxor.u32 %v3256, 2147483648
    %v3259 = vmul.f32 %v3257, 1.442695
    %v3260 = vpow.pop %v3259
    %v3261 = vmul.f32 %v3258, 1.442695
    %v3262 = vpow.pop %v3261
    %v3263 = vadd.f32 %v3260, 1.0
    %v3264 = vadd.f32 %v3262, 1.0
    %v3265 = vrcp.pop %v3263
    %v3266 = vmul.f32 1.0, %v3265
    %v3267 = vrcp.pop %v3264
    %v3268 = vmul.f32 1.0, %v3267
    %v3271 = vrot.slane %v3076, 1
    %v3272 = vrot.slane %v3078, 1
    %v3277 = vunpack.c.l.s4 1966171168
    %v3278 = vunpack.c.0.s8 %v3277
    %v3279 = vlaneseq
    %v3280 = vshrl.u32 %v3279, 7
    %v3281 = vsub.s32 %v3278, %v3280
    %v3282 = vrot.slane %v3067, %v3281
    %v3283 = vcombine.high %v3282, %v3282
    %v3285 = vunpack.c.l.s4 1966171168
    %v3286 = vunpack.c.0.s8 %v3285
    %v3287 = vlaneseq
    %v3288 = vshrl.u32 %v3287, 7
    %v3289 = vsub.s32 %v3286, %v3288
    %v3290 = vrot.slane %v3282, %v3289
    %v3292 = vunpack.c.l.s4 1966171168
    %v3293 = vunpack.c.0.s8 %v3292
    %v3294 = vlaneseq
    %v3295 = vshrl.u32 %v3294, 7
    %v3296 = vsub.s32 %v3293, %v3295
    %v3297 = vrot.slane %v3283, %v3296
    %v3300 = vadd.f32 %v3271, %v3290
    %v3301 = vadd.f32 %v3272, %v3297
    %v3302 = vxor.u32 %v3300, 2147483648
    %v3303 = vxor.u32 %v3301, 2147483648
    %v3304 = vmul.f32 %v3302, 1.442695
    %v3305 = vpow.pop %v3304
    %v3306 = vmul.f32 %v3303, 1.442695
    %v3307 = vpow.pop %v3306
    %v3308 = vadd.f32 %v3305, 1.0
    %v3309 = vadd.f32 %v3307, 1.0
    %v3310 = vrcp.pop %v3308
    %v3311 = vmul.f32 1.0, %v3310
    %v3312 = vrcp.pop %v3309
    %v3313 = vmul.f32 1.0, %v3312
    %v3316 = vunpack.c.l.s4 1966171168
    %v3317 = vunpack.c.0.s8 %v3316
    %v3318 = vlaneseq
    %v3319 = vshrl.u32 %v3318, 7
    %v3320 = vsub.s32 %v3317, %v3319
    %v3321 = vrot.slane %v3069, %v3320
    %v3322 = vcombine.high %v3321, %v3321
    %v3324 = vunpack.c.l.s4 1966171168
    %v3325 = vunpack.c.0.s8 %v3324
    %v3326 = vlaneseq
    %v3327 = vshrl.u32 %v3326, 7
    %v3328 = vsub.s32 %v3325, %v3327
    %v3329 = vrot.slane %v3321, %v3328
    %v3331 = vunpack.c.l.s4 1966171168
    %v3332 = vunpack.c.0.s8 %v3331
    %v3333 = vlaneseq
    %v3334 = vshrl.u32 %v3333, 7
    %v3335 = vsub.s32 %v3332, %v3334
    %v3336 = vrot.slane %v3322, %v3335
    %v3339 = vmul.f32 %v3266, %v3329
    %v3340 = vmul.f32 %v3268, %v3336
    %v3341 = vrot.slane %v3076, 2
    %v3342 = vrot.slane %v3078, 2
    %v3345 = vadd.f32 %v3341, %v3339
    %v3346 = vadd.f32 %v3342, %v3340
    %v3347 = vtanh.pop %v3345
    %v3348 = vtanh.pop %v3346
    %v3349 = vsub.f32 1.0, %v3311
    %v3350 = vsub.f32 1.0, %v3313
    %v3351 = vmul.f32 %v3349, %v3347
    %v3352 = vmul.f32 %v3350, %v3348
    %v3354 = vunpack.c.l.s4 1966171168
    %v3355 = vunpack.c.0.s8 %v3354
    %v3356 = vlaneseq
    %v3357 = vshrl.u32 %v3356, 7
    %v3358 = vsub.s32 %v3355, %v3357
    %v3359 = vrot.slane %v2856, %v3358
    %v3360 = vcombine.high %v3359, %v3359
    %v3362 = vunpack.c.l.s4 1966171168
    %v3363 = vunpack.c.0.s8 %v3362
    %v3364 = vlaneseq
    %v3365 = vshrl.u32 %v3364, 7
    %v3366 = vsub.s32 %v3363, %v3365
    %v3367 = vrot.slane %v3359, %v3366
    %v3369 = vunpack.c.l.s4 1966171168
    %v3370 = vunpack.c.0.s8 %v3369
    %v3371 = vlaneseq
    %v3372 = vshrl.u32 %v3371, 7
    %v3373 = vsub.s32 %v3370, %v3372
    %v3374 = vrot.slane %v3360, %v3373
    %v3377 = vmul.f32 %v3311, %v3367
    %v3378 = vmul.f32 %v3313, %v3374
    %v3379 = vadd.f32 %v3351, %v3377
    %v3380 = vadd.f32 %v3352, %v3378
    %3381 = vst.msk [vmem:[#allocation9 + $0x4] sm:$0x1] %vm1071, %v3228
    %3382 = vst.msk [vmem:[#allocation9 + $0xc] sm:$0x1] %vm1071, %v3229
    %v3385 = vlaneseq
    %v3386 = vshrl.u32 %v3385, 7
    %v3387 = vsub.s32 0, %v3386
    %v3388 = vrot.slane %v3379, %v3387
    %v3389 = vlaneseq
    %v3390 = vshrl.u32 %v3389, 7
    %v3391 = vsub.s32 0, %v3390
    %v3392 = vrot.slane %v3380, %v3391
    %3393 = vrot.lane.b32.xlu0 %v3388, 32
    %v3394 = vpop.permute.xlu0 %3393
    %3395 = vrot.lane.b32.xlu0 %v3392, 32
    %v3396 = vpop.permute.xlu0 %3395
    %3399 = vst.msk [vmem:[#allocation9 + $0x3] sm:$0x1] %vm1090, %v3394
    %3400 = vst.msk [vmem:[#allocation9 + $0xb] sm:$0x1] %vm1090, %v3396
    %v3403 = vcombine.low %v3228, %v3229
    %v3405 = vunpack.c.l.s4 1966171168
    %v3406 = vunpack.c.0.s8 %v3405
    %v3407 = vlaneseq
    %v3408 = vshrl.u32 %v3407, 7
    %v3409 = vsub.s32 %v3406, %v3408
    %v3410 = vrot.slane %v3403, %v3409
    %v3412 = vunpack.c.l.s4 1966171168
    %v3413 = vunpack.c.0.s8 %v3412
    %v3414 = vlaneseq
    %v3415 = vshrl.u32 %v3414, 7
    %v3416 = vsub.s32 %v3413, %v3415
    %v3417 = vrot.slane %v3410, %v3416
    %v3419 = vcombine.low %v3379, %v3380
    %v3421 = vunpack.c.l.s4 1966171168
    %v3422 = vunpack.c.0.s8 %v3421
    %v3423 = vlaneseq
    %v3424 = vshrl.u32 %v3423, 7
    %v3425 = vsub.s32 %v3422, %v3424
    %v3426 = vrot.slane %v3419, %v3425
    %v3428 = vunpack.c.l.s4 1966171168
    %v3429 = vunpack.c.0.s8 %v3428
    %v3430 = vlaneseq
    %v3431 = vshrl.u32 %v3430, 7
    %v3432 = vsub.s32 %v3429, %v3431
    %v3433 = vrot.slane %v3426, %v3432
    %3435 = vmatprep.subr.mxu0 %v374
    %3436 = vmatpush1.msra.mxu0 %v373
    %3437 = vmatprep.subr.mxu0 %v380
    %3438 = vmatpush1.msra.mxu0 %v379
    %3439 = vmatprep.subr.mxu0 %v386
    %3440 = vmatpush1.msra.mxu0 %v385
    %3441 = vmatprep.subr.mxu0 %v392
    %3442 = vmatpush1.msra.mxu0 %v391
    %3443 = vmatprep.subr.mxu0 %v398
    %3444 = vmatpush1.msra.mxu0 %v397
    %3445 = vmatprep.subr.mxu0 %v404
    %3446 = vmatpush1.msra.mxu0 %v403
    %3447 = vmatprep.subr.mxu0 %v410
    %3448 = vmatpush1.msra.mxu0 %v409
    %3449 = vmatprep.subr.mxu0 %v416
    %3450 = vmatpush1.msra.mxu0 %v415
    %3451 = vmatprep.subr.mxu0 %v422
    %3452 = vmatpush1.msra.mxu0 %v421
    %3453 = vmatprep.subr.mxu0 %v428
    %3454 = vmatpush1.msra.mxu0 %v427
    %3455 = vmatprep.subr.mxu0 %v434
    %3456 = vmatpush1.msra.mxu0 %v433
    %3457 = vmatprep.subr.mxu0 %v440
    %3458 = vmatpush1.msra.mxu0 %v439
    %3459 = vmatprep.subr.mxu0 %v446
    %3460 = vmatpush1.msra.mxu0 %v445
    %3461 = vmatprep.subr.mxu0 %v452
    %3462 = vmatpush1.msra.mxu0 %v451
    %3463 = vmatprep.subr.mxu0 %v458
    %3464 = vmatpush1.msra.mxu0 %v457
    %3465 = vmatprep.subr.mxu0 %v464
    %3466 = vmatpush1.msra.mxu0 %v463
    %3467 = vmatprep.subr.mxu0 %v470
    %3468 = vmatpush1.msra.mxu0 %v469
    %3469 = vmatprep.subr.mxu0 %v476
    %3470 = vmatpush1.msra.mxu0 %v475
    %3471 = vmatprep.subr.mxu0 %v482
    %3472 = vmatpush1.msra.mxu0 %v481
    %3473 = vmatprep.subr.mxu0 %v488
    %3474 = vmatpush1.msra.mxu0 %v487
    %3475 = vmatprep.subr.mxu0 %v494
    %3476 = vmatpush1.msra.mxu0 %v493
    %3477 = vmatprep.subr.mxu0 %v500
    %3478 = vmatpush1.msra.mxu0 %v499
    %3479 = vmatprep.subr.mxu0 %v506
    %3480 = vmatpush1.msra.mxu0 %v505
    %3481 = vmatprep.subr.mxu0 %v512
    %3482 = vmatpush1.msra.mxu0 %v511
    %3483 = vmatprep.subr.mxu0 %v518
    %3484 = vmatpush1.msra.mxu0 %v517
    %3485 = vmatprep.subr.mxu0 %v524
    %3486 = vmatpush1.msra.mxu0 %v523
    %3487 = vmatprep.subr.mxu0 %v530
    %3488 = vmatpush1.msra.mxu0 %v529
    %3489 = vmatprep.subr.mxu0 %v536
    %3490 = vmatpush1.msra.mxu0 %v535
    %3491 = vmatprep.subr.mxu0 %v542
    %3492 = vmatpush1.msra.mxu0 %v541
    %3493 = vmatprep.subr.mxu0 %v548
    %3494 = vmatpush1.msra.mxu0 %v547
    %3495 = vmatprep.subr.mxu0 %v554
    %3496 = vmatpush1.msra.mxu0 %v553
    %3497 = vmatprep.subr.mxu0 %v560
    %3498 = vmatpush1.msra.mxu0 %v559
    %3499 = vmatprep.mubr.f32.mxu0 %v3433
    %3500 = vmatmul.mubr.f32.gmra.mrb[0].mxu0 %v3417
    %v3501 = vpop.f32.mrb[0].mxu0
    %v3502 = vadd.f32 %v570, %v3501
    %v3503 = vpop.f32.mrb[0].mxu0
    %v3504 = vadd.f32 %v574, %v3503
    %3505 = vdwg.mxu0
    %3506 = vmatprep.subr.mxu0 %v376
    %3507 = vmatpush1.msra.mxu0 %v375
    %3508 = vmatprep.subr.mxu0 %v382
    %3509 = vmatpush1.msra.mxu0 %v381
    %3510 = vmatprep.subr.mxu0 %v388
    %3511 = vmatpush1.msra.mxu0 %v387
    %3512 = vmatprep.subr.mxu0 %v394
    %3513 = vmatpush1.msra.mxu0 %v393
    %3514 = vmatprep.subr.mxu0 %v400
    %3515 = vmatpush1.msra.mxu0 %v399
    %3516 = vmatprep.subr.mxu0 %v406
    %3517 = vmatpush1.msra.mxu0 %v405
    %3518 = vmatprep.subr.mxu0 %v412
    %3519 = vmatpush1.msra.mxu0 %v411
    %3520 = vmatprep.subr.mxu0 %v418
    %3521 = vmatpush1.msra.mxu0 %v417
    %3522 = vmatprep.subr.mxu0 %v424
    %3523 = vmatpush1.msra.mxu0 %v423
    %3524 = vmatprep.subr.mxu0 %v430
    %3525 = vmatpush1.msra.mxu0 %v429
    %3526 = vmatprep.subr.mxu0 %v436
    %3527 = vmatpush1.msra.mxu0 %v435
    %3528 = vmatprep.subr.mxu0 %v442
    %3529 = vmatpush1.msra.mxu0 %v441
    %3530 = vmatprep.subr.mxu0 %v448
    %3531 = vmatpush1.msra.mxu0 %v447
    %3532 = vmatprep.subr.mxu0 %v454
    %3533 = vmatpush1.msra.mxu0 %v453
    %3534 = vmatprep.subr.mxu0 %v460
    %3535 = vmatpush1.msra.mxu0 %v459
    %3536 = vmatprep.subr.mxu0 %v466
    %3537 = vmatpush1.msra.mxu0 %v465
    %3538 = vmatprep.subr.mxu0 %v472
    %3539 = vmatpush1.msra.mxu0 %v471
    %3540 = vmatprep.subr.mxu0 %v478
    %3541 = vmatpush1.msra.mxu0 %v477
    %3542 = vmatprep.subr.mxu0 %v484
    %3543 = vmatpush1.msra.mxu0 %v483
    %3544 = vmatprep.subr.mxu0 %v490
    %3545 = vmatpush1.msra.mxu0 %v489
    %3546 = vmatprep.subr.mxu0 %v496
    %3547 = vmatpush1.msra.mxu0 %v495
    %3548 = vmatprep.subr.mxu0 %v502
    %3549 = vmatpush1.msra.mxu0 %v501
    %3550 = vmatprep.subr.mxu0 %v508
    %3551 = vmatpush1.msra.mxu0 %v507
    %3552 = vmatprep.subr.mxu0 %v514
    %3553 = vmatpush1.msra.mxu0 %v513
    %3554 = vmatprep.subr.mxu0 %v520
    %3555 = vmatpush1.msra.mxu0 %v519
    %3556 = vmatprep.subr.mxu0 %v526
    %3557 = vmatpush1.msra.mxu0 %v525
    %3558 = vmatprep.subr.mxu0 %v532
    %3559 = vmatpush1.msra.mxu0 %v531
    %3560 = vmatprep.subr.mxu0 %v538
    %3561 = vmatpush1.msra.mxu0 %v537
    %3562 = vmatprep.subr.mxu0 %v544
    %3563 = vmatpush1.msra.mxu0 %v543
    %3564 = vmatprep.subr.mxu0 %v550
    %3565 = vmatpush1.msra.mxu0 %v549
    %3566 = vmatprep.subr.mxu0 %v556
    %3567 = vmatpush1.msra.mxu0 %v555
    %3568 = vmatprep.subr.mxu0 %v562
    %3569 = vmatpush1.msra.mxu0 %v561
    %3570 = vmatprep.mubr.f32.mxu0 %v3433
    %3571 = vmatmul.mubr.f32.gmra.mrb[0].mxu0 %v3417
    %v3572 = vpop.f32.mrb[0].mxu0
    %v3573 = vadd.f32 %v578, %v3572
    %v3574 = vpop.f32.mrb[0].mxu0
    %v3575 = vadd.f32 %v582, %v3574
    %3576 = vdwg.mxu0
    %3577 = vmatprep.subr.mxu0 %v378
    %3578 = vmatpush1.msra.mxu0 %v377
    %3579 = vmatprep.subr.mxu0 %v384
    %3580 = vmatpush1.msra.mxu0 %v383
    %3581 = vmatprep.subr.mxu0 %v390
    %3582 = vmatpush1.msra.mxu0 %v389
    %3583 = vmatprep.subr.mxu0 %v396
    %3584 = vmatpush1.msra.mxu0 %v395
    %3585 = vmatprep.subr.mxu0 %v402
    %3586 = vmatpush1.msra.mxu0 %v401
    %3587 = vmatprep.subr.mxu0 %v408
    %3588 = vmatpush1.msra.mxu0 %v407
    %3589 = vmatprep.subr.mxu0 %v414
    %3590 = vmatpush1.msra.mxu0 %v413
    %3591 = vmatprep.subr.mxu0 %v420
    %3592 = vmatpush1.msra.mxu0 %v419
    %3593 = vmatprep.subr.mxu0 %v426
    %3594 = vmatpush1.msra.mxu0 %v425
    %3595 = vmatprep.subr.mxu0 %v432
    %3596 = vmatpush1.msra.mxu0 %v431
    %3597 = vmatprep.subr.mxu0 %v438
    %3598 = vmatpush1.msra.mxu0 %v437
    %3599 = vmatprep.subr.mxu0 %v444
    %3600 = vmatpush1.msra.mxu0 %v443
    %3601 = vmatprep.subr.mxu0 %v450
    %3602 = vmatpush1.msra.mxu0 %v449
    %3603 = vmatprep.subr.mxu0 %v456
    %3604 = vmatpush1.msra.mxu0 %v455
    %3605 = vmatprep.subr.mxu0 %v462
    %3606 = vmatpush1.msra.mxu0 %v461
    %3607 = vmatprep.subr.mxu0 %v468
    %3608 = vmatpush1.msra.mxu0 %v467
    %3609 = vmatprep.subr.mxu0 %v474
    %3610 = vmatpush1.msra.mxu0 %v473
    %3611 = vmatprep.subr.mxu0 %v480
    %3612 = vmatpush1.msra.mxu0 %v479
    %3613 = vmatprep.subr.mxu0 %v486
    %3614 = vmatpush1.msra.mxu0 %v485
    %3615 = vmatprep.subr.mxu0 %v492
    %3616 = vmatpush1.msra.mxu0 %v491
    %3617 = vmatprep.subr.mxu0 %v498
    %3618 = vmatpush1.msra.mxu0 %v497
    %3619 = vmatprep.subr.mxu0 %v504
    %3620 = vmatpush1.msra.mxu0 %v503
    %3621 = vmatprep.subr.mxu0 %v510
    %3622 = vmatpush1.msra.mxu0 %v509
    %3623 = vmatprep.subr.mxu0 %v516
    %3624 = vmatpush1.msra.mxu0 %v515
    %3625 = vmatprep.subr.mxu0 %v522
    %3626 = vmatpush1.msra.mxu0 %v521
    %3627 = vmatprep.subr.mxu0 %v528
    %3628 = vmatpush1.msra.mxu0 %v527
    %3629 = vmatprep.subr.mxu0 %v534
    %3630 = vmatpush1.msra.mxu0 %v533
    %3631 = vmatprep.subr.mxu0 %v540
    %3632 = vmatpush1.msra.mxu0 %v539
    %3633 = vmatprep.subr.mxu0 %v546
    %3634 = vmatpush1.msra.mxu0 %v545
    %3635 = vmatprep.subr.mxu0 %v552
    %3636 = vmatpush1.msra.mxu0 %v551
    %3637 = vmatprep.subr.mxu0 %v558
    %3638 = vmatpush1.msra.mxu0 %v557
    %3639 = vmatprep.subr.mxu0 %v564
    %3640 = vmatpush1.msra.mxu0 %v563
    %3641 = vmatprep.mubr.f32.mxu0 %v3433
    %3642 = vmatmul.mubr.f32.gmra.mrb[0].mxu0 %v3417
    %v3643 = vpop.f32.mrb[0].mxu0
    %v3644 = vadd.f32 %v586, %v3643
    %v3645 = vpop.f32.mrb[0].mxu0
    %v3646 = vadd.f32 %v590, %v3645
    %3647 = vdwg.mxu0
    %s3648 = scalar_lea.vmem [#allocation2], 5
    %v3649 = vld [vmem:[%s3648] ss:$8 sm:$0x7]
    %s3650 = scalar_lea.vmem [#allocation2], 53
    %v3651 = vld [vmem:[%s3650] ss:$8 sm:$0x7]
    %s3652 = scalar_lea.vmem [#allocation2], 26
    %v3653 = vld [vmem:[%s3652] ss:$8 sm:$0x7]
    %s3654 = scalar_lea.vmem [#allocation2], 74
    %v3655 = vld [vmem:[%s3654] ss:$8 sm:$0x7]
    %v3658 = vunpack.c.l.s4 1966171168
    %v3659 = vunpack.c.0.s8 %v3658
    %v3660 = vlaneseq
    %v3661 = vshrl.u32 %v3660, 7
    %v3662 = vsub.s32 %v3659, %v3661
    %v3663 = vrot.slane %v3502, %v3662
    %v3664 = vcombine.high %v3663, %v3663
    %v3666 = vunpack.c.l.s4 1966171168
    %v3667 = vunpack.c.0.s8 %v3666
    %v3668 = vlaneseq
    %v3669 = vshrl.u32 %v3668, 7
    %v3670 = vsub.s32 %v3667, %v3669
    %v3671 = vrot.slane %v3663, %v3670
    %v3673 = vunpack.c.l.s4 1966171168
    %v3674 = vunpack.c.0.s8 %v3673
    %v3675 = vlaneseq
    %v3676 = vshrl.u32 %v3675, 7
    %v3677 = vsub.s32 %v3674, %v3676
    %v3678 = vrot.slane %v3664, %v3677
    %v3681 = vadd.f32 %v3649, %v3671
    %v3682 = vadd.f32 %v3651, %v3678
    %v3683 = vxor.u32 %v3681, 2147483648
    %v3684 = vxor.u32 %v3682, 2147483648
    %v3685 = vmul.f32 %v3683, 1.442695
    %v3686 = vpow.pop %v3685
    %v3687 = vmul.f32 %v3684, 1.442695
    %v3688 = vpow.pop %v3687
    %v3689 = vadd.f32 %v3686, 1.0
    %v3690 = vadd.f32 %v3688, 1.0
    %v3691 = vrcp.pop %v3689
    %v3692 = vmul.f32 1.0, %v3691
    %v3693 = vrcp.pop %v3690
    %v3694 = vmul.f32 1.0, %v3693
    %v3697 = vrot.slane %v3649, 1
    %v3698 = vrot.slane %v3651, 1
    %v3703 = vunpack.c.l.s4 1966171168
    %v3704 = vunpack.c.0.s8 %v3703
    %v3705 = vlaneseq
    %v3706 = vshrl.u32 %v3705, 7
    %v3707 = vsub.s32 %v3704, %v3706
    %v3708 = vrot.slane %v3504, %v3707
    %v3709 = vcombine.high %v3708, %v3708
    %v3711 = vunpack.c.l.s4 1966171168
    %v3712 = vunpack.c.0.s8 %v3711
    %v3713 = vlaneseq
    %v3714 = vshrl.u32 %v3713, 7
    %v3715 = vsub.s32 %v3712, %v3714
    %v3716 = vrot.slane %v3708, %v3715
    %v3718 = vunpack.c.l.s4 1966171168
    %v3719 = vunpack.c.0.s8 %v3718
    %v3720 = vlaneseq
    %v3721 = vshrl.u32 %v3720, 7
    %v3722 = vsub.s32 %v3719, %v3721
    %v3723 = vrot.slane %v3709, %v3722
    %v3726 = vadd.f32 %v3697, %v3716
    %v3727 = vadd.f32 %v3698, %v3723
    %v3728 = vxor.u32 %v3726, 2147483648
    %v3729 = vxor.u32 %v3727, 2147483648
    %v3730 = vmul.f32 %v3728, 1.442695
    %v3731 = vpow.pop %v3730
    %v3732 = vmul.f32 %v3729, 1.442695
    %v3733 = vpow.pop %v3732
    %v3734 = vadd.f32 %v3731, 1.0
    %v3735 = vadd.f32 %v3733, 1.0
    %v3736 = vrcp.pop %v3734
    %v3737 = vmul.f32 1.0, %v3736
    %v3738 = vrcp.pop %v3735
    %v3739 = vmul.f32 1.0, %v3738
    %v3742 = vunpack.c.l.s4 1966171168
    %v3743 = vunpack.c.0.s8 %v3742
    %v3744 = vlaneseq
    %v3745 = vshrl.u32 %v3744, 7
    %v3746 = vsub.s32 %v3743, %v3745
    %v3747 = vrot.slane %v3573, %v3746
    %v3748 = vcombine.high %v3747, %v3747
    %v3750 = vunpack.c.l.s4 1966171168
    %v3751 = vunpack.c.0.s8 %v3750
    %v3752 = vlaneseq
    %v3753 = vshrl.u32 %v3752, 7
    %v3754 = vsub.s32 %v3751, %v3753
    %v3755 = vrot.slane %v3747, %v3754
    %v3757 = vunpack.c.l.s4 1966171168
    %v3758 = vunpack.c.0.s8 %v3757
    %v3759 = vlaneseq
    %v3760 = vshrl.u32 %v3759, 7
    %v3761 = vsub.s32 %v3758, %v3760
    %v3762 = vrot.slane %v3748, %v3761
    %v3765 = vmul.f32 %v3692, %v3755
    %v3766 = vmul.f32 %v3694, %v3762
    %v3767 = vrot.slane %v3649, 2
    %v3768 = vrot.slane %v3651, 2
    %v3771 = vadd.f32 %v3767, %v3765
    %v3772 = vadd.f32 %v3768, %v3766
    %v3773 = vtanh.pop %v3771
    %v3774 = vtanh.pop %v3772
    %v3775 = vsub.f32 1.0, %v3737
    %v3776 = vsub.f32 1.0, %v3739
    %v3777 = vmul.f32 %v3775, %v3773
    %v3778 = vmul.f32 %v3776, %v3774
    %v3780 = vunpack.c.l.s4 1966171168
    %v3781 = vunpack.c.0.s8 %v3780
    %v3782 = vlaneseq
    %v3783 = vshrl.u32 %v3782, 7
    %v3784 = vsub.s32 %v3781, %v3783
    %v3785 = vrot.slane %v3417, %v3784
    %v3786 = vcombine.high %v3785, %v3785
    %v3788 = vunpack.c.l.s4 1966171168
    %v3789 = vunpack.c.0.s8 %v3788
    %v3790 = vlaneseq
    %v3791 = vshrl.u32 %v3790, 7
    %v3792 = vsub.s32 %v3789, %v3791
    %v3793 = vrot.slane %v3785, %v3792
    %v3795 = vunpack.c.l.s4 1966171168
    %v3796 = vunpack.c.0.s8 %v3795
    %v3797 = vlaneseq
    %v3798 = vshrl.u32 %v3797, 7
    %v3799 = vsub.s32 %v3796, %v3798
    %v3800 = vrot.slane %v3786, %v3799
    %v3803 = vmul.f32 %v3737, %v3793
    %v3804 = vmul.f32 %v3739, %v3800
    %v3805 = vadd.f32 %v3777, %v3803
    %v3806 = vadd.f32 %v3778, %v3804
    %v3809 = vunpack.c.l.s4 1966171168
    %v3810 = vunpack.c.0.s8 %v3809
    %v3811 = vlaneseq
    %v3812 = vshrl.u32 %v3811, 7
    %v3813 = vsub.s32 %v3810, %v3812
    %v3814 = vrot.slane %v3575, %v3813
    %v3815 = vcombine.high %v3814, %v3814
    %v3817 = vunpack.c.l.s4 1966171168
    %v3818 = vunpack.c.0.s8 %v3817
    %v3819 = vlaneseq
    %v3820 = vshrl.u32 %v3819, 7
    %v3821 = vsub.s32 %v3818, %v3820
    %v3822 = vrot.slane %v3814, %v3821
    %v3824 = vunpack.c.l.s4 1966171168
    %v3825 = vunpack.c.0.s8 %v3824
    %v3826 = vlaneseq
    %v3827 = vshrl.u32 %v3826, 7
    %v3828 = vsub.s32 %v3825, %v3827
    %v3829 = vrot.slane %v3815, %v3828
    %v3832 = vadd.f32 %v3653, %v3822
    %v3833 = vadd.f32 %v3655, %v3829
    %v3834 = vxor.u32 %v3832, 2147483648
    %v3835 = vxor.u32 %v3833, 2147483648
    %v3836 = vmul.f32 %v3834, 1.442695
    %v3837 = vpow.pop %v3836
    %v3838 = vmul.f32 %v3835, 1.442695
    %v3839 = vpow.pop %v3838
    %v3840 = vadd.f32 %v3837, 1.0
    %v3841 = vadd.f32 %v3839, 1.0
    %v3842 = vrcp.pop %v3840
    %v3843 = vmul.f32 1.0, %v3842
    %v3844 = vrcp.pop %v3841
    %v3845 = vmul.f32 1.0, %v3844
    %v3848 = vrot.slane %v3653, 1
    %v3849 = vrot.slane %v3655, 1
    %v3854 = vunpack.c.l.s4 1966171168
    %v3855 = vunpack.c.0.s8 %v3854
    %v3856 = vlaneseq
    %v3857 = vshrl.u32 %v3856, 7
    %v3858 = vsub.s32 %v3855, %v3857
    %v3859 = vrot.slane %v3644, %v3858
    %v3860 = vcombine.high %v3859, %v3859
    %v3862 = vunpack.c.l.s4 1966171168
    %v3863 = vunpack.c.0.s8 %v3862
    %v3864 = vlaneseq
    %v3865 = vshrl.u32 %v3864, 7
    %v3866 = vsub.s32 %v3863, %v3865
    %v3867 = vrot.slane %v3859, %v3866
    %v3869 = vunpack.c.l.s4 1966171168
    %v3870 = vunpack.c.0.s8 %v3869
    %v3871 = vlaneseq
    %v3872 = vshrl.u32 %v3871, 7
    %v3873 = vsub.s32 %v3870, %v3872
    %v3874 = vrot.slane %v3860, %v3873
    %v3877 = vadd.f32 %v3848, %v3867
    %v3878 = vadd.f32 %v3849, %v3874
    %v3879 = vxor.u32 %v3877, 2147483648
    %v3880 = vxor.u32 %v3878, 2147483648
    %v3881 = vmul.f32 %v3879, 1.442695
    %v3882 = vpow.pop %v3881
    %v3883 = vmul.f32 %v3880, 1.442695
    %v3884 = vpow.pop %v3883
    %v3885 = vadd.f32 %v3882, 1.0
    %v3886 = vadd.f32 %v3884, 1.0
    %v3887 = vrcp.pop %v3885
    %v3888 = vmul.f32 1.0, %v3887
    %v3889 = vrcp.pop %v3886
    %v3890 = vmul.f32 1.0, %v3889
    %v3893 = vunpack.c.l.s4 1966171168
    %v3894 = vunpack.c.0.s8 %v3893
    %v3895 = vlaneseq
    %v3896 = vshrl.u32 %v3895, 7
    %v3897 = vsub.s32 %v3894, %v3896
    %v3898 = vrot.slane %v3646, %v3897
    %v3899 = vcombine.high %v3898, %v3898
    %v3901 = vunpack.c.l.s4 1966171168
    %v3902 = vunpack.c.0.s8 %v3901
    %v3903 = vlaneseq
    %v3904 = vshrl.u32 %v3903, 7
    %v3905 = vsub.s32 %v3902, %v3904
    %v3906 = vrot.slane %v3898, %v3905
    %v3908 = vunpack.c.l.s4 1966171168
    %v3909 = vunpack.c.0.s8 %v3908
    %v3910 = vlaneseq
    %v3911 = vshrl.u32 %v3910, 7
    %v3912 = vsub.s32 %v3909, %v3911
    %v3913 = vrot.slane %v3899, %v3912
    %v3916 = vmul.f32 %v3843, %v3906
    %v3917 = vmul.f32 %v3845, %v3913
    %v3918 = vrot.slane %v3653, 2
    %v3919 = vrot.slane %v3655, 2
    %v3922 = vadd.f32 %v3918, %v3916
    %v3923 = vadd.f32 %v3919, %v3917
    %v3924 = vtanh.pop %v3922
    %v3925 = vtanh.pop %v3923
    %v3926 = vsub.f32 1.0, %v3888
    %v3927 = vsub.f32 1.0, %v3890
    %v3928 = vmul.f32 %v3926, %v3924
    %v3929 = vmul.f32 %v3927, %v3925
    %v3931 = vunpack.c.l.s4 1966171168
    %v3932 = vunpack.c.0.s8 %v3931
    %v3933 = vlaneseq
    %v3934 = vshrl.u32 %v3933, 7
    %v3935 = vsub.s32 %v3932, %v3934
    %v3936 = vrot.slane %v3433, %v3935
    %v3937 = vcombine.high %v3936, %v3936
    %v3939 = vunpack.c.l.s4 1966171168
    %v3940 = vunpack.c.0.s8 %v3939
    %v3941 = vlaneseq
    %v3942 = vshrl.u32 %v3941, 7
    %v3943 = vsub.s32 %v3940, %v3942
    %v3944 = vrot.slane %v3936, %v3943
    %v3946 = vunpack.c.l.s4 1966171168
    %v3947 = vunpack.c.0.s8 %v3946
    %v3948 = vlaneseq
    %v3949 = vshrl.u32 %v3948, 7
    %v3950 = vsub.s32 %v3947, %v3949
    %v3951 = vrot.slane %v3937, %v3950
    %v3954 = vmul.f32 %v3888, %v3944
    %v3955 = vmul.f32 %v3890, %v3951
    %v3956 = vadd.f32 %v3928, %v3954
    %v3957 = vadd.f32 %v3929, %v3955
    %3958 = vst.msk [vmem:[#allocation9 + $0x5] sm:$0x1] %vm1071, %v3805
    %3959 = vst.msk [vmem:[#allocation9 + $0xd] sm:$0x1] %vm1071, %v3806
    %v3962 = vlaneseq
    %v3963 = vshrl.u32 %v3962, 7
    %v3964 = vsub.s32 0, %v3963
    %v3965 = vrot.slane %v3956, %v3964
    %v3966 = vlaneseq
    %v3967 = vshrl.u32 %v3966, 7
    %v3968 = vsub.s32 0, %v3967
    %v3969 = vrot.slane %v3957, %v3968
    %3970 = vrot.lane.b32.xlu0 %v3965, 32
    %v3971 = vpop.permute.xlu0 %3970
    %3972 = vrot.lane.b32.xlu0 %v3969, 32
    %v3973 = vpop.permute.xlu0 %3972
    %3976 = vst.msk [vmem:[#allocation9 + $0x2] sm:$0x1] %vm1090, %v3971
    %3977 = vst.msk [vmem:[#allocation9 + $0xa] sm:$0x1] %vm1090, %v3973
    %v3980 = vcombine.low %v3805, %v3806
    %v3982 = vunpack.c.l.s4 1966171168
    %v3983 = vunpack.c.0.s8 %v3982
    %v3984 = vlaneseq
    %v3985 = vshrl.u32 %v3984, 7
    %v3986 = vsub.s32 %v3983, %v3985
    %v3987 = vrot.slane %v3980, %v3986
    %v3989 = vunpack.c.l.s4 1966171168
    %v3990 = vunpack.c.0.s8 %v3989
    %v3991 = vlaneseq
    %v3992 = vshrl.u32 %v3991, 7
    %v3993 = vsub.s32 %v3990, %v3992
    %v3994 = vrot.slane %v3987, %v3993
    %v3996 = vcombine.low %v3956, %v3957
    %v3998 = vunpack.c.l.s4 1966171168
    %v3999 = vunpack.c.0.s8 %v3998
    %v4000 = vlaneseq
    %v4001 = vshrl.u32 %v4000, 7
    %v4002 = vsub.s32 %v3999, %v4001
    %v4003 = vrot.slane %v3996, %v4002
    %v4005 = vunpack.c.l.s4 1966171168
    %v4006 = vunpack.c.0.s8 %v4005
    %v4007 = vlaneseq
    %v4008 = vshrl.u32 %v4007, 7
    %v4009 = vsub.s32 %v4006, %v4008
    %v4010 = vrot.slane %v4003, %v4009
    %4012 = vmatprep.subr.mxu0 %v374
    %4013 = vmatpush1.msra.mxu0 %v373
    %4014 = vmatprep.subr.mxu0 %v380
    %4015 = vmatpush1.msra.mxu0 %v379
    %4016 = vmatprep.subr.mxu0 %v386
    %4017 = vmatpush1.msra.mxu0 %v385
    %4018 = vmatprep.subr.mxu0 %v392
    %4019 = vmatpush1.msra.mxu0 %v391
    %4020 = vmatprep.subr.mxu0 %v398
    %4021 = vmatpush1.msra.mxu0 %v397
    %4022 = vmatprep.subr.mxu0 %v404
    %4023 = vmatpush1.msra.mxu0 %v403
    %4024 = vmatprep.subr.mxu0 %v410
    %4025 = vmatpush1.msra.mxu0 %v409
    %4026 = vmatprep.subr.mxu0 %v416
    %4027 = vmatpush1.msra.mxu0 %v415
    %4028 = vmatprep.subr.mxu0 %v422
    %4029 = vmatpush1.msra.mxu0 %v421
    %4030 = vmatprep.subr.mxu0 %v428
    %4031 = vmatpush1.msra.mxu0 %v427
    %4032 = vmatprep.subr.mxu0 %v434
    %4033 = vmatpush1.msra.mxu0 %v433
    %4034 = vmatprep.subr.mxu0 %v440
    %4035 = vmatpush1.msra.mxu0 %v439
    %4036 = vmatprep.subr.mxu0 %v446
    %4037 = vmatpush1.msra.mxu0 %v445
    %4038 = vmatprep.subr.mxu0 %v452
    %4039 = vmatpush1.msra.mxu0 %v451
    %4040 = vmatprep.subr.mxu0 %v458
    %4041 = vmatpush1.msra.mxu0 %v457
    %4042 = vmatprep.subr.mxu0 %v464
    %4043 = vmatpush1.msra.mxu0 %v463
    %4044 = vmatprep.subr.mxu0 %v470
    %4045 = vmatpush1.msra.mxu0 %v469
    %4046 = vmatprep.subr.mxu0 %v476
    %4047 = vmatpush1.msra.mxu0 %v475
    %4048 = vmatprep.subr.mxu0 %v482
    %4049 = vmatpush1.msra.mxu0 %v481
    %4050 = vmatprep.subr.mxu0 %v488
    %4051 = vmatpush1.msra.mxu0 %v487
    %4052 = vmatprep.subr.mxu0 %v494
    %4053 = vmatpush1.msra.mxu0 %v493
    %4054 = vmatprep.subr.mxu0 %v500
    %4055 = vmatpush1.msra.mxu0 %v499
    %4056 = vmatprep.subr.mxu0 %v506
    %4057 = vmatpush1.msra.mxu0 %v505
    %4058 = vmatprep.subr.mxu0 %v512
    %4059 = vmatpush1.msra.mxu0 %v511
    %4060 = vmatprep.subr.mxu0 %v518
    %4061 = vmatpush1.msra.mxu0 %v517
    %4062 = vmatprep.subr.mxu0 %v524
    %4063 = vmatpush1.msra.mxu0 %v523
    %4064 = vmatprep.subr.mxu0 %v530
    %4065 = vmatpush1.msra.mxu0 %v529
    %4066 = vmatprep.subr.mxu0 %v536
    %4067 = vmatpush1.msra.mxu0 %v535
    %4068 = vmatprep.subr.mxu0 %v542
    %4069 = vmatpush1.msra.mxu0 %v541
    %4070 = vmatprep.subr.mxu0 %v548
    %4071 = vmatpush1.msra.mxu0 %v547
    %4072 = vmatprep.subr.mxu0 %v554
    %4073 = vmatpush1.msra.mxu0 %v553
    %4074 = vmatprep.subr.mxu0 %v560
    %4075 = vmatpush1.msra.mxu0 %v559
    %4076 = vmatprep.mubr.f32.mxu0 %v4010
    %4077 = vmatmul.mubr.f32.gmra.mrb[0].mxu0 %v3994
    %v4078 = vpop.f32.mrb[0].mxu0
    %v4079 = vadd.f32 %v570, %v4078
    %v4080 = vpop.f32.mrb[0].mxu0
    %v4081 = vadd.f32 %v574, %v4080
    %4082 = vdwg.mxu0
    %4083 = vmatprep.subr.mxu0 %v376
    %4084 = vmatpush1.msra.mxu0 %v375
    %4085 = vmatprep.subr.mxu0 %v382
    %4086 = vmatpush1.msra.mxu0 %v381
    %4087 = vmatprep.subr.mxu0 %v388
    %4088 = vmatpush1.msra.mxu0 %v387
    %4089 = vmatprep.subr.mxu0 %v394
    %4090 = vmatpush1.msra.mxu0 %v393
    %4091 = vmatprep.subr.mxu0 %v400
    %4092 = vmatpush1.msra.mxu0 %v399
    %4093 = vmatprep.subr.mxu0 %v406
    %4094 = vmatpush1.msra.mxu0 %v405
    %4095 = vmatprep.subr.mxu0 %v412
    %4096 = vmatpush1.msra.mxu0 %v411
    %4097 = vmatprep.subr.mxu0 %v418
    %4098 = vmatpush1.msra.mxu0 %v417
    %4099 = vmatprep.subr.mxu0 %v424
    %4100 = vmatpush1.msra.mxu0 %v423
    %4101 = vmatprep.subr.mxu0 %v430
    %4102 = vmatpush1.msra.mxu0 %v429
    %4103 = vmatprep.subr.mxu0 %v436
    %4104 = vmatpush1.msra.mxu0 %v435
    %4105 = vmatprep.subr.mxu0 %v442
    %4106 = vmatpush1.msra.mxu0 %v441
    %4107 = vmatprep.subr.mxu0 %v448
    %4108 = vmatpush1.msra.mxu0 %v447
    %4109 = vmatprep.subr.mxu0 %v454
    %4110 = vmatpush1.msra.mxu0 %v453
    %4111 = vmatprep.subr.mxu0 %v460
    %4112 = vmatpush1.msra.mxu0 %v459
    %4113 = vmatprep.subr.mxu0 %v466
    %4114 = vmatpush1.msra.mxu0 %v465
    %4115 = vmatprep.subr.mxu0 %v472
    %4116 = vmatpush1.msra.mxu0 %v471
    %4117 = vmatprep.subr.mxu0 %v478
    %4118 = vmatpush1.msra.mxu0 %v477
    %4119 = vmatprep.subr.mxu0 %v484
    %4120 = vmatpush1.msra.mxu0 %v483
    %4121 = vmatprep.subr.mxu0 %v490
    %4122 = vmatpush1.msra.mxu0 %v489
    %4123 = vmatprep.subr.mxu0 %v496
    %4124 = vmatpush1.msra.mxu0 %v495
    %4125 = vmatprep.subr.mxu0 %v502
    %4126 = vmatpush1.msra.mxu0 %v501
    %4127 = vmatprep.subr.mxu0 %v508
    %4128 = vmatpush1.msra.mxu0 %v507
    %4129 = vmatprep.subr.mxu0 %v514
    %4130 = vmatpush1.msra.mxu0 %v513
    %4131 = vmatprep.subr.mxu0 %v520
    %4132 = vmatpush1.msra.mxu0 %v519
    %4133 = vmatprep.subr.mxu0 %v526
    %4134 = vmatpush1.msra.mxu0 %v525
    %4135 = vmatprep.subr.mxu0 %v532
    %4136 = vmatpush1.msra.mxu0 %v531
    %4137 = vmatprep.subr.mxu0 %v538
    %4138 = vmatpush1.msra.mxu0 %v537
    %4139 = vmatprep.subr.mxu0 %v544
    %4140 = vmatpush1.msra.mxu0 %v543
    %4141 = vmatprep.subr.mxu0 %v550
    %4142 = vmatpush1.msra.mxu0 %v549
    %4143 = vmatprep.subr.mxu0 %v556
    %4144 = vmatpush1.msra.mxu0 %v555
    %4145 = vmatprep.subr.mxu0 %v562
    %4146 = vmatpush1.msra.mxu0 %v561
    %4147 = vmatprep.mubr.f32.mxu0 %v4010
    %4148 = vmatmul.mubr.f32.gmra.mrb[0].mxu0 %v3994
    %v4149 = vpop.f32.mrb[0].mxu0
    %v4150 = vadd.f32 %v578, %v4149
    %v4151 = vpop.f32.mrb[0].mxu0
    %v4152 = vadd.f32 %v582, %v4151
    %4153 = vdwg.mxu0
    %4154 = vmatprep.subr.mxu0 %v378
    %4155 = vmatpush1.msra.mxu0 %v377
    %4156 = vmatprep.subr.mxu0 %v384
    %4157 = vmatpush1.msra.mxu0 %v383
    %4158 = vmatprep.subr.mxu0 %v390
    %4159 = vmatpush1.msra.mxu0 %v389
    %4160 = vmatprep.subr.mxu0 %v396
    %4161 = vmatpush1.msra.mxu0 %v395
    %4162 = vmatprep.subr.mxu0 %v402
    %4163 = vmatpush1.msra.mxu0 %v401
    %4164 = vmatprep.subr.mxu0 %v408
    %4165 = vmatpush1.msra.mxu0 %v407
    %4166 = vmatprep.subr.mxu0 %v414
    %4167 = vmatpush1.msra.mxu0 %v413
    %4168 = vmatprep.subr.mxu0 %v420
    %4169 = vmatpush1.msra.mxu0 %v419
    %4170 = vmatprep.subr.mxu0 %v426
    %4171 = vmatpush1.msra.mxu0 %v425
    %4172 = vmatprep.subr.mxu0 %v432
    %4173 = vmatpush1.msra.mxu0 %v431
    %4174 = vmatprep.subr.mxu0 %v438
    %4175 = vmatpush1.msra.mxu0 %v437
    %4176 = vmatprep.subr.mxu0 %v444
    %4177 = vmatpush1.msra.mxu0 %v443
    %4178 = vmatprep.subr.mxu0 %v450
    %4179 = vmatpush1.msra.mxu0 %v449
    %4180 = vmatprep.subr.mxu0 %v456
    %4181 = vmatpush1.msra.mxu0 %v455
    %4182 = vmatprep.subr.mxu0 %v462
    %4183 = vmatpush1.msra.mxu0 %v461
    %4184 = vmatprep.subr.mxu0 %v468
    %4185 = vmatpush1.msra.mxu0 %v467
    %4186 = vmatprep.subr.mxu0 %v474
    %4187 = vmatpush1.msra.mxu0 %v473
    %4188 = vmatprep.subr.mxu0 %v480
    %4189 = vmatpush1.msra.mxu0 %v479
    %4190 = vmatprep.subr.mxu0 %v486
    %4191 = vmatpush1.msra.mxu0 %v485
    %4192 = vmatprep.subr.mxu0 %v492
    %4193 = vmatpush1.msra.mxu0 %v491
    %4194 = vmatprep.subr.mxu0 %v498
    %4195 = vmatpush1.msra.mxu0 %v497
    %4196 = vmatprep.subr.mxu0 %v504
    %4197 = vmatpush1.msra.mxu0 %v503
    %4198 = vmatprep.subr.mxu0 %v510
    %4199 = vmatpush1.msra.mxu0 %v509
    %4200 = vmatprep.subr.mxu0 %v516
    %4201 = vmatpush1.msra.mxu0 %v515
    %4202 = vmatprep.subr.mxu0 %v522
    %4203 = vmatpush1.msra.mxu0 %v521
    %4204 = vmatprep.subr.mxu0 %v528
    %4205 = vmatpush1.msra.mxu0 %v527
    %4206 = vmatprep.subr.mxu0 %v534
    %4207 = vmatpush1.msra.mxu0 %v533
    %4208 = vmatprep.subr.mxu0 %v540
    %4209 = vmatpush1.msra.mxu0 %v539
    %4210 = vmatprep.subr.mxu0 %v546
    %4211 = vmatpush1.msra.mxu0 %v545
    %4212 = vmatprep.subr.mxu0 %v552
    %4213 = vmatpush1.msra.mxu0 %v551
    %4214 = vmatprep.subr.mxu0 %v558
    %4215 = vmatpush1.msra.mxu0 %v557
    %4216 = vmatprep.subr.mxu0 %v564
    %4217 = vmatpush1.msra.mxu0 %v563
    %4218 = vmatprep.mubr.f32.mxu0 %v4010
    %4219 = vmatmul.mubr.f32.gmra.mrb[0].mxu0 %v3994
    %v4220 = vpop.f32.mrb[0].mxu0
    %v4221 = vadd.f32 %v586, %v4220
    %v4222 = vpop.f32.mrb[0].mxu0
    %v4223 = vadd.f32 %v590, %v4222
    %4224 = vdwg.mxu0
    %s4225 = scalar_lea.vmem [#allocation2], 6
    %v4226 = vld [vmem:[%s4225] ss:$8 sm:$0x7]
    %s4227 = scalar_lea.vmem [#allocation2], 54
    %v4228 = vld [vmem:[%s4227] ss:$8 sm:$0x7]
    %s4229 = scalar_lea.vmem [#allocation2], 25
    %v4230 = vld [vmem:[%s4229] ss:$8 sm:$0x7]
    %s4231 = scalar_lea.vmem [#allocation2], 73
    %v4232 = vld [vmem:[%s4231] ss:$8 sm:$0x7]
    %v4235 = vunpack.c.l.s4 1966171168
    %v4236 = vunpack.c.0.s8 %v4235
    %v4237 = vlaneseq
    %v4238 = vshrl.u32 %v4237, 7
    %v4239 = vsub.s32 %v4236, %v4238
    %v4240 = vrot.slane %v4079, %v4239
    %v4241 = vcombine.high %v4240, %v4240
    %v4243 = vunpack.c.l.s4 1966171168
    %v4244 = vunpack.c.0.s8 %v4243
    %v4245 = vlaneseq
    %v4246 = vshrl.u32 %v4245, 7
    %v4247 = vsub.s32 %v4244, %v4246
    %v4248 = vrot.slane %v4240, %v4247
    %v4250 = vunpack.c.l.s4 1966171168
    %v4251 = vunpack.c.0.s8 %v4250
    %v4252 = vlaneseq
    %v4253 = vshrl.u32 %v4252, 7
    %v4254 = vsub.s32 %v4251, %v4253
    %v4255 = vrot.slane %v4241, %v4254
    %v4258 = vadd.f32 %v4226, %v4248
    %v4259 = vadd.f32 %v4228, %v4255
    %v4260 = vxor.u32 %v4258, 2147483648
    %v4261 = vxor.u32 %v4259, 2147483648
    %v4262 = vmul.f32 %v4260, 1.442695
    %v4263 = vpow.pop %v4262
    %v4264 = vmul.f32 %v4261, 1.442695
    %v4265 = vpow.pop %v4264
    %v4266 = vadd.f32 %v4263, 1.0
    %v4267 = vadd.f32 %v4265, 1.0
    %v4268 = vrcp.pop %v4266
    %v4269 = vmul.f32 1.0, %v4268
    %v4270 = vrcp.pop %v4267
    %v4271 = vmul.f32 1.0, %v4270
    %v4274 = vrot.slane %v4226, 1
    %v4275 = vrot.slane %v4228, 1
    %v4280 = vunpack.c.l.s4 1966171168
    %v4281 = vunpack.c.0.s8 %v4280
    %v4282 = vlaneseq
    %v4283 = vshrl.u32 %v4282, 7
    %v4284 = vsub.s32 %v4281, %v4283
    %v4285 = vrot.slane %v4081, %v4284
    %v4286 = vcombine.high %v4285, %v4285
    %v4288 = vunpack.c.l.s4 1966171168
    %v4289 = vunpack.c.0.s8 %v4288
    %v4290 = vlaneseq
    %v4291 = vshrl.u32 %v4290, 7
    %v4292 = vsub.s32 %v4289, %v4291
    %v4293 = vrot.slane %v4285, %v4292
    %v4295 = vunpack.c.l.s4 1966171168
    %v4296 = vunpack.c.0.s8 %v4295
    %v4297 = vlaneseq
    %v4298 = vshrl.u32 %v4297, 7
    %v4299 = vsub.s32 %v4296, %v4298
    %v4300 = vrot.slane %v4286, %v4299
    %v4303 = vadd.f32 %v4274, %v4293
    %v4304 = vadd.f32 %v4275, %v4300
    %v4305 = vxor.u32 %v4303, 2147483648
    %v4306 = vxor.u32 %v4304, 2147483648
    %v4307 = vmul.f32 %v4305, 1.442695
    %v4308 = vpow.pop %v4307
    %v4309 = vmul.f32 %v4306, 1.442695
    %v4310 = vpow.pop %v4309
    %v4311 = vadd.f32 %v4308, 1.0
    %v4312 = vadd.f32 %v4310, 1.0
    %v4313 = vrcp.pop %v4311
    %v4314 = vmul.f32 1.0, %v4313
    %v4315 = vrcp.pop %v4312
    %v4316 = vmul.f32 1.0, %v4315
    %v4319 = vunpack.c.l.s4 1966171168
    %v4320 = vunpack.c.0.s8 %v4319
    %v4321 = vlaneseq
    %v4322 = vshrl.u32 %v4321, 7
    %v4323 = vsub.s32 %v4320, %v4322
    %v4324 = vrot.slane %v4150, %v4323
    %v4325 = vcombine.high %v4324, %v4324
    %v4327 = vunpack.c.l.s4 1966171168
    %v4328 = vunpack.c.0.s8 %v4327
    %v4329 = vlaneseq
    %v4330 = vshrl.u32 %v4329, 7
    %v4331 = vsub.s32 %v4328, %v4330
    %v4332 = vrot.slane %v4324, %v4331
    %v4334 = vunpack.c.l.s4 1966171168
    %v4335 = vunpack.c.0.s8 %v4334
    %v4336 = vlaneseq
    %v4337 = vshrl.u32 %v4336, 7
    %v4338 = vsub.s32 %v4335, %v4337
    %v4339 = vrot.slane %v4325, %v4338
    %v4342 = vmul.f32 %v4269, %v4332
    %v4343 = vmul.f32 %v4271, %v4339
    %v4344 = vrot.slane %v4226, 2
    %v4345 = vrot.slane %v4228, 2
    %v4348 = vadd.f32 %v4344, %v4342
    %v4349 = vadd.f32 %v4345, %v4343
    %v4350 = vtanh.pop %v4348
    %v4351 = vtanh.pop %v4349
    %v4352 = vsub.f32 1.0, %v4314
    %v4353 = vsub.f32 1.0, %v4316
    %v4354 = vmul.f32 %v4352, %v4350
    %v4355 = vmul.f32 %v4353, %v4351
    %v4357 = vunpack.c.l.s4 1966171168
    %v4358 = vunpack.c.0.s8 %v4357
    %v4359 = vlaneseq
    %v4360 = vshrl.u32 %v4359, 7
    %v4361 = vsub.s32 %v4358, %v4360
    %v4362 = vrot.slane %v3994, %v4361
    %v4363 = vcombine.high %v4362, %v4362
    %v4365 = vunpack.c.l.s4 1966171168
    %v4366 = vunpack.c.0.s8 %v4365
    %v4367 = vlaneseq
    %v4368 = vshrl.u32 %v4367, 7
    %v4369 = vsub.s32 %v4366, %v4368
    %v4370 = vrot.slane %v4362, %v4369
    %v4372 = vunpack.c.l.s4 1966171168
    %v4373 = vunpack.c.0.s8 %v4372
    %v4374 = vlaneseq
    %v4375 = vshrl.u32 %v4374, 7
    %v4376 = vsub.s32 %v4373, %v4375
    %v4377 = vrot.slane %v4363, %v4376
    %v4380 = vmul.f32 %v4314, %v4370
    %v4381 = vmul.f32 %v4316, %v4377
    %v4382 = vadd.f32 %v4354, %v4380
    %v4383 = vadd.f32 %v4355, %v4381
    %v4386 = vunpack.c.l.s4 1966171168
    %v4387 = vunpack.c.0.s8 %v4386
    %v4388 = vlaneseq
    %v4389 = vshrl.u32 %v4388, 7
    %v4390 = vsub.s32 %v4387, %v4389
    %v4391 = vrot.slane %v4152, %v4390
    %v4392 = vcombine.high %v4391, %v4391
    %v4394 = vunpack.c.l.s4 1966171168
    %v4395 = vunpack.c.0.s8 %v4394
    %v4396 = vlaneseq
    %v4397 = vshrl.u32 %v4396, 7
    %v4398 = vsub.s32 %v4395, %v4397
    %v4399 = vrot.slane %v4391, %v4398
    %v4401 = vunpack.c.l.s4 1966171168
    %v4402 = vunpack.c.0.s8 %v4401
    %v4403 = vlaneseq
    %v4404 = vshrl.u32 %v4403, 7
    %v4405 = vsub.s32 %v4402, %v4404
    %v4406 = vrot.slane %v4392, %v4405
    %v4409 = vadd.f32 %v4230, %v4399
    %v4410 = vadd.f32 %v4232, %v4406
    %v4411 = vxor.u32 %v4409, 2147483648
    %v4412 = vxor.u32 %v4410, 2147483648
    %v4413 = vmul.f32 %v4411, 1.442695
    %v4414 = vpow.pop %v4413
    %v4415 = vmul.f32 %v4412, 1.442695
    %v4416 = vpow.pop %v4415
    %v4417 = vadd.f32 %v4414, 1.0
    %v4418 = vadd.f32 %v4416, 1.0
    %v4419 = vrcp.pop %v4417
    %v4420 = vmul.f32 1.0, %v4419
    %v4421 = vrcp.pop %v4418
    %v4422 = vmul.f32 1.0, %v4421
    %v4425 = vrot.slane %v4230, 1
    %v4426 = vrot.slane %v4232, 1
    %v4431 = vunpack.c.l.s4 1966171168
    %v4432 = vunpack.c.0.s8 %v4431
    %v4433 = vlaneseq
    %v4434 = vshrl.u32 %v4433, 7
    %v4435 = vsub.s32 %v4432, %v4434
    %v4436 = vrot.slane %v4221, %v4435
    %v4437 = vcombine.high %v4436, %v4436
    %v4439 = vunpack.c.l.s4 1966171168
    %v4440 = vunpack.c.0.s8 %v4439
    %v4441 = vlaneseq
    %v4442 = vshrl.u32 %v4441, 7
    %v4443 = vsub.s32 %v4440, %v4442
    %v4444 = vrot.slane %v4436, %v4443
    %v4446 = vunpack.c.l.s4 1966171168
    %v4447 = vunpack.c.0.s8 %v4446
    %v4448 = vlaneseq
    %v4449 = vshrl.u32 %v4448, 7
    %v4450 = vsub.s32 %v4447, %v4449
    %v4451 = vrot.slane %v4437, %v4450
    %v4454 = vadd.f32 %v4425, %v4444
    %v4455 = vadd.f32 %v4426, %v4451
    %v4456 = vxor.u32 %v4454, 2147483648
    %v4457 = vxor.u32 %v4455, 2147483648
    %v4458 = vmul.f32 %v4456, 1.442695
    %v4459 = vpow.pop %v4458
    %v4460 = vmul.f32 %v4457, 1.442695
    %v4461 = vpow.pop %v4460
    %v4462 = vadd.f32 %v4459, 1.0
    %v4463 = vadd.f32 %v4461, 1.0
    %v4464 = vrcp.pop %v4462
    %v4465 = vmul.f32 1.0, %v4464
    %v4466 = vrcp.pop %v4463
    %v4467 = vmul.f32 1.0, %v4466
    %v4470 = vunpack.c.l.s4 1966171168
    %v4471 = vunpack.c.0.s8 %v4470
    %v4472 = vlaneseq
    %v4473 = vshrl.u32 %v4472, 7
    %v4474 = vsub.s32 %v4471, %v4473
    %v4475 = vrot.slane %v4223, %v4474
    %v4476 = vcombine.high %v4475, %v4475
    %v4478 = vunpack.c.l.s4 1966171168
    %v4479 = vunpack.c.0.s8 %v4478
    %v4480 = vlaneseq
    %v4481 = vshrl.u32 %v4480, 7
    %v4482 = vsub.s32 %v4479, %v4481
    %v4483 = vrot.slane %v4475, %v4482
    %v4485 = vunpack.c.l.s4 1966171168
    %v4486 = vunpack.c.0.s8 %v4485
    %v4487 = vlaneseq
    %v4488 = vshrl.u32 %v4487, 7
    %v4489 = vsub.s32 %v4486, %v4488
    %v4490 = vrot.slane %v4476, %v4489
    %v4493 = vmul.f32 %v4420, %v4483
    %v4494 = vmul.f32 %v4422, %v4490
    %v4495 = vrot.slane %v4230, 2
    %v4496 = vrot.slane %v4232, 2
    %v4499 = vadd.f32 %v4495, %v4493
    %v4500 = vadd.f32 %v4496, %v4494
    %v4501 = vtanh.pop %v4499
    %v4502 = vtanh.pop %v4500
    %v4503 = vsub.f32 1.0, %v4465
    %v4504 = vsub.f32 1.0, %v4467
    %v4505 = vmul.f32 %v4503, %v4501
    %v4506 = vmul.f32 %v4504, %v4502
    %v4508 = vunpack.c.l.s4 1966171168
    %v4509 = vunpack.c.0.s8 %v4508
    %v4510 = vlaneseq
    %v4511 = vshrl.u32 %v4510, 7
    %v4512 = vsub.s32 %v4509, %v4511
    %v4513 = vrot.slane %v4010, %v4512
    %v4514 = vcombine.high %v4513, %v4513
    %v4516 = vunpack.c.l.s4 1966171168
    %v4517 = vunpack.c.0.s8 %v4516
    %v4518 = vlaneseq
    %v4519 = vshrl.u32 %v4518, 7
    %v4520 = vsub.s32 %v4517, %v4519
    %v4521 = vrot.slane %v4513, %v4520
    %v4523 = vunpack.c.l.s4 1966171168
    %v4524 = vunpack.c.0.s8 %v4523
    %v4525 = vlaneseq
    %v4526 = vshrl.u32 %v4525, 7
    %v4527 = vsub.s32 %v4524, %v4526
    %v4528 = vrot.slane %v4514, %v4527
    %v4531 = vmul.f32 %v4465, %v4521
    %v4532 = vmul.f32 %v4467, %v4528
    %v4533 = vadd.f32 %v4505, %v4531
    %v4534 = vadd.f32 %v4506, %v4532
    %4535 = vst.msk [vmem:[#allocation9 + $0x6] sm:$0x1] %vm1071, %v4382
    %4536 = vst.msk [vmem:[#allocation9 + $0xe] sm:$0x1] %vm1071, %v4383
    %v4539 = vlaneseq
    %v4540 = vshrl.u32 %v4539, 7
    %v4541 = vsub.s32 0, %v4540
    %v4542 = vrot.slane %v4533, %v4541
    %v4543 = vlaneseq
    %v4544 = vshrl.u32 %v4543, 7
    %v4545 = vsub.s32 0, %v4544
    %v4546 = vrot.slane %v4534, %v4545
    %4547 = vrot.lane.b32.xlu0 %v4542, 32
    %v4548 = vpop.permute.xlu0 %4547
    %4549 = vrot.lane.b32.xlu0 %v4546, 32
    %v4550 = vpop.permute.xlu0 %4549
    %4553 = vst.msk [vmem:[#allocation9 + $0x1] sm:$0x1] %vm1090, %v4548
    %4554 = vst.msk [vmem:[#allocation9 + $0x9] sm:$0x1] %vm1090, %v4550
    %v4557 = vcombine.low %v4382, %v4383
    %v4559 = vunpack.c.l.s4 1966171168
    %v4560 = vunpack.c.0.s8 %v4559
    %v4561 = vlaneseq
    %v4562 = vshrl.u32 %v4561, 7
    %v4563 = vsub.s32 %v4560, %v4562
    %v4564 = vrot.slane %v4557, %v4563
    %v4566 = vunpack.c.l.s4 1966171168
    %v4567 = vunpack.c.0.s8 %v4566
    %v4568 = vlaneseq
    %v4569 = vshrl.u32 %v4568, 7
    %v4570 = vsub.s32 %v4567, %v4569
    %v4571 = vrot.slane %v4564, %v4570
    %v4573 = vcombine.low %v4533, %v4534
    %v4575 = vunpack.c.l.s4 1966171168
    %v4576 = vunpack.c.0.s8 %v4575
    %v4577 = vlaneseq
    %v4578 = vshrl.u32 %v4577, 7
    %v4579 = vsub.s32 %v4576, %v4578
    %v4580 = vrot.slane %v4573, %v4579
    %v4582 = vunpack.c.l.s4 1966171168
    %v4583 = vunpack.c.0.s8 %v4582
    %v4584 = vlaneseq
    %v4585 = vshrl.u32 %v4584, 7
    %v4586 = vsub.s32 %v4583, %v4585
    %v4587 = vrot.slane %v4580, %v4586
    %4589 = vmatprep.subr.mxu0 %v374
    %4590 = vmatpush1.msra.mxu0 %v373
    %4591 = vmatprep.subr.mxu0 %v380
    %4592 = vmatpush1.msra.mxu0 %v379
    %4593 = vmatprep.subr.mxu0 %v386
    %4594 = vmatpush1.msra.mxu0 %v385
    %4595 = vmatprep.subr.mxu0 %v392
    %4596 = vmatpush1.msra.mxu0 %v391
    %4597 = vmatprep.subr.mxu0 %v398
    %4598 = vmatpush1.msra.mxu0 %v397
    %4599 = vmatprep.subr.mxu0 %v404
    %4600 = vmatpush1.msra.mxu0 %v403
    %4601 = vmatprep.subr.mxu0 %v410
    %4602 = vmatpush1.msra.mxu0 %v409
    %4603 = vmatprep.subr.mxu0 %v416
    %4604 = vmatpush1.msra.mxu0 %v415
    %4605 = vmatprep.subr.mxu0 %v422
    %4606 = vmatpush1.msra.mxu0 %v421
    %4607 = vmatprep.subr.mxu0 %v428
    %4608 = vmatpush1.msra.mxu0 %v427
    %4609 = vmatprep.subr.mxu0 %v434
    %4610 = vmatpush1.msra.mxu0 %v433
    %4611 = vmatprep.subr.mxu0 %v440
    %4612 = vmatpush1.msra.mxu0 %v439
    %4613 = vmatprep.subr.mxu0 %v446
    %4614 = vmatpush1.msra.mxu0 %v445
    %4615 = vmatprep.subr.mxu0 %v452
    %4616 = vmatpush1.msra.mxu0 %v451
    %4617 = vmatprep.subr.mxu0 %v458
    %4618 = vmatpush1.msra.mxu0 %v457
    %4619 = vmatprep.subr.mxu0 %v464
    %4620 = vmatpush1.msra.mxu0 %v463
    %4621 = vmatprep.subr.mxu0 %v470
    %4622 = vmatpush1.msra.mxu0 %v469
    %4623 = vmatprep.subr.mxu0 %v476
    %4624 = vmatpush1.msra.mxu0 %v475
    %4625 = vmatprep.subr.mxu0 %v482
    %4626 = vmatpush1.msra.mxu0 %v481
    %4627 = vmatprep.subr.mxu0 %v488
    %4628 = vmatpush1.msra.mxu0 %v487
    %4629 = vmatprep.subr.mxu0 %v494
    %4630 = vmatpush1.msra.mxu0 %v493
    %4631 = vmatprep.subr.mxu0 %v500
    %4632 = vmatpush1.msra.mxu0 %v499
    %4633 = vmatprep.subr.mxu0 %v506
    %4634 = vmatpush1.msra.mxu0 %v505
    %4635 = vmatprep.subr.mxu0 %v512
    %4636 = vmatpush1.msra.mxu0 %v511
    %4637 = vmatprep.subr.mxu0 %v518
    %4638 = vmatpush1.msra.mxu0 %v517
    %4639 = vmatprep.subr.mxu0 %v524
    %4640 = vmatpush1.msra.mxu0 %v523
    %4641 = vmatprep.subr.mxu0 %v530
    %4642 = vmatpush1.msra.mxu0 %v529
    %4643 = vmatprep.subr.mxu0 %v536
    %4644 = vmatpush1.msra.mxu0 %v535
    %4645 = vmatprep.subr.mxu0 %v542
    %4646 = vmatpush1.msra.mxu0 %v541
    %4647 = vmatprep.subr.mxu0 %v548
    %4648 = vmatpush1.msra.mxu0 %v547
    %4649 = vmatprep.subr.mxu0 %v554
    %4650 = vmatpush1.msra.mxu0 %v553
    %4651 = vmatprep.subr.mxu0 %v560
    %4652 = vmatpush1.msra.mxu0 %v559
    %4653 = vmatprep.mubr.f32.mxu0 %v4587
    %4654 = vmatmul.mubr.f32.gmra.mrb[0].mxu0 %v4571
    %v4655 = vpop.f32.mrb[0].mxu0
    %v4656 = vadd.f32 %v570, %v4655
    %v4657 = vpop.f32.mrb[0].mxu0
    %v4658 = vadd.f32 %v574, %v4657
    %4659 = vdwg.mxu0
    %4660 = vmatprep.subr.mxu0 %v376
    %4661 = vmatpush1.msra.mxu0 %v375
    %4662 = vmatprep.subr.mxu0 %v382
    %4663 = vmatpush1.msra.mxu0 %v381
    %4664 = vmatprep.subr.mxu0 %v388
    %4665 = vmatpush1.msra.mxu0 %v387
    %4666 = vmatprep.subr.mxu0 %v394
    %4667 = vmatpush1.msra.mxu0 %v393
    %4668 = vmatprep.subr.mxu0 %v400
    %4669 = vmatpush1.msra.mxu0 %v399
    %4670 = vmatprep.subr.mxu0 %v406
    %4671 = vmatpush1.msra.mxu0 %v405
    %4672 = vmatprep.subr.mxu0 %v412
    %4673 = vmatpush1.msra.mxu0 %v411
    %4674 = vmatprep.subr.mxu0 %v418
    %4675 = vmatpush1.msra.mxu0 %v417
    %4676 = vmatprep.subr.mxu0 %v424
    %4677 = vmatpush1.msra.mxu0 %v423
    %4678 = vmatprep.subr.mxu0 %v430
    %4679 = vmatpush1.msra.mxu0 %v429
    %4680 = vmatprep.subr.mxu0 %v436
    %4681 = vmatpush1.msra.mxu0 %v435
    %4682 = vmatprep.subr.mxu0 %v442
    %4683 = vmatpush1.msra.mxu0 %v441
    %4684 = vmatprep.subr.mxu0 %v448
    %4685 = vmatpush1.msra.mxu0 %v447
    %4686 = vmatprep.subr.mxu0 %v454
    %4687 = vmatpush1.msra.mxu0 %v453
    %4688 = vmatprep.subr.mxu0 %v460
    %4689 = vmatpush1.msra.mxu0 %v459
    %4690 = vmatprep.subr.mxu0 %v466
    %4691 = vmatpush1.msra.mxu0 %v465
    %4692 = vmatprep.subr.mxu0 %v472
    %4693 = vmatpush1.msra.mxu0 %v471
    %4694 = vmatprep.subr.mxu0 %v478
    %4695 = vmatpush1.msra.mxu0 %v477
    %4696 = vmatprep.subr.mxu0 %v484
    %4697 = vmatpush1.msra.mxu0 %v483
    %4698 = vmatprep.subr.mxu0 %v490
    %4699 = vmatpush1.msra.mxu0 %v489
    %4700 = vmatprep.subr.mxu0 %v496
    %4701 = vmatpush1.msra.mxu0 %v495
    %4702 = vmatprep.subr.mxu0 %v502
    %4703 = vmatpush1.msra.mxu0 %v501
    %4704 = vmatprep.subr.mxu0 %v508
    %4705 = vmatpush1.msra.mxu0 %v507
    %4706 = vmatprep.subr.mxu0 %v514
    %4707 = vmatpush1.msra.mxu0 %v513
    %4708 = vmatprep.subr.mxu0 %v520
    %4709 = vmatpush1.msra.mxu0 %v519
    %4710 = vmatprep.subr.mxu0 %v526
    %4711 = vmatpush1.msra.mxu0 %v525
    %4712 = vmatprep.subr.mxu0 %v532
    %4713 = vmatpush1.msra.mxu0 %v531
    %4714 = vmatprep.subr.mxu0 %v538
    %4715 = vmatpush1.msra.mxu0 %v537
    %4716 = vmatprep.subr.mxu0 %v544
    %4717 = vmatpush1.msra.mxu0 %v543
    %4718 = vmatprep.subr.mxu0 %v550
    %4719 = vmatpush1.msra.mxu0 %v549
    %4720 = vmatprep.subr.mxu0 %v556
    %4721 = vmatpush1.msra.mxu0 %v555
    %4722 = vmatprep.subr.mxu0 %v562
    %4723 = vmatpush1.msra.mxu0 %v561
    %4724 = vmatprep.mubr.f32.mxu0 %v4587
    %4725 = vmatmul.mubr.f32.gmra.mrb[0].mxu0 %v4571
    %v4726 = vpop.f32.mrb[0].mxu0
    %v4727 = vadd.f32 %v578, %v4726
    %v4728 = vpop.f32.mrb[0].mxu0
    %v4729 = vadd.f32 %v582, %v4728
    %4730 = vdwg.mxu0
    %4731 = vmatprep.subr.mxu0 %v378
    %4732 = vmatpush1.msra.mxu0 %v377
    %4733 = vmatprep.subr.mxu0 %v384
    %4734 = vmatpush1.msra.mxu0 %v383
    %4735 = vmatprep.subr.mxu0 %v390
    %4736 = vmatpush1.msra.mxu0 %v389
    %4737 = vmatprep.subr.mxu0 %v396
    %4738 = vmatpush1.msra.mxu0 %v395
    %4739 = vmatprep.subr.mxu0 %v402
    %4740 = vmatpush1.msra.mxu0 %v401
    %4741 = vmatprep.subr.mxu0 %v408
    %4742 = vmatpush1.msra.mxu0 %v407
    %4743 = vmatprep.subr.mxu0 %v414
    %4744 = vmatpush1.msra.mxu0 %v413
    %4745 = vmatprep.subr.mxu0 %v420
    %4746 = vmatpush1.msra.mxu0 %v419
    %4747 = vmatprep.subr.mxu0 %v426
    %4748 = vmatpush1.msra.mxu0 %v425
    %4749 = vmatprep.subr.mxu0 %v432
    %4750 = vmatpush1.msra.mxu0 %v431
    %4751 = vmatprep.subr.mxu0 %v438
    %4752 = vmatpush1.msra.mxu0 %v437
    %4753 = vmatprep.subr.mxu0 %v444
    %4754 = vmatpush1.msra.mxu0 %v443
    %4755 = vmatprep.subr.mxu0 %v450
    %4756 = vmatpush1.msra.mxu0 %v449
    %4757 = vmatprep.subr.mxu0 %v456
    %4758 = vmatpush1.msra.mxu0 %v455
    %4759 = vmatprep.subr.mxu0 %v462
    %4760 = vmatpush1.msra.mxu0 %v461
    %4761 = vmatprep.subr.mxu0 %v468
    %4762 = vmatpush1.msra.mxu0 %v467
    %4763 = vmatprep.subr.mxu0 %v474
    %4764 = vmatpush1.msra.mxu0 %v473
    %4765 = vmatprep.subr.mxu0 %v480
    %4766 = vmatpush1.msra.mxu0 %v479
    %4767 = vmatprep.subr.mxu0 %v486
    %4768 = vmatpush1.msra.mxu0 %v485
    %4769 = vmatprep.subr.mxu0 %v492
    %4770 = vmatpush1.msra.mxu0 %v491
    %4771 = vmatprep.subr.mxu0 %v498
    %4772 = vmatpush1.msra.mxu0 %v497
    %4773 = vmatprep.subr.mxu0 %v504
    %4774 = vmatpush1.msra.mxu0 %v503
    %4775 = vmatprep.subr.mxu0 %v510
    %4776 = vmatpush1.msra.mxu0 %v509
    %4777 = vmatprep.subr.mxu0 %v516
    %4778 = vmatpush1.msra.mxu0 %v515
    %4779 = vmatprep.subr.mxu0 %v522
    %4780 = vmatpush1.msra.mxu0 %v521
    %4781 = vmatprep.subr.mxu0 %v528
    %4782 = vmatpush1.msra.mxu0 %v527
    %4783 = vmatprep.subr.mxu0 %v534
    %4784 = vmatpush1.msra.mxu0 %v533
    %4785 = vmatprep.subr.mxu0 %v540
    %4786 = vmatpush1.msra.mxu0 %v539
    %4787 = vmatprep.subr.mxu0 %v546
    %4788 = vmatpush1.msra.mxu0 %v545
    %4789 = vmatprep.subr.mxu0 %v552
    %4790 = vmatpush1.msra.mxu0 %v551
    %4791 = vmatprep.subr.mxu0 %v558
    %4792 = vmatpush1.msra.mxu0 %v557
    %4793 = vmatprep.subr.mxu0 %v564
    %4794 = vmatpush1.msra.mxu0 %v563
    %4795 = vmatprep.mubr.f32.mxu0 %v4587
    %4796 = vmatmul.mubr.f32.gmra.mrb[0].mxu0 %v4571
    %v4797 = vpop.f32.mrb[0].mxu0
    %v4798 = vadd.f32 %v586, %v4797
    %v4799 = vpop.f32.mrb[0].mxu0
    %v4800 = vadd.f32 %v590, %v4799
    %4801 = vdwg.mxu0
    %s4802 = scalar_lea.vmem [#allocation2], 7
    %v4803 = vld [vmem:[%s4802] ss:$8 sm:$0x7]
    %s4804 = scalar_lea.vmem [#allocation2], 55
    %v4805 = vld [vmem:[%s4804] ss:$8 sm:$0x7]
    %s4806 = scalar_lea.vmem [#allocation2], 24
    %v4807 = vld [vmem:[%s4806] ss:$8 sm:$0x7]
    %s4808 = scalar_lea.vmem [#allocation2], 72
    %v4809 = vld [vmem:[%s4808] ss:$8 sm:$0x7]
    %v4812 = vunpack.c.l.s4 1966171168
    %v4813 = vunpack.c.0.s8 %v4812
    %v4814 = vlaneseq
    %v4815 = vshrl.u32 %v4814, 7
    %v4816 = vsub.s32 %v4813, %v4815
    %v4817 = vrot.slane %v4656, %v4816
    %v4818 = vcombine.high %v4817, %v4817
    %v4820 = vunpack.c.l.s4 1966171168
    %v4821 = vunpack.c.0.s8 %v4820
    %v4822 = vlaneseq
    %v4823 = vshrl.u32 %v4822, 7
    %v4824 = vsub.s32 %v4821, %v4823
    %v4825 = vrot.slane %v4817, %v4824
    %v4827 = vunpack.c.l.s4 1966171168
    %v4828 = vunpack.c.0.s8 %v4827
    %v4829 = vlaneseq
    %v4830 = vshrl.u32 %v4829, 7
    %v4831 = vsub.s32 %v4828, %v4830
    %v4832 = vrot.slane %v4818, %v4831
    %v4835 = vadd.f32 %v4803, %v4825
    %v4836 = vadd.f32 %v4805, %v4832
    %v4837 = vxor.u32 %v4835, 2147483648
    %v4838 = vxor.u32 %v4836, 2147483648
    %v4839 = vmul.f32 %v4837, 1.442695
    %v4840 = vpow.pop %v4839
    %v4841 = vmul.f32 %v4838, 1.442695
    %v4842 = vpow.pop %v4841
    %v4843 = vadd.f32 %v4840, 1.0
    %v4844 = vadd.f32 %v4842, 1.0
    %v4845 = vrcp.pop %v4843
    %v4846 = vmul.f32 1.0, %v4845
    %v4847 = vrcp.pop %v4844
    %v4848 = vmul.f32 1.0, %v4847
    %v4851 = vrot.slane %v4803, 1
    %v4852 = vrot.slane %v4805, 1
    %v4857 = vunpack.c.l.s4 1966171168
    %v4858 = vunpack.c.0.s8 %v4857
    %v4859 = vlaneseq
    %v4860 = vshrl.u32 %v4859, 7
    %v4861 = vsub.s32 %v4858, %v4860
    %v4862 = vrot.slane %v4658, %v4861
    %v4863 = vcombine.high %v4862, %v4862
    %v4865 = vunpack.c.l.s4 1966171168
    %v4866 = vunpack.c.0.s8 %v4865
    %v4867 = vlaneseq
    %v4868 = vshrl.u32 %v4867, 7
    %v4869 = vsub.s32 %v4866, %v4868
    %v4870 = vrot.slane %v4862, %v4869
    %v4872 = vunpack.c.l.s4 1966171168
    %v4873 = vunpack.c.0.s8 %v4872
    %v4874 = vlaneseq
    %v4875 = vshrl.u32 %v4874, 7
    %v4876 = vsub.s32 %v4873, %v4875
    %v4877 = vrot.slane %v4863, %v4876
    %v4880 = vadd.f32 %v4851, %v4870
    %v4881 = vadd.f32 %v4852, %v4877
    %v4882 = vxor.u32 %v4880, 2147483648
    %v4883 = vxor.u32 %v4881, 2147483648
    %v4884 = vmul.f32 %v4882, 1.442695
    %v4885 = vpow.pop %v4884
    %v4886 = vmul.f32 %v4883, 1.442695
    %v4887 = vpow.pop %v4886
    %v4888 = vadd.f32 %v4885, 1.0
    %v4889 = vadd.f32 %v4887, 1.0
    %v4890 = vrcp.pop %v4888
    %v4891 = vmul.f32 1.0, %v4890
    %v4892 = vrcp.pop %v4889
    %v4893 = vmul.f32 1.0, %v4892
    %v4896 = vunpack.c.l.s4 1966171168
    %v4897 = vunpack.c.0.s8 %v4896
    %v4898 = vlaneseq
    %v4899 = vshrl.u32 %v4898, 7
    %v4900 = vsub.s32 %v4897, %v4899
    %v4901 = vrot.slane %v4727, %v4900
    %v4902 = vcombine.high %v4901, %v4901
    %v4904 = vunpack.c.l.s4 1966171168
    %v4905 = vunpack.c.0.s8 %v4904
    %v4906 = vlaneseq
    %v4907 = vshrl.u32 %v4906, 7
    %v4908 = vsub.s32 %v4905, %v4907
    %v4909 = vrot.slane %v4901, %v4908
    %v4911 = vunpack.c.l.s4 1966171168
    %v4912 = vunpack.c.0.s8 %v4911
    %v4913 = vlaneseq
    %v4914 = vshrl.u32 %v4913, 7
    %v4915 = vsub.s32 %v4912, %v4914
    %v4916 = vrot.slane %v4902, %v4915
    %v4919 = vmul.f32 %v4846, %v4909
    %v4920 = vmul.f32 %v4848, %v4916
    %v4921 = vrot.slane %v4803, 2
    %v4922 = vrot.slane %v4805, 2
    %v4925 = vadd.f32 %v4921, %v4919
    %v4926 = vadd.f32 %v4922, %v4920
    %v4927 = vtanh.pop %v4925
    %v4928 = vtanh.pop %v4926
    %v4929 = vsub.f32 1.0, %v4891
    %v4930 = vsub.f32 1.0, %v4893
    %v4931 = vmul.f32 %v4929, %v4927
    %v4932 = vmul.f32 %v4930, %v4928
    %v4934 = vunpack.c.l.s4 1966171168
    %v4935 = vunpack.c.0.s8 %v4934
    %v4936 = vlaneseq
    %v4937 = vshrl.u32 %v4936, 7
    %v4938 = vsub.s32 %v4935, %v4937
    %v4939 = vrot.slane %v4571, %v4938
    %v4940 = vcombine.high %v4939, %v4939
    %v4942 = vunpack.c.l.s4 1966171168
    %v4943 = vunpack.c.0.s8 %v4942
    %v4944 = vlaneseq
    %v4945 = vshrl.u32 %v4944, 7
    %v4946 = vsub.s32 %v4943, %v4945
    %v4947 = vrot.slane %v4939, %v4946
    %v4949 = vunpack.c.l.s4 1966171168
    %v4950 = vunpack.c.0.s8 %v4949
    %v4951 = vlaneseq
    %v4952 = vshrl.u32 %v4951, 7
    %v4953 = vsub.s32 %v4950, %v4952
    %v4954 = vrot.slane %v4940, %v4953
    %v4957 = vmul.f32 %v4891, %v4947
    %v4958 = vmul.f32 %v4893, %v4954
    %v4959 = vadd.f32 %v4931, %v4957
    %v4960 = vadd.f32 %v4932, %v4958
    %v4963 = vunpack.c.l.s4 1966171168
    %v4964 = vunpack.c.0.s8 %v4963
    %v4965 = vlaneseq
    %v4966 = vshrl.u32 %v4965, 7
    %v4967 = vsub.s32 %v4964, %v4966
    %v4968 = vrot.slane %v4729, %v4967
    %v4969 = vcombine.high %v4968, %v4968
    %v4971 = vunpack.c.l.s4 1966171168
    %v4972 = vunpack.c.0.s8 %v4971
    %v4973 = vlaneseq
    %v4974 = vshrl.u32 %v4973, 7
    %v4975 = vsub.s32 %v4972, %v4974
    %v4976 = vrot.slane %v4968, %v4975
    %v4978 = vunpack.c.l.s4 1966171168
    %v4979 = vunpack.c.0.s8 %v4978
    %v4980 = vlaneseq
    %v4981 = vshrl.u32 %v4980, 7
    %v4982 = vsub.s32 %v4979, %v4981
    %v4983 = vrot.slane %v4969, %v4982
    %v4986 = vadd.f32 %v4807, %v4976
    %v4987 = vadd.f32 %v4809, %v4983
    %v4988 = vxor.u32 %v4986, 2147483648
    %v4989 = vxor.u32 %v4987, 2147483648
    %v4990 = vmul.f32 %v4988, 1.442695
    %v4991 = vpow.pop %v4990
    %v4992 = vmul.f32 %v4989, 1.442695
    %v4993 = vpow.pop %v4992
    %v4994 = vadd.f32 %v4991, 1.0
    %v4995 = vadd.f32 %v4993, 1.0
    %v4996 = vrcp.pop %v4994
    %v4997 = vmul.f32 1.0, %v4996
    %v4998 = vrcp.pop %v4995
    %v4999 = vmul.f32 1.0, %v4998
    %v5002 = vrot.slane %v4807, 1
    %v5003 = vrot.slane %v4809, 1
    %v5008 = vunpack.c.l.s4 1966171168
    %v5009 = vunpack.c.0.s8 %v5008
    %v5010 = vlaneseq
    %v5011 = vshrl.u32 %v5010, 7
    %v5012 = vsub.s32 %v5009, %v5011
    %v5013 = vrot.slane %v4798, %v5012
    %v5014 = vcombine.high %v5013, %v5013
    %v5016 = vunpack.c.l.s4 1966171168
    %v5017 = vunpack.c.0.s8 %v5016
    %v5018 = vlaneseq
    %v5019 = vshrl.u32 %v5018, 7
    %v5020 = vsub.s32 %v5017, %v5019
    %v5021 = vrot.slane %v5013, %v5020
    %v5023 = vunpack.c.l.s4 1966171168
    %v5024 = vunpack.c.0.s8 %v5023
    %v5025 = vlaneseq
    %v5026 = vshrl.u32 %v5025, 7
    %v5027 = vsub.s32 %v5024, %v5026
    %v5028 = vrot.slane %v5014, %v5027
    %v5031 = vadd.f32 %v5002, %v5021
    %v5032 = vadd.f32 %v5003, %v5028
    %v5033 = vxor.u32 %v5031, 2147483648
    %v5034 = vxor.u32 %v5032, 2147483648
    %v5035 = vmul.f32 %v5033, 1.442695
    %v5036 = vpow.pop %v5035
    %v5037 = vmul.f32 %v5034, 1.442695
    %v5038 = vpow.pop %v5037
    %v5039 = vadd.f32 %v5036, 1.0
    %v5040 = vadd.f32 %v5038, 1.0
    %v5041 = vrcp.pop %v5039
    %v5042 = vmul.f32 1.0, %v5041
    %v5043 = vrcp.pop %v5040
    %v5044 = vmul.f32 1.0, %v5043
    %v5047 = vunpack.c.l.s4 1966171168
    %v5048 = vunpack.c.0.s8 %v5047
    %v5049 = vlaneseq
    %v5050 = vshrl.u32 %v5049, 7
    %v5051 = vsub.s32 %v5048, %v5050
    %v5052 = vrot.slane %v4800, %v5051
    %v5053 = vcombine.high %v5052, %v5052
    %v5055 = vunpack.c.l.s4 1966171168
    %v5056 = vunpack.c.0.s8 %v5055
    %v5057 = vlaneseq
    %v5058 = vshrl.u32 %v5057, 7
    %v5059 = vsub.s32 %v5056, %v5058
    %v5060 = vrot.slane %v5052, %v5059
    %v5062 = vunpack.c.l.s4 1966171168
    %v5063 = vunpack.c.0.s8 %v5062
    %v5064 = vlaneseq
    %v5065 = vshrl.u32 %v5064, 7
    %v5066 = vsub.s32 %v5063, %v5065
    %v5067 = vrot.slane %v5053, %v5066
    %v5070 = vmul.f32 %v4997, %v5060
    %v5071 = vmul.f32 %v4999, %v5067
    %v5072 = vrot.slane %v4807, 2
    %v5073 = vrot.slane %v4809, 2
    %v5076 = vadd.f32 %v5072, %v5070
    %v5077 = vadd.f32 %v5073, %v5071
    %v5078 = vtanh.pop %v5076
    %v5079 = vtanh.pop %v5077
    %v5080 = vsub.f32 1.0, %v5042
    %v5081 = vsub.f32 1.0, %v5044
    %v5082 = vmul.f32 %v5080, %v5078
    %v5083 = vmul.f32 %v5081, %v5079
    %v5085 = vunpack.c.l.s4 1966171168
    %v5086 = vunpack.c.0.s8 %v5085
    %v5087 = vlaneseq
    %v5088 = vshrl.u32 %v5087, 7
    %v5089 = vsub.s32 %v5086, %v5088
    %v5090 = vrot.slane %v4587, %v5089
    %v5091 = vcombine.high %v5090, %v5090
    %v5093 = vunpack.c.l.s4 1966171168
    %v5094 = vunpack.c.0.s8 %v5093
    %v5095 = vlaneseq
    %v5096 = vshrl.u32 %v5095, 7
    %v5097 = vsub.s32 %v5094, %v5096
    %v5098 = vrot.slane %v5090, %v5097
    %v5100 = vunpack.c.l.s4 1966171168
    %v5101 = vunpack.c.0.s8 %v5100
    %v5102 = vlaneseq
    %v5103 = vshrl.u32 %v5102, 7
    %v5104 = vsub.s32 %v5101, %v5103
    %v5105 = vrot.slane %v5091, %v5104
    %v5108 = vmul.f32 %v5042, %v5098
    %v5109 = vmul.f32 %v5044, %v5105
    %v5110 = vadd.f32 %v5082, %v5108
    %v5111 = vadd.f32 %v5083, %v5109
    %5112 = vst.msk [vmem:[#allocation9 + $0x7] sm:$0x1] %vm1071, %v4959
    %5113 = vst.msk [vmem:[#allocation9 + $0xf] sm:$0x1] %vm1071, %v4960
    %v5116 = vlaneseq
    %v5117 = vshrl.u32 %v5116, 7
    %v5118 = vsub.s32 0, %v5117
    %v5119 = vrot.slane %v5110, %v5118
    %v5120 = vlaneseq
    %v5121 = vshrl.u32 %v5120, 7
    %v5122 = vsub.s32 0, %v5121
    %v5123 = vrot.slane %v5111, %v5122
    %5124 = vrot.lane.b32.xlu0 %v5119, 32
    %v5125 = vpop.permute.xlu0 %5124
    %5126 = vrot.lane.b32.xlu0 %v5123, 32
    %v5127 = vpop.permute.xlu0 %5126
    %5130 = vst.msk [vmem:[#allocation9] sm:$0x1] %vm1090, %v5125
    %5131 = vst.msk [vmem:[#allocation9 + $0x8] sm:$0x1] %vm1090, %v5127
    %v5134 = vcombine.low %v4959, %v4960
    %v5136 = vunpack.c.l.s4 1966171168
    %v5137 = vunpack.c.0.s8 %v5136
    %v5138 = vlaneseq
    %v5139 = vshrl.u32 %v5138, 7
    %v5140 = vsub.s32 %v5137, %v5139
    %v5141 = vrot.slane %v5134, %v5140
    %v5143 = vunpack.c.l.s4 1966171168
    %v5144 = vunpack.c.0.s8 %v5143
    %v5145 = vlaneseq
    %v5146 = vshrl.u32 %v5145, 7
    %v5147 = vsub.s32 %v5144, %v5146
    %v5148 = vrot.slane %v5141, %v5147
    %v5150 = vcombine.low %v5110, %v5111
    %v5152 = vunpack.c.l.s4 1966171168
    %v5153 = vunpack.c.0.s8 %v5152
    %v5154 = vlaneseq
    %v5155 = vshrl.u32 %v5154, 7
    %v5156 = vsub.s32 %v5153, %v5155
    %v5157 = vrot.slane %v5150, %v5156
    %v5159 = vunpack.c.l.s4 1966171168
    %v5160 = vunpack.c.0.s8 %v5159
    %v5161 = vlaneseq
    %v5162 = vshrl.u32 %v5161, 7
    %v5163 = vsub.s32 %v5160, %v5162
    %v5164 = vrot.slane %v5157, %v5163
    %vm5166 = vcmask 254976
    %5167 = vst.msk [vmem:[#allocation10] sm:$0x3] %vm5166, %v5148
    %s5168 = scalar_lea.vmem [#allocation10], 2
    %5169 = vst.msk [vmem:[%s5168] sm:$0x3] %vm5166, %v5164
    // Predicated region
    $region34: #{tpu_custom_call.1} parent=1 // pred_check
      _
    $region35: #{tpu_custom_call.1} parent=1 // pred_check_branch
      %5171 = sbr.rel (0) target = $region37
    $region36: #{tpu_custom_call.1} parent=1 // pred_region
      %s5173 = ssub.s32 256, 256
      %5174 = vsyncadd [#allocation5], %s5173
      %s5175 = sshll.u32 [#allocation9], 4
      %s5176 = int_to_ptr.vmem [resolvable:$true] %s5175
      %5181 = dma.vmem_to_hbm [thread:$0]  %s5176, 256, %s5, [#allocation5], 128, 128, 8
    $region37: #{tpu_custom_call.1} parent=1 // pred_fallthru
      _
    // Predicated region
    $region38: #{tpu_custom_call.1} parent=1 // pred_check
      _
    $region39: #{tpu_custom_call.1} parent=1 // pred_check_branch
      %5183 = sbr.rel (0) target = $region41
    $region40: #{tpu_custom_call.1} parent=1 // pred_region
      %s5185 = ssub.s32 64, 64
      %5186 = vsyncadd [#allocation11], %s5185
      %s5187 = sshll.u32 [#allocation10], 4
      %s5188 = int_to_ptr.vmem [resolvable:$true] %s5187
      %5193 = dma.vmem_to_hbm [thread:$0]  %s5188, 64, %s6, [#allocation11], 32, 32, 2
    $region41: #{tpu_custom_call.1} parent=1 // pred_fallthru
      _
    // Predicated region
    $region42: #{tpu_custom_call.1} parent=1 // pred_check
      _
    $region43: #{tpu_custom_call.1} parent=1 // pred_check_branch
      %5195 = sbr.rel (0) target = $region45
    $region44: #{tpu_custom_call.1} parent=1 // pred_region
      %5196 = dma.done [#allocation5], 256
    $region45: #{tpu_custom_call.1} parent=1 // pred_fallthru
      _
    // Predicated region
    $region46: #{tpu_custom_call.1} parent=1 // pred_check
      _
    $region47: #{tpu_custom_call.1} parent=1 // pred_check_branch
      %5198 = sbr.rel (0) target = $region49
    $region48: #{tpu_custom_call.1} parent=1 // pred_region
      %5199 = dma.done [#allocation11], 64
    $region49: #{tpu_custom_call.1} parent=1 // pred_fallthru
      _
    %5200 = vsyncpa [#allocation4], 1
    %5201 = vsyncpa [#allocation7], 1
    %5202 = vsyncpa [#allocation5], 1
    %5203 = vsyncpa [#allocation11], 1

</llo_original>
